<compile_context>
chip_gen: v7x
topology: tpu7x:2x2x1
jax: 0.10.0
libtpu: 0.0.40
codegen_flags: <defaults>
</compile_context>

<pallas_src>
import functools
import math

import jax
import jax.numpy as jnp
from jax.experimental import pallas as pl
from jax.experimental.pallas import tpu as pltpu

PAD_ID = 1          # BartConfig default pad_token_id
UNK_ID = 3          # UNKID from the reference script
NEG_INF = -1e9


# --------------------------- compiler-param helpers ----------------------------

def _default_vmem_limit():
    """~75% of physical VMEM (96 MiB v5e/v6e, 48 MiB v7x); None if unknown."""
    try:
        info = pltpu.get_tpu_info()
        cap = getattr(info, "vmem_capacity_bytes", None)
        if cap:
            return int(cap) * 3 // 4
    except Exception:
        pass
    return None


_VMEM_LIMIT = _default_vmem_limit()


def _cparams(sem):
    kw = dict(dimension_semantics=sem)
    if _VMEM_LIMIT is not None:
        kw["vmem_limit_bytes"] = _VMEM_LIMIT
    return pltpu.CompilerParams(**kw)


def _batch_spec(shape):
    """Block (1, *rest) walked along grid axis 0 (the batch axis)."""
    blk = (1,) + tuple(shape[1:])
    trail = len(shape) - 1
    return pl.BlockSpec(blk, lambda b, _t=trail: (b,) + (0,) * _t)


def _resident_spec(shape):
    """Full-array block, same block at every grid step (weights stay in VMEM)."""
    nd = len(shape)
    return pl.BlockSpec(tuple(shape), lambda b, _n=nd: (0,) * _n)


# ------------------------- in-kernel helpers (traced) ---------------------------

def _layernorm(x, g, b):
    mu = jnp.mean(x, axis=-1, keepdims=True)
    var = jnp.mean((x - mu) ** 2, axis=-1, keepdims=True)
    return (x - mu) * jax.lax.rsqrt(var + 1e-5) * g + b


def _gelu(y):
    # TODO(synk): HF Bart uses exact erf GELU; tanh approximation used here.
    return 0.5 * y * (1.0 + jnp.tanh(0.7978845608028654
                                     * (y + 0.044715 * y * y * y)))


def _matmul(x, w, b):
    # x: (b, L, Din) f32 -> bf16 ; w: (Din, Dout) bf16 ; b: (1, 1, Dout) f32
    return jnp.einsum('bld,de->ble', x.astype(jnp.bfloat16), w,
                      preferred_element_type=jnp.float32) + b


def _attend(q_all, k_all, v_all, add_mask, wo, bo, heads):
    """Multi-head attention on VMEM-resident values.

    q/k/v: (b, Lq|Lk, D) f32 with heads packed along lanes.  Per-head contexts
    are concatenated back into a (b, Lq, D) buffer (no transpose; heads stay on
    lanes) and a single (D, D) output projection is done with K=D contraction
    so the MXU is filled (review item: no per-head K=dh matmuls).
    """
    D = q_all.shape[-1]
    dh = D // heads
    scale = 1.0 / math.sqrt(dh)
    ctx = []
    for h in range(heads):
        sl = slice(h * dh, (h + 1) * dh)
        q = q_all[:, :, sl].astype(jnp.bfloat16)
        k = k_all[:, :, sl].astype(jnp.bfloat16)
        v = v_all[:, :, sl].astype(jnp.bfloat16)
        s = jnp.einsum('bqd,bkd->bqk', q, k,
                       preferred_element_type=jnp.float32) * scale
        s = s + add_mask
        s = s - jnp.max(s, axis=-1, keepdims=True)
        p = jnp.exp(s)
        p = p / jnp.sum(p, axis=-1, keepdims=True)        # exact softmax
        o = jnp.einsum('bqk,bkd->bqd', p.astype(jnp.bfloat16), v,
                       preferred_element_type=jnp.float32)
        ctx.append(o)
    ctx = jnp.concatenate(ctx, axis=-1)                   # (b, Lq, D)
    return jnp.einsum('bqd,de->bqe', ctx.astype(jnp.bfloat16), wo,
                      preferred_element_type=jnp.float32) + bo


# ------------------------------- Pallas kernels ---------------------------------

def _embed_ln_kernel(e_ref, pos_ref, g_ref, b_ref, o_ref):
    # token-emb + learned pos-emb, then embedding LayerNorm (per batch element)
    o_ref[...] = _layernorm(e_ref[...] + pos_ref[...], g_ref[...], b_ref[...])


def _enc_layer_kernel(x_ref, pad_ref,
                      wqkv_ref, bqkv_ref, wo_ref, bo_ref,
                      ln1g_ref, ln1b_ref,
                      w1_ref, b1_ref, w2_ref, b2_ref,
                      ln2g_ref, ln2b_ref,
                      o_ref, *, heads):
    x = x_ref[...]                                         # (1, L, D)
    D = x.shape[-1]
    qkv = _matmul(x, wqkv_ref[...], bqkv_ref[...])         # (1, L, 3D)
    attn = _attend(qkv[:, :, 0:D], qkv[:, :, D:2 * D], qkv[:, :, 2 * D:3 * D],
                   pad_ref[...], wo_ref[...], bo_ref[...], heads)
    x = _layernorm(x + attn, ln1g_ref[...], ln1b_ref[...])
    # TODO(synk): keep the FFN intermediate in bf16 on v6e/v7x (f32 kept for v5e).
    h = _gelu(_matmul(x, w1_ref[...], b1_ref[...]))
    h = _matmul(h, w2_ref[...], b2_ref[...])
    o_ref[...] = _layernorm(x + h, ln2g_ref[...], ln2b_ref[...])


def _dec_layer_kernel(x_ref, enc_ref, dpad_ref, epad_ref,
                      s_wqkv_ref, s_bqkv_ref, s_wo_ref, s_bo_ref,
                      ln1g_ref, ln1b_ref,
                      c_wq_ref, c_bq_ref, c_wkv_ref, c_bkv_ref,
                      c_wo_ref, c_bo_ref,
                      ln2g_ref, ln2b_ref,
                      w1_ref, b1_ref, w2_ref, b2_ref,
                      ln3g_ref, ln3b_ref,
                      o_ref, *, heads):
    x = x_ref[...]                                         # (1, Lt, D)
    _, Lt, D = x.shape

    # causal + decoder key-pad mask built in-kernel (never stored in HBM)
    rows = jax.lax.broadcasted_iota(jnp.int32, (1, Lt, Lt), 1)
    cols = jax.lax.broadcasted_iota(jnp.int32, (1, Lt, Lt), 2)
    self_mask = jnp.where(rows >= cols, 0.0, NEG_INF) + dpad_ref[...]

    # masked causal self-attention
    qkv = _matmul(x, s_wqkv_ref[...], s_bqkv_ref[...])     # (1, Lt, 3D)
    attn = _attend(qkv[:, :, 0:D], qkv[:, :, D:2 * D], qkv[:, :, 2 * D:3 * D],
                   self_mask, s_wo_ref[...], s_bo_ref[...], heads)
    x = _layernorm(x + attn, ln1g_ref[...], ln1b_ref[...])

    # cross-attention (q from decoder, fused k|v from encoder output)
    q = _matmul(x, c_wq_ref[...], c_bq_ref[...])           # (1, Lt, D)
    kv = _matmul(enc_ref[...], c_wkv_ref[...], c_bkv_ref[...])  # (1, Ls, 2D)
    attn = _attend(q, kv[:, :, 0:D], kv[:, :, D:2 * D],
                   epad_ref[...], c_wo_ref[...], c_bo_ref[...], heads)
    x = _layernorm(x + attn, ln2g_ref[...], ln2b_ref[...])

    # FFN
    h = _gelu(_matmul(x, w1_ref[...], b1_ref[...]))
    h = _matmul(h, w2_ref[...], b2_ref[...])
    o_ref[...] = _layernorm(x + h, ln3g_ref[...], ln3b_ref[...])


def _head_kernel(h_ref, w_ref, b_ref, gold_ref,
                 logits_ref, nll_ref, pred_ref,
                 m_sc, l_sc, amax_sc, gold_sc):
    # Grid = (row blocks, vocab tiles).  Row axis "parallel", vocab axis
    # "arbitrary".  Per-row running max / LSE / argmax / gold-logit live in
    # VMEM scratch and are re-initialized at vocab tile 0 of each row block.
    j = pl.program_id(1)
    nv = pl.num_programs(1)

    @pl.when(j == 0)
    def _():
        m_sc[...] = jnp.full_like(m_sc, -jnp.inf)
        l_sc[...] = jnp.zeros_like(l_sc)
        amax_sc[...] = jnp.zeros_like(amax_sc)
        gold_sc[...] = jnp.zeros_like(gold_sc)

    logits = jnp.einsum('btd,dv->btv', h_ref[...].astype(jnp.bfloat16), w_ref[...],
                        preferred_element_type=jnp.float32) + b_ref[...]
    logits_ref[...] = logits.astype(logits_ref.dtype)      # bf16 writeback

    TV = logits.shape[-1]
    gold = gold_ref[...]                                    # (B, TQ, 1) int32

    # online argmax + log-sum-exp over vocab tiles
    tile_max = jnp.max(logits, axis=-1, keepdims=True)
    ids = jax.lax.broadcasted_iota(jnp.int32, logits.shape, 2)
    tile_arg = (jnp.min(jnp.where(logits == tile_max, ids, TV),
                        axis=-1, keepdims=True) + j * TV)
    amax_sc[...] = jnp.where(tile_max > m_sc[...], tile_arg, amax_sc[...])
    m_new = jnp.maximum(m_sc[...], tile_max)
    l_sc[...] = (l_sc[...] * jnp.exp(m_sc[...] - m_new)
                 + jnp.sum(jnp.exp(logits - m_new), axis=-1, keepdims=True))
    m_sc[...] = m_new

    # gold-token logit (for CE), only if the gold id falls inside this tile
    gold_local = gold - j * TV                              # (B, TQ, 1)
    in_tile = (gold_local >= 0) & (gold_local < TV)
    onehot = ids == gold_local
    gold_val = jnp.sum(jnp.where(onehot, logits, 0.0), axis=-1, keepdims=True)
    gold_sc[...] = gold_sc[...] + jnp.where(in_tile, gold_val, 0.0)

    # per-token nll / argmax finalized on the last vocab tile of this row block
    @pl.when(j == nv - 1)
    def _():
        lse = m_sc[...] + jnp.log(l_sc[...])                # (B, TQ, 1)
        nll_ref[...] = lse - gold_sc[...]
        pred_ref[...] = amax_sc[...]


# --------------------------- thin wrappers (glue) --------------------------------

def embed(ids, emb_table, pos_table, lnp, offset=2):
    B, L = ids.shape
    D = emb_table.shape[-1]
    e = emb_table[ids]                               # token gather (XLA glue)
    pos = pos_table[offset:offset + L][None]         # (1, L, D); Bart offset=2
    return pl.pallas_call(
        _embed_ln_kernel,
        out_shape=jax.ShapeDtypeStruct((B, L, D), jnp.float32),
        grid=(B,),
        in_specs=[
            _batch_spec((B, L, D)),
            _resident_spec((1, L, D)),
            _resident_spec((1, 1, D)),
            _resident_spec((1, 1, D)),
        ],
        out_specs=_batch_spec((B, L, D)),
        compiler_params=_cparams(("parallel",)),
    )(e, pos, lnp['g'], lnp['b'])


def enc_layer(x, enc_pad, p, heads):
    B, L, D = x.shape
    sa = p['self_attn']
    args = (x, enc_pad,
            sa['wqkv'], sa['bqkv'], sa['wo'], sa['bo'],
            p['ln_self']['g'], p['ln_self']['b'],
            p['fc1_w'], p['fc1_b'], p['fc2_w'], p['fc2_b'],
            p['ln_ffn']['g'], p['ln_ffn']['b'])
    in_specs = [_batch_spec(x.shape), _batch_spec(enc_pad.shape)]
    in_specs += [_resident_spec(a.shape) for a in args[2:]]
    return pl.pallas_call(
        functools.partial(_enc_layer_kernel, heads=heads),
        out_shape=jax.ShapeDtypeStruct((B, L, D), jnp.float32),
        grid=(B,),
        in_specs=in_specs,
        out_specs=_batch_spec((B, L, D)),
        compiler_params=_cparams(("parallel",)),
    )(*args)


def dec_layer(x, enc_out, dec_pad, enc_pad, p, heads):
    B, Lt, D = x.shape
    sa, ca = p['self_attn'], p['cross_attn']
    args = (x, enc_out, dec_pad, enc_pad,
            sa['wqkv'], sa['bqkv'], sa['wo'], sa['bo'],
            p['ln_self']['g'], p['ln_self']['b'],
            ca['wq'], ca['bq'], ca['wkv'], ca['bkv'], ca['wo'], ca['bo'],
            p['ln_cross']['g'], p['ln_cross']['b'],
            p['fc1_w'], p['fc1_b'], p['fc2_w'], p['fc2_b'],
            p['ln_ffn']['g'], p['ln_ffn']['b'])
    in_specs = [_batch_spec(x.shape), _batch_spec(enc_out.shape),
                _batch_spec(dec_pad.shape), _batch_spec(enc_pad.shape)]
    in_specs += [_resident_spec(a.shape) for a in args[4:]]
    return pl.pallas_call(
        functools.partial(_dec_layer_kernel, heads=heads),
        out_shape=jax.ShapeDtypeStruct((B, Lt, D), jnp.float32),
        grid=(B,),
        in_specs=in_specs,
        out_specs=_batch_spec((B, Lt, D)),
        compiler_params=_cparams(("parallel",)),
    )(*args)


def _pick_vocab_tile(v_pad, max_tile=1024):
    tv = min(max_tile, v_pad)
    tv -= tv % 128
    tv = max(tv, 128)
    while v_pad % tv != 0:
        tv -= 128
    return tv


def _pick_row_tile(lt, max_tile=256):
    if lt <= max_tile or lt % 128 != 0:
        return lt
    tq = max_tile - (max_tile % 128)
    while lt % tq != 0:
        tq -= 128
    return tq


def head_and_metrics(h, out_w, out_b, gold):
    """outlin + per-token nll / argmax, vocab-tiled with online LSE/argmax.

    gold: (B, Lt) int32, gold[:, t] == output_ids[:, t+1] (last position = PAD).
    Returns (logits[B,Lt,V] bf16, nll[B,Lt] f32, pred[B,Lt] int32).
    """
    B, Lt, D = h.shape
    V = out_w.shape[-1]
    Vpad = ((V + 127) // 128) * 128
    if Vpad != V:
        # pad vocab to a lane multiple; padded columns get a -1e9 bias so they
        # never win argmax and contribute ~0 to the log-sum-exp.
        out_w = jnp.pad(out_w, ((0, 0), (0, Vpad - V)))
        out_b = jnp.pad(out_b, ((0, 0), (0, 0), (0, Vpad - V)),
                        constant_values=NEG_INF)
    TV = _pick_vocab_tile(Vpad)
    nv = Vpad // TV
    TQ = _pick_row_tile(Lt)
    nr = Lt // TQ
    gold3 = gold[:, :, None].astype(jnp.int32)              # (B, Lt, 1)

    logits, nll, pred = pl.pallas_call(
        _head_kernel,
        out_shape=(jax.ShapeDtypeStruct((B, Lt, Vpad), jnp.bfloat16),
                   jax.ShapeDtypeStruct((B, Lt, 1), jnp.float32),
                   jax.ShapeDtypeStruct((B, Lt, 1), jnp.int32)),
        grid=(nr, nv),
        in_specs=[
            pl.BlockSpec((B, TQ, D), lambda r, j: (0, r, 0)),
            pl.BlockSpec((D, TV), lambda r, j: (0, j)),
            pl.BlockSpec((1, 1, TV), lambda r, j: (0, 0, j)),
            pl.BlockSpec((B, TQ, 1), lambda r, j: (0, r, 0)),
        ],
        out_specs=(
            pl.BlockSpec((B, TQ, TV), lambda r, j: (0, r, j)),
            pl.BlockSpec((B, TQ, 1), lambda r, j: (0, r, 0)),
            pl.BlockSpec((B, TQ, 1), lambda r, j: (0, r, 0)),
        ),
        scratch_shapes=[
            pltpu.VMEM((B, TQ, 1), jnp.float32),   # running max
            pltpu.VMEM((B, TQ, 1), jnp.float32),   # running sum-exp
            pltpu.VMEM((B, TQ, 1), jnp.int32),     # running argmax
            pltpu.VMEM((B, TQ, 1), jnp.float32),   # gold-token logit
        ],
        compiler_params=_cparams(("parallel", "arbitrary")),
    )(h, out_w, out_b, gold3)

    if Vpad != V:
        logits = logits[:, :, :V]
    return logits, nll[:, :, 0], pred[:, :, 0]


def _metrics_from_tokens(nll, pred, gold):
    # Tiny (B, Lt) reductions: CE (ignore_index=PAD) + SeqAccuracies, done in
    # plain JAX so the head kernel's row axis can stay "parallel" (megacore).
    mask = gold != PAD_ID
    maskf = mask.astype(jnp.float32)
    cnt = jnp.maximum(jnp.sum(maskf), 1.0)                  # all-pad guard
    loss = jnp.sum(nll * maskf) / cnt
    same = (pred == gold) & (pred != UNK_ID)
    elem_acc = jnp.sum((same & mask).astype(jnp.float32)) / cnt
    seq_ok = jnp.all(same | jnp.logical_not(mask), axis=1)
    seq_acc = jnp.mean(seq_ok.astype(jnp.float32))
    return {'loss': loss, 'elem_acc': elem_acc, 'seq_acc': seq_acc}


# --------------------------------- forward pass ----------------------------------

def bart_generator_train_forward(params, input_ids, output_ids, cfg):
    H = cfg['heads']
    B, Lt = output_ids.shape

    # O(B*L) additive key-padding masks only; the O(L^2) masks are built inside
    # the fused layer kernels.
    enc_pad = jnp.where(input_ids != PAD_ID, 0.0, NEG_INF
                        ).astype(jnp.float32)[:, None, :]          # (B, 1, Ls)
    dec_pad = jnp.where(output_ids != PAD_ID, 0.0, NEG_INF
                        ).astype(jnp.float32)[:, None, :]          # (B, 1, Lt)

    # ---- encoder ----
    x = embed(input_ids, params['emb'], params['enc_pos'], params['enc_ln_emb'])
    for lp in params['enc_layers']:
        x = enc_layer(x, enc_pad, lp, H)
    enc_out = x

    # ---- decoder ----
    y = embed(output_ids, params['emb'], params['dec_pos'], params['dec_ln_emb'])
    for lp in params['dec_layers']:
        y = dec_layer(y, enc_out, dec_pad, enc_pad, lp, H)

    # ---- outlin + argmax + CE + SeqAccuracies ----
    # gold[:, t] = output_ids[:, t+1]; last position padded -> ignored (matches
    # CE over logits[:, :Lt-1] vs output_ids[:, 1:] with ignore_index=PAD).
    gold = jnp.concatenate(
        [output_ids[:, 1:], jnp.full((B, 1), PAD_ID, output_ids.dtype)],
        axis=1).astype(jnp.int32)
    logits, nll, pred = head_and_metrics(y, params['out_w'], params['out_b'], gold)
    metrics = _metrics_from_tokens(nll, pred, gold)
    # (current_tokenmask is None in training -> no log(tokenmask) added)
    return metrics, (logits,)


# --------------------------- deterministic param init ----------------------------

def init_params(key, cfg):
    D, F, V = cfg['d_model'], cfg['ffn'], cfg['vocab']
    keys = iter(jax.random.split(key, 256))

    def nrm(shape, std=0.02, dtype=jnp.float32):
        # matmul weights are stored in bf16 once (no per-call astype / HBM copy)
        return (std * jax.random.normal(next(keys), shape, jnp.float32)).astype(dtype)

    BF = jnp.bfloat16

    def ln(d):
        return {'g': jnp.ones((1, 1, d), jnp.float32),
                'b': jnp.zeros((1, 1, d), jnp.float32)}

    def self_attn():
        return {'wqkv': nrm((D, 3 * D), dtype=BF),
                'bqkv': jnp.zeros((1, 1, 3 * D), jnp.float32),
                'wo': nrm((D, D), dtype=BF),
                'bo': jnp.zeros((1, 1, D), jnp.float32)}

    def cross_attn():
        return {'wq': nrm((D, D), dtype=BF), 'bq': jnp.zeros((1, 1, D), jnp.float32),
                'wkv': nrm((D, 2 * D), dtype=BF),
                'bkv': jnp.zeros((1, 1, 2 * D), jnp.float32),
                'wo': nrm((D, D), dtype=BF), 'bo': jnp.zeros((1, 1, D), jnp.float32)}

    def layer(cross):
        p = {'self_attn': self_attn(), 'ln_self': ln(D), 'ln_ffn': ln(D),
             'fc1_w': nrm((D, F), dtype=BF),
             'fc1_b': jnp.zeros((1, 1, F), jnp.float32),
             'fc2_w': nrm((F, D), dtype=BF),
             'fc2_b': jnp.zeros((1, 1, D), jnp.float32)}
        if cross:
            p['cross_attn'] = cross_attn()
            p['ln_cross'] = ln(D)
        return p

    emb = nrm((V, D)).at[PAD_ID].set(0.0)   # padding_idx zeroed (as in _init_weights)
    params = {
        'emb': emb,
        'enc_pos': nrm((cfg['max_pos'] + 2, D)),
        'dec_pos': nrm((cfg['max_pos'] + 2, D)),
        'enc_ln_emb': ln(D), 'dec_ln_emb': ln(D),
        'enc_layers': [layer(False) for _ in range(cfg['enc_layers'])],
        'dec_layers': [layer(True) for _ in range(cfg['dec_layers'])],
        'out_w': nrm((D, V), dtype=BF),     # outlin: Linear(d_model, vocab)
        'out_b': jnp.zeros((1, 1, V), jnp.float32),
    }
    return params


# --------------------------------------- demo -------------------------------------

if __name__ == "__main__":
    cfg = dict(d_model=32, ffn=64, vocab=128, heads=2,
               enc_layers=1, dec_layers=1, max_pos=16)

    key = jax.random.PRNGKey(0)
    pkey, ikey, okey = jax.random.split(key, 3)
    params = init_params(pkey, cfg)

    B, Ls, Lt = 2, 8, 8
    input_ids = jax.random.randint(ikey, (B, Ls), 4, cfg['vocab'], dtype=jnp.int32)
    output_ids = jax.random.randint(okey, (B, Lt), 4, cfg['vocab'], dtype=jnp.int32)
    output_ids = output_ids.at[:, 0].set(0)          # BOS-ish start token
    input_ids = input_ids.at[:, -1].set(PAD_ID)      # exercise attention padding
    output_ids = output_ids.at[:, -1].set(PAD_ID)    # exercise CE ignore_index

    fwd = jax.jit(functools.partial(bart_generator_train_forward, cfg=cfg))
    metrics, ret = fwd(params, input_ids, output_ids)
    jax.block_until_ready((metrics, ret))

    print("KERNEL_OK")
</pallas_src>

<mosaic_0001>
module attributes {stable_mosaic.version = 11 : i64} {
  func.func @_embed_ln_kernel(%arg0: i32, %arg1: memref<1x8x32xf32, #tpu.memory_space<vmem>>, %arg2: memref<1x8x32xf32, #tpu.memory_space<vmem>>, %arg3: memref<1x1x32xf32, #tpu.memory_space<vmem>>, %arg4: memref<1x1x32xf32, #tpu.memory_space<vmem>>, %arg5: memref<1x8x32xf32, #tpu.memory_space<vmem>>) attributes {dimension_semantics = [#tpu.dimension_semantics<parallel>], iteration_bounds = array<i64: 2>, scalar_prefetch = 0 : i64, scratch_operands = 0 : i64, tpu.core_type = #tpu.core_type<tc>, window_params = [{transform_indices = @transform_0, window_bounds = array<i64: 1, 8, 32>}, {pipeline_mode = #tpu.pipeline_mode<synchronous>, transform_indices = @transform_1, window_bounds = array<i64: 1, 8, 32>}, {pipeline_mode = #tpu.pipeline_mode<synchronous>, transform_indices = @transform_2, window_bounds = array<i64: 1, 1, 32>}, {pipeline_mode = #tpu.pipeline_mode<synchronous>, transform_indices = @transform_3, window_bounds = array<i64: 1, 1, 32>}, {transform_indices = @transform_4, window_bounds = array<i64: 1, 8, 32>}]} {
    %c0 = arith.constant 0 : index
    %c0_0 = arith.constant 0 : index
    %c0_1 = arith.constant 0 : index
    %0 = vector.load %arg1[%c0, %c0_0, %c0_1] : memref<1x8x32xf32, #tpu.memory_space<vmem>>, vector<1x8x32xf32>
    %c0_2 = arith.constant 0 : index
    %c0_3 = arith.constant 0 : index
    %c0_4 = arith.constant 0 : index
    %1 = vector.load %arg2[%c0_2, %c0_3, %c0_4] : memref<1x8x32xf32, #tpu.memory_space<vmem>>, vector<1x8x32xf32>
    %2 = arith.addf %0, %1 : vector<1x8x32xf32>
    %c0_5 = arith.constant 0 : index
    %c0_6 = arith.constant 0 : index
    %c0_7 = arith.constant 0 : index
    %3 = vector.load %arg3[%c0_5, %c0_6, %c0_7] : memref<1x1x32xf32, #tpu.memory_space<vmem>>, vector<1x1x32xf32>
    %c0_8 = arith.constant 0 : index
    %c0_9 = arith.constant 0 : index
    %c0_10 = arith.constant 0 : index
    %4 = vector.load %arg4[%c0_8, %c0_9, %c0_10] : memref<1x1x32xf32, #tpu.memory_space<vmem>>, vector<1x1x32xf32>
    %cst = arith.constant dense<0.000000e+00> : vector<1x8xf32>
    %5 = vector.multi_reduction <add>, %2, %cst [2] : vector<1x8x32xf32> to vector<1x8xf32>
    %6 = vector.shape_cast %5 : vector<1x8xf32> to vector<1x8x1xf32>
    %cst_11 = arith.constant 3.200000e+01 : f32
    %7 = vector.broadcast %cst_11 : f32 to vector<1x8x1xf32>
    %8 = arith.divf %6, %7 : vector<1x8x1xf32>
    %9 = vector.broadcast %8 : vector<1x8x1xf32> to vector<1x8x32xf32>
    %10 = arith.subf %2, %9 : vector<1x8x32xf32>
    %11 = arith.mulf %10, %10 : vector<1x8x32xf32>
    %cst_12 = arith.constant dense<0.000000e+00> : vector<1x8xf32>
    %12 = vector.multi_reduction <add>, %11, %cst_12 [2] : vector<1x8x32xf32> to vector<1x8xf32>
    %13 = vector.shape_cast %12 : vector<1x8xf32> to vector<1x8x1xf32>
    %cst_13 = arith.constant 3.200000e+01 : f32
    %14 = vector.broadcast %cst_13 : f32 to vector<1x8x1xf32>
    %15 = arith.divf %13, %14 : vector<1x8x1xf32>
    %16 = vector.broadcast %8 : vector<1x8x1xf32> to vector<1x8x32xf32>
    %17 = arith.subf %2, %16 : vector<1x8x32xf32>
    %cst_14 = arith.constant 9.99999974E-6 : f32
    %18 = vector.broadcast %cst_14 : f32 to vector<1x8x1xf32>
    %19 = arith.addf %15, %18 : vector<1x8x1xf32>
    %20 = math.rsqrt %19 : vector<1x8x1xf32>
    %21 = vector.broadcast %20 : vector<1x8x1xf32> to vector<1x8x32xf32>
    %22 = arith.mulf %17, %21 : vector<1x8x32xf32>
    %23 = vector.broadcast %3 : vector<1x1x32xf32> to vector<1x8x32xf32>
    %24 = arith.mulf %22, %23 : vector<1x8x32xf32>
    %25 = vector.broadcast %4 : vector<1x1x32xf32> to vector<1x8x32xf32>
    %26 = arith.addf %24, %25 : vector<1x8x32xf32>
    %c0_15 = arith.constant 0 : index
    %c0_16 = arith.constant 0 : index
    %c0_17 = arith.constant 0 : index
    %27 = vector.load %arg5[%c0_15, %c0_16, %c0_17] : memref<1x8x32xf32, #tpu.memory_space<vmem>>, vector<1x8x32xf32>
    tpu.vector_store %arg5[%c0_15, %c0_16, %c0_17], %26 {strides = array<i32>} : memref<1x8x32xf32, #tpu.memory_space<vmem>>, vector<1x8x32xf32>,
    return
  }
  func.func @transform_0(%arg0: i32) -> (i32, i32, i32) {
    %c0_i32 = arith.constant 0 : i32
    %c0_i32_0 = arith.constant 0 : i32
    %c0_i32_1 = arith.constant 0 : i32
    return %arg0, %c0_i32, %c0_i32_0 : i32, i32, i32
  }
  func.func @transform_1(%arg0: i32) -> (i32, i32, i32) {
    %c0_i32 = arith.constant 0 : i32
    %c0_i32_0 = arith.constant 0 : i32
    %c0_i32_1 = arith.constant 0 : i32
    %c0_i32_2 = arith.constant 0 : i32
    return %c0_i32, %c0_i32_0, %c0_i32_1 : i32, i32, i32
  }
  func.func @transform_2(%arg0: i32) -> (i32, i32, i32) {
    %c0_i32 = arith.constant 0 : i32
    %c0_i32_0 = arith.constant 0 : i32
    %c0_i32_1 = arith.constant 0 : i32
    %c0_i32_2 = arith.constant 0 : i32
    return %c0_i32, %c0_i32_0, %c0_i32_1 : i32, i32, i32
  }
  func.func @transform_3(%arg0: i32) -> (i32, i32, i32) {
    %c0_i32 = arith.constant 0 : i32
    %c0_i32_0 = arith.constant 0 : i32
    %c0_i32_1 = arith.constant 0 : i32
    %c0_i32_2 = arith.constant 0 : i32
    return %c0_i32, %c0_i32_0, %c0_i32_1 : i32, i32, i32
  }
  func.func @transform_4(%arg0: i32) -> (i32, i32, i32) {
    %c0_i32 = arith.constant 0 : i32
    %c0_i32_0 = arith.constant 0 : i32
    %c0_i32_1 = arith.constant 0 : i32
    return %arg0, %c0_i32, %c0_i32_0 : i32, i32, i32
  }
}

module attributes {stable_mosaic.version = 11 : i64} {
  func.func @_enc_layer_kernel(%arg0: i32, %arg1: memref<1x8x32xf32, #tpu.memory_space<vmem>>, %arg2: memref<1x1x8xf32, #tpu.memory_space<vmem>>, %arg3: memref<32x96xbf16, #tpu.memory_space<vmem>>, %arg4: memref<1x1x96xf32, #tpu.memory_space<vmem>>, %arg5: memref<32x32xbf16, #tpu.memory_space<vmem>>, %arg6: memref<1x1x32xf32, #tpu.memory_space<vmem>>, %arg7: memref<1x1x32xf32, #tpu.memory_space<vmem>>, %arg8: memref<1x1x32xf32, #tpu.memory_space<vmem>>, %arg9: memref<32x64xbf16, #tpu.memory_space<vmem>>, %arg10: memref<1x1x64xf32, #tpu.memory_space<vmem>>, %arg11: memref<64x32xbf16, #tpu.memory_space<vmem>>, %arg12: memref<1x1x32xf32, #tpu.memory_space<vmem>>, %arg13: memref<1x1x32xf32, #tpu.memory_space<vmem>>, %arg14: memref<1x1x32xf32, #tpu.memory_space<vmem>>, %arg15: memref<1x8x32xf32, #tpu.memory_space<vmem>>) attributes {dimension_semantics = [#tpu.dimension_semantics<parallel>], iteration_bounds = array<i64: 2>, scalar_prefetch = 0 : i64, scratch_operands = 0 : i64, tpu.core_type = #tpu.core_type<tc>, window_params = [{transform_indices = @transform_0, window_bounds = array<i64: 1, 8, 32>}, {transform_indices = @transform_1, window_bounds = array<i64: 1, 1, 8>}, {pipeline_mode = #tpu.pipeline_mode<synchronous>, transform_indices = @transform_2, window_bounds = array<i64: 32, 96>}, {pipeline_mode = #tpu.pipeline_mode<synchronous>, transform_indices = @transform_3, window_bounds = array<i64: 1, 1, 96>}, {pipeline_mode = #tpu.pipeline_mode<synchronous>, transform_indices = @transform_4, window_bounds = array<i64: 32, 32>}, {pipeline_mode = #tpu.pipeline_mode<synchronous>, transform_indices = @transform_5, window_bounds = array<i64: 1, 1, 32>}, {pipeline_mode = #tpu.pipeline_mode<synchronous>, transform_indices = @transform_6, window_bounds = array<i64: 1, 1, 32>}, {pipeline_mode = #tpu.pipeline_mode<synchronous>, transform_indices = @transform_7, window_bounds = array<i64: 1, 1, 32>}, {pipeline_mode = #tpu.pipeline_mode<synchronous>, transform_indices = @transform_8, window_bounds = array<i64: 32, 64>}, {pipeline_mode = #tpu.pipeline_mode<synchronous>, transform_indices = @transform_9, window_bounds = array<i64: 1, 1, 64>}, {pipeline_mode = #tpu.pipeline_mode<synchronous>, transform_indices = @transform_10, window_bounds = array<i64: 64, 32>}, {pipeline_mode = #tpu.pipeline_mode<synchronous>, transform_indices = @transform_11, window_bounds = array<i64: 1, 1, 32>}, {pipeline_mode = #tpu.pipeline_mode<synchronous>, transform_indices = @transform_12, window_bounds = array<i64: 1, 1, 32>}, {pipeline_mode = #tpu.pipeline_mode<synchronous>, transform_indices = @transform_13, window_bounds = array<i64: 1, 1, 32>}, {transform_indices = @transform_14, window_bounds = array<i64: 1, 8, 32>}]} {
    %c0 = arith.constant 0 : index
    %c0_0 = arith.constant 0 : index
    %c0_1 = arith.constant 0 : index
    %0 = vector.load %arg1[%c0, %c0_0, %c0_1] : memref<1x8x32xf32, #tpu.memory_space<vmem>>, vector<1x8x32xf32>
    %c0_2 = arith.constant 0 : index
    %c0_3 = arith.constant 0 : index
    %1 = vector.load %arg3[%c0_2, %c0_3] : memref<32x96xbf16, #tpu.memory_space<vmem>>, vector<32x96xbf16>
    %c0_4 = arith.constant 0 : index
    %c0_5 = arith.constant 0 : index
    %c0_6 = arith.constant 0 : index
    %2 = vector.load %arg4[%c0_4, %c0_5, %c0_6] : memref<1x1x96xf32, #tpu.memory_space<vmem>>, vector<1x1x96xf32>
    %3 = arith.truncf %0 : vector<1x8x32xf32> to vector<1x8x32xbf16>
    "tpu.trace_start"() <{level = 10 : i32, message = "bld,de->ble"}> : () -> ()
    %cst = arith.constant dense<0.000000e+00> : vector<1x8x96xf32>
    %4 = tpu.matmul %3, %1, %cst {dimension_numbers = #tpu.dot_dimension_numbers<[2], [0], [0, 1], [1], [0, 0, 0, 1, 1, 1], [], []>} : vector<1x8x32xbf16>, vector<32x96xbf16>, vector<1x8x96xf32> -> vector<1x8x96xf32>
    "tpu.trace_stop"() : () -> ()
    %5 = vector.broadcast %2 : vector<1x1x96xf32> to vector<1x8x96xf32>
    %6 = arith.addf %4, %5 : vector<1x8x96xf32>
    %7 = vector.extract_strided_slice %6 {offsets = [0, 0, 0], sizes = [1, 8, 32], strides = [1, 1, 1]} : vector<1x8x96xf32> to vector<1x8x32xf32>
    %8 = vector.extract_strided_slice %6 {offsets = [0, 0, 32], sizes = [1, 8, 32], strides = [1, 1, 1]} : vector<1x8x96xf32> to vector<1x8x32xf32>
    %9 = vector.extract_strided_slice %6 {offsets = [0, 0, 64], sizes = [1, 8, 32], strides = [1, 1, 1]} : vector<1x8x96xf32> to vector<1x8x32xf32>
    %c0_7 = arith.constant 0 : index
    %c0_8 = arith.constant 0 : index
    %c0_9 = arith.constant 0 : index
    %10 = vector.load %arg2[%c0_7, %c0_8, %c0_9] : memref<1x1x8xf32, #tpu.memory_space<vmem>>, vector<1x1x8xf32>
    %c0_10 = arith.constant 0 : index
    %c0_11 = arith.constant 0 : index
    %11 = vector.load %arg5[%c0_10, %c0_11] : memref<32x32xbf16, #tpu.memory_space<vmem>>, vector<32x32xbf16>
    %c0_12 = arith.constant 0 : index
    %c0_13 = arith.constant 0 : index
    %c0_14 = arith.constant 0 : index
    %12 = vector.load %arg6[%c0_12, %c0_13, %c0_14] : memref<1x1x32xf32, #tpu.memory_space<vmem>>, vector<1x1x32xf32>
    %13 = vector.extract_strided_slice %7 {offsets = [0, 0, 0], sizes = [1, 8, 16], strides = [1, 1, 1]} : vector<1x8x32xf32> to vector<1x8x16xf32>
    %14 = arith.truncf %13 : vector<1x8x16xf32> to vector<1x8x16xbf16>
    %15 = vector.extract_strided_slice %8 {offsets = [0, 0, 0], sizes = [1, 8, 16], strides = [1, 1, 1]} : vector<1x8x32xf32> to vector<1x8x16xf32>
    %16 = arith.truncf %15 : vector<1x8x16xf32> to vector<1x8x16xbf16>
    %17 = vector.extract_strided_slice %9 {offsets = [0, 0, 0], sizes = [1, 8, 16], strides = [1, 1, 1]} : vector<1x8x32xf32> to vector<1x8x16xf32>
    %18 = arith.truncf %17 : vector<1x8x16xf32> to vector<1x8x16xbf16>
    "tpu.trace_start"() <{level = 10 : i32, message = "bqd,bkd->bqk"}> : () -> ()
    %cst_15 = arith.constant dense<0.000000e+00> : vector<1x8x8xf32>
    %19 = tpu.matmul %14, %16, %cst_15 {dimension_numbers = #tpu.dot_dimension_numbers<[2], [2], [1], [1], [0, 0, 0, 1, 1, 1], [0], [0]>} : vector<1x8x16xbf16>, vector<1x8x16xbf16>, vector<1x8x8xf32> -> vector<1x8x8xf32>
    "tpu.trace_stop"() : () -> ()
    %cst_16 = arith.constant 2.500000e-01 : f32
    %20 = vector.broadcast %cst_16 : f32 to vector<1x8x8xf32>
    %21 = arith.mulf %19, %20 : vector<1x8x8xf32>
    %22 = vector.broadcast %10 : vector<1x1x8xf32> to vector<1x8x8xf32>
    %23 = arith.addf %21, %22 : vector<1x8x8xf32>
    %cst_17 = arith.constant dense<0xFF800000> : vector<1x8xf32>
    %24 = vector.multi_reduction <maximumf>, %23, %cst_17 [2] : vector<1x8x8xf32> to vector<1x8xf32>
    %25 = vector.shape_cast %24 : vector<1x8xf32> to vector<1x8x1xf32>
    %26 = vector.broadcast %25 : vector<1x8x1xf32> to vector<1x8x8xf32>
    %27 = arith.subf %23, %26 : vector<1x8x8xf32>
    %28 = math.exp %27 : vector<1x8x8xf32>
    %cst_18 = arith.constant dense<0.000000e+00> : vector<1x8xf32>
    %29 = vector.multi_reduction <add>, %28, %cst_18 [2] : vector<1x8x8xf32> to vector<1x8xf32>
    %30 = vector.shape_cast %29 : vector<1x8xf32> to vector<1x8x1xf32>
    %31 = vector.broadcast %30 : vector<1x8x1xf32> to vector<1x8x8xf32>
    %32 = arith.divf %28, %31 : vector<1x8x8xf32>
    %33 = arith.truncf %32 : vector<1x8x8xf32> to vector<1x8x8xbf16>
    "tpu.trace_start"() <{level = 10 : i32, message = "bqk,bkd->bqd"}> : () -> ()
    %cst_19 = arith.constant dense<0.000000e+00> : vector<1x8x16xf32>
    %34 = tpu.matmul %33, %18, %cst_19 {dimension_numbers = #tpu.dot_dimension_numbers<[2], [1], [1], [2], [0, 0, 0, 1, 1, 2], [0], [0]>} : vector<1x8x8xbf16>, vector<1x8x16xbf16>, vector<1x8x16xf32> -> vector<1x8x16xf32>
    "tpu.trace_stop"() : () -> ()
    %35 = vector.extract_strided_slice %7 {offsets = [0, 0, 16], sizes = [1, 8, 16], strides = [1, 1, 1]} : vector<1x8x32xf32> to vector<1x8x16xf32>
    %36 = arith.truncf %35 : vector<1x8x16xf32> to vector<1x8x16xbf16>
    %37 = vector.extract_strided_slice %8 {offsets = [0, 0, 16], sizes = [1, 8, 16], strides = [1, 1, 1]} : vector<1x8x32xf32> to vector<1x8x16xf32>
    %38 = arith.truncf %37 : vector<1x8x16xf32> to vector<1x8x16xbf16>
    %39 = vector.extract_strided_slice %9 {offsets = [0, 0, 16], sizes = [1, 8, 16], strides = [1, 1, 1]} : vector<1x8x32xf32> to vector<1x8x16xf32>
    %40 = arith.truncf %39 : vector<1x8x16xf32> to vector<1x8x16xbf16>
    "tpu.trace_start"() <{level = 10 : i32, message = "bqd,bkd->bqk"}> : () -> ()
    %cst_20 = arith.constant dense<0.000000e+00> : vector<1x8x8xf32>
    %41 = tpu.matmul %36, %38, %cst_20 {dimension_numbers = #tpu.dot_dimension_numbers<[2], [2], [1], [1], [0, 0, 0, 1, 1, 1], [0], [0]>} : vector<1x8x16xbf16>, vector<1x8x16xbf16>, vector<1x8x8xf32> -> vector<1x8x8xf32>
    "tpu.trace_stop"() : () -> ()
    %cst_21 = arith.constant 2.500000e-01 : f32
    %42 = vector.broadcast %cst_21 : f32 to vector<1x8x8xf32>
    %43 = arith.mulf %41, %42 : vector<1x8x8xf32>
    %44 = vector.broadcast %10 : vector<1x1x8xf32> to vector<1x8x8xf32>
    %45 = arith.addf %43, %44 : vector<1x8x8xf32>
    %cst_22 = arith.constant dense<0xFF800000> : vector<1x8xf32>
    %46 = vector.multi_reduction <maximumf>, %45, %cst_22 [2] : vector<1x8x8xf32> to vector<1x8xf32>
    %47 = vector.shape_cast %46 : vector<1x8xf32> to vector<1x8x1xf32>
    %48 = vector.broadcast %47 : vector<1x8x1xf32> to vector<1x8x8xf32>
    %49 = arith.subf %45, %48 : vector<1x8x8xf32>
    %50 = math.exp %49 : vector<1x8x8xf32>
    %cst_23 = arith.constant dense<0.000000e+00> : vector<1x8xf32>
    %51 = vector.multi_reduction <add>, %50, %cst_23 [2] : vector<1x8x8xf32> to vector<1x8xf32>
    %52 = vector.shape_cast %51 : vector<1x8xf32> to vector<1x8x1xf32>
    %53 = vector.broadcast %52 : vector<1x8x1xf32> to vector<1x8x8xf32>
    %54 = arith.divf %50, %53 : vector<1x8x8xf32>
    %55 = arith.truncf %54 : vector<1x8x8xf32> to vector<1x8x8xbf16>
    "tpu.trace_start"() <{level = 10 : i32, message = "bqk,bkd->bqd"}> : () -> ()
    %cst_24 = arith.constant dense<0.000000e+00> : vector<1x8x16xf32>
    %56 = tpu.matmul %55, %40, %cst_24 {dimension_numbers = #tpu.dot_dimension_numbers<[2], [1], [1], [2], [0, 0, 0, 1, 1, 2], [0], [0]>} : vector<1x8x8xbf16>, vector<1x8x16xbf16>, vector<1x8x16xf32> -> vector<1x8x16xf32>
    "tpu.trace_stop"() : () -> ()
    %57 = tpu.concatenate %34, %56 in 2 : vector<1x8x16xf32>, vector<1x8x16xf32> -> vector<1x8x32xf32>
    %58 = arith.truncf %57 : vector<1x8x32xf32> to vector<1x8x32xbf16>
    "tpu.trace_start"() <{level = 10 : i32, message = "bqd,de->bqe"}> : () -> ()
    %cst_25 = arith.constant dense<0.000000e+00> : vector<1x8x32xf32>
    %59 = tpu.matmul %58, %11, %cst_25 {dimension_numbers = #tpu.dot_dimension_numbers<[2], [0], [0, 1], [1], [0, 0, 0, 1, 1, 1], [], []>} : vector<1x8x32xbf16>, vector<32x32xbf16>, vector<1x8x32xf32> -> vector<1x8x32xf32>
    "tpu.trace_stop"() : () -> ()
    %60 = vector.broadcast %12 : vector<1x1x32xf32> to vector<1x8x32xf32>
    %61 = arith.addf %59, %60 : vector<1x8x32xf32>
    %62 = arith.addf %0, %61 : vector<1x8x32xf32>
    %c0_26 = arith.constant 0 : index
    %c0_27 = arith.constant 0 : index
    %c0_28 = arith.constant 0 : index
    %63 = vector.load %arg7[%c0_26, %c0_27, %c0_28] : memref<1x1x32xf32, #tpu.memory_space<vmem>>, vector<1x1x32xf32>
    %c0_29 = arith.constant 0 : index
    %c0_30 = arith.constant 0 : index
    %c0_31 = arith.constant 0 : index
    %64 = vector.load %arg8[%c0_29, %c0_30, %c0_31] : memref<1x1x32xf32, #tpu.memory_space<vmem>>, vector<1x1x32xf32>
    %cst_32 = arith.constant dense<0.000000e+00> : vector<1x8xf32>
    %65 = vector.multi_reduction <add>, %62, %cst_32 [2] : vector<1x8x32xf32> to vector<1x8xf32>
    %66 = vector.shape_cast %65 : vector<1x8xf32> to vector<1x8x1xf32>
    %cst_33 = arith.constant 3.200000e+01 : f32
    %67 = vector.broadcast %cst_33 : f32 to vector<1x8x1xf32>
    %68 = arith.divf %66, %67 : vector<1x8x1xf32>
    %69 = vector.broadcast %68 : vector<1x8x1xf32> to vector<1x8x32xf32>
    %70 = arith.subf %62, %69 : vector<1x8x32xf32>
    %71 = arith.mulf %70, %70 : vector<1x8x32xf32>
    %cst_34 = arith.constant dense<0.000000e+00> : vector<1x8xf32>
    %72 = vector.multi_reduction <add>, %71, %cst_34 [2] : vector<1x8x32xf32> to vector<1x8xf32>
    %73 = vector.shape_cast %72 : vector<1x8xf32> to vector<1x8x1xf32>
    %cst_35 = arith.constant 3.200000e+01 : f32
    %74 = vector.broadcast %cst_35 : f32 to vector<1x8x1xf32>
    %75 = arith.divf %73, %74 : vector<1x8x1xf32>
    %76 = vector.broadcast %68 : vector<1x8x1xf32> to vector<1x8x32xf32>
    %77 = arith.subf %62, %76 : vector<1x8x32xf32>
    %cst_36 = arith.constant 9.99999974E-6 : f32
    %78 = vector.broadcast %cst_36 : f32 to vector<1x8x1xf32>
    %79 = arith.addf %75, %78 : vector<1x8x1xf32>
    %80 = math.rsqrt %79 : vector<1x8x1xf32>
    %81 = vector.broadcast %80 : vector<1x8x1xf32> to vector<1x8x32xf32>
    %82 = arith.mulf %77, %81 : vector<1x8x32xf32>
    %83 = vector.broadcast %63 : vector<1x1x32xf32> to vector<1x8x32xf32>
    %84 = arith.mulf %82, %83 : vector<1x8x32xf32>
    %85 = vector.broadcast %64 : vector<1x1x32xf32> to vector<1x8x32xf32>
    %86 = arith.addf %84, %85 : vector<1x8x32xf32>
    %c0_37 = arith.constant 0 : index
    %c0_38 = arith.constant 0 : index
    %87 = vector.load %arg9[%c0_37, %c0_38] : memref<32x64xbf16, #tpu.memory_space<vmem>>, vector<32x64xbf16>
    %c0_39 = arith.constant 0 : index
    %c0_40 = arith.constant 0 : index
    %c0_41 = arith.constant 0 : index
    %88 = vector.load %arg10[%c0_39, %c0_40, %c0_41] : memref<1x1x64xf32, #tpu.memory_space<vmem>>, vector<1x1x64xf32>
    %89 = arith.truncf %86 : vector<1x8x32xf32> to vector<1x8x32xbf16>
    "tpu.trace_start"() <{level = 10 : i32, message = "bld,de->ble"}> : () -> ()
    %cst_42 = arith.constant dense<0.000000e+00> : vector<1x8x64xf32>
    %90 = tpu.matmul %89, %87, %cst_42 {dimension_numbers = #tpu.dot_dimension_numbers<[2], [0], [0, 1], [1], [0, 0, 0, 1, 1, 1], [], []>} : vector<1x8x32xbf16>, vector<32x64xbf16>, vector<1x8x64xf32> -> vector<1x8x64xf32>
    "tpu.trace_stop"() : () -> ()
    %91 = vector.broadcast %88 : vector<1x1x64xf32> to vector<1x8x64xf32>
    %92 = arith.addf %90, %91 : vector<1x8x64xf32>
    %cst_43 = arith.constant 5.000000e-01 : f32
    %93 = vector.broadcast %cst_43 : f32 to vector<1x8x64xf32>
    %94 = arith.mulf %93, %92 : vector<1x8x64xf32>
    %cst_44 = arith.constant 4.471500e-02 : f32
    %95 = vector.broadcast %cst_44 : f32 to vector<1x8x64xf32>
    %96 = arith.mulf %95, %92 : vector<1x8x64xf32>
    %97 = arith.mulf %96, %92 : vector<1x8x64xf32>
    %98 = arith.mulf %97, %92 : vector<1x8x64xf32>
    %99 = arith.addf %92, %98 : vector<1x8x64xf32>
    %cst_45 = arith.constant 0.797884583 : f32
    %100 = vector.broadcast %cst_45 : f32 to vector<1x8x64xf32>
    %101 = arith.mulf %100, %99 : vector<1x8x64xf32>
    %102 = math.tanh %101 : vector<1x8x64xf32>
    %cst_46 = arith.constant 1.000000e+00 : f32
    %103 = vector.broadcast %cst_46 : f32 to vector<1x8x64xf32>
    %104 = arith.addf %103, %102 : vector<1x8x64xf32>
    %105 = arith.mulf %94, %104 : vector<1x8x64xf32>
    %c0_47 = arith.constant 0 : index
    %c0_48 = arith.constant 0 : index
    %106 = vector.load %arg11[%c0_47, %c0_48] : memref<64x32xbf16, #tpu.memory_space<vmem>>, vector<64x32xbf16>
    %c0_49 = arith.constant 0 : index
    %c0_50 = arith.constant 0 : index
    %c0_51 = arith.constant 0 : index
    %107 = vector.load %arg12[%c0_49, %c0_50, %c0_51] : memref<1x1x32xf32, #tpu.memory_space<vmem>>, vector<1x1x32xf32>
    %108 = arith.truncf %105 : vector<1x8x64xf32> to vector<1x8x64xbf16>
    "tpu.trace_start"() <{level = 10 : i32, message = "bld,de->ble"}> : () -> ()
    %cst_52 = arith.constant dense<0.000000e+00> : vector<1x8x32xf32>
    %109 = tpu.matmul %108, %106, %cst_52 {dimension_numbers = #tpu.dot_dimension_numbers<[2], [0], [0, 1], [1], [0, 0, 0, 1, 1, 1], [], []>} : vector<1x8x64xbf16>, vector<64x32xbf16>, vector<1x8x32xf32> -> vector<1x8x32xf32>
    "tpu.trace_stop"() : () -> ()
    %110 = vector.broadcast %107 : vector<1x1x32xf32> to vector<1x8x32xf32>
    %111 = arith.addf %109, %110 : vector<1x8x32xf32>
    %112 = arith.addf %86, %111 : vector<1x8x32xf32>
    %c0_53 = arith.constant 0 : index
    %c0_54 = arith.constant 0 : index
    %c0_55 = arith.constant 0 : index
    %113 = vector.load %arg13[%c0_53, %c0_54, %c0_55] : memref<1x1x32xf32, #tpu.memory_space<vmem>>, vector<1x1x32xf32>
    %c0_56 = arith.constant 0 : index
    %c0_57 = arith.constant 0 : index
    %c0_58 = arith.constant 0 : index
    %114 = vector.load %arg14[%c0_56, %c0_57, %c0_58] : memref<1x1x32xf32, #tpu.memory_space<vmem>>, vector<1x1x32xf32>
    %cst_59 = arith.constant dense<0.000000e+00> : vector<1x8xf32>
    %115 = vector.multi_reduction <add>, %112, %cst_59 [2] : vector<1x8x32xf32> to vector<1x8xf32>
    %116 = vector.shape_cast %115 : vector<1x8xf32> to vector<1x8x1xf32>
    %cst_60 = arith.constant 3.200000e+01 : f32
    %117 = vector.broadcast %cst_60 : f32 to vector<1x8x1xf32>
    %118 = arith.divf %116, %117 : vector<1x8x1xf32>
    %119 = vector.broadcast %118 : vector<1x8x1xf32> to vector<1x8x32xf32>
    %120 = arith.subf %112, %119 : vector<1x8x32xf32>
    %121 = arith.mulf %120, %120 : vector<1x8x32xf32>
    %cst_61 = arith.constant dense<0.000000e+00> : vector<1x8xf32>
    %122 = vector.multi_reduction <add>, %121, %cst_61 [2] : vector<1x8x32xf32> to vector<1x8xf32>
    %123 = vector.shape_cast %122 : vector<1x8xf32> to vector<1x8x1xf32>
    %cst_62 = arith.constant 3.200000e+01 : f32
    %124 = vector.broadcast %cst_62 : f32 to vector<1x8x1xf32>
    %125 = arith.divf %123, %124 : vector<1x8x1xf32>
    %126 = vector.broadcast %118 : vector<1x8x1xf32> to vector<1x8x32xf32>
    %127 = arith.subf %112, %126 : vector<1x8x32xf32>
    %cst_63 = arith.constant 9.99999974E-6 : f32
    %128 = vector.broadcast %cst_63 : f32 to vector<1x8x1xf32>
    %129 = arith.addf %125, %128 : vector<1x8x1xf32>
    %130 = math.rsqrt %129 : vector<1x8x1xf32>
    %131 = vector.broadcast %130 : vector<1x8x1xf32> to vector<1x8x32xf32>
    %132 = arith.mulf %127, %131 : vector<1x8x32xf32>
    %133 = vector.broadcast %113 : vector<1x1x32xf32> to vector<1x8x32xf32>
    %134 = arith.mulf %132, %133 : vector<1x8x32xf32>
    %135 = vector.broadcast %114 : vector<1x1x32xf32> to vector<1x8x32xf32>
    %136 = arith.addf %134, %135 : vector<1x8x32xf32>
    %c0_64 = arith.constant 0 : index
    %c0_65 = arith.constant 0 : index
    %c0_66 = arith.constant 0 : index
    %137 = vector.load %arg15[%c0_64, %c0_65, %c0_66] : memref<1x8x32xf32, #tpu.memory_space<vmem>>, vector<1x8x32xf32>
    tpu.vector_store %arg15[%c0_64, %c0_65, %c0_66], %136 {strides = array<i32>} : memref<1x8x32xf32, #tpu.memory_space<vmem>>, vector<1x8x32xf32>,
    return
  }
  func.func @transform_0(%arg0: i32) -> (i32, i32, i32) {
    %c0_i32 = arith.constant 0 : i32
    %c0_i32_0 = arith.constant 0 : i32
    %c0_i32_1 = arith.constant 0 : i32
    return %arg0, %c0_i32, %c0_i32_0 : i32, i32, i32
  }
  func.func @transform_1(%arg0: i32) -> (i32, i32, i32) {
    %c0_i32 = arith.constant 0 : i32
    %c0_i32_0 = arith.constant 0 : i32
    %c0_i32_1 = arith.constant 0 : i32
    return %arg0, %c0_i32, %c0_i32_0 : i32, i32, i32
  }
  func.func @transform_2(%arg0: i32) -> (i32, i32) {
    %c0_i32 = arith.constant 0 : i32
    %c0_i32_0 = arith.constant 0 : i32
    %c0_i32_1 = arith.constant 0 : i32
    return %c0_i32, %c0_i32_0 : i32, i32
  }
  func.func @transform_3(%arg0: i32) -> (i32, i32, i32) {
    %c0_i32 = arith.constant 0 : i32
    %c0_i32_0 = arith.constant 0 : i32
    %c0_i32_1 = arith.constant 0 : i32
    %c0_i32_2 = arith.constant 0 : i32
    return %c0_i32, %c0_i32_0, %c0_i32_1 : i32, i32, i32
  }
  func.func @transform_4(%arg0: i32) -> (i32, i32) {
    %c0_i32 = arith.constant 0 : i32
    %c0_i32_0 = arith.constant 0 : i32
    %c0_i32_1 = arith.constant 0 : i32
    return %c0_i32, %c0_i32_0 : i32, i32
  }
  func.func @transform_5(%arg0: i32) -> (i32, i32, i32) {
    %c0_i32 = arith.constant 0 : i32
    %c0_i32_0 = arith.constant 0 : i32
    %c0_i32_1 = arith.constant 0 : i32
    %c0_i32_2 = arith.constant 0 : i32
    return %c0_i32, %c0_i32_0, %c0_i32_1 : i32, i32, i32
  }
  func.func @transform_6(%arg0: i32) -> (i32, i32, i32) {
    %c0_i32 = arith.constant 0 : i32
    %c0_i32_0 = arith.constant 0 : i32
    %c0_i32_1 = arith.constant 0 : i32
    %c0_i32_2 = arith.constant 0 : i32
    return %c0_i32, %c0_i32_0, %c0_i32_1 : i32, i32, i32
  }
  func.func @transform_7(%arg0: i32) -> (i32, i32, i32) {
    %c0_i32 = arith.constant 0 : i32
    %c0_i32_0 = arith.constant 0 : i32
    %c0_i32_1 = arith.constant 0 : i32
    %c0_i32_2 = arith.constant 0 : i32
    return %c0_i32, %c0_i32_0, %c0_i32_1 : i32, i32, i32
  }
  func.func @transform_8(%arg0: i32) -> (i32, i32) {
    %c0_i32 = arith.constant 0 : i32
    %c0_i32_0 = arith.constant 0 : i32
    %c0_i32_1 = arith.constant 0 : i32
    return %c0_i32, %c0_i32_0 : i32, i32
  }
  func.func @transform_9(%arg0: i32) -> (i32, i32, i32) {
    %c0_i32 = arith.constant 0 : i32
    %c0_i32_0 = arith.constant 0 : i32
    %c0_i32_1 = arith.constant 0 : i32
    %c0_i32_2 = arith.constant 0 : i32
    return %c0_i32, %c0_i32_0, %c0_i32_1 : i32, i32, i32
  }
  func.func @transform_10(%arg0: i32) -> (i32, i32) {
    %c0_i32 = arith.constant 0 : i32
    %c0_i32_0 = arith.constant 0 : i32
    %c0_i32_1 = arith.constant 0 : i32
    return %c0_i32, %c0_i32_0 : i32, i32
  }
  func.func @transform_11(%arg0: i32) -> (i32, i32, i32) {
    %c0_i32 = arith.constant 0 : i32
    %c0_i32_0 = arith.constant 0 : i32
    %c0_i32_1 = arith.constant 0 : i32
    %c0_i32_2 = arith.constant 0 : i32
    return %c0_i32, %c0_i32_0, %c0_i32_1 : i32, i32, i32
  }
  func.func @transform_12(%arg0: i32) -> (i32, i32, i32) {
    %c0_i32 = arith.constant 0 : i32
    %c0_i32_0 = arith.constant 0 : i32
    %c0_i32_1 = arith.constant 0 : i32
    %c0_i32_2 = arith.constant 0 : i32
    return %c0_i32, %c0_i32_0, %c0_i32_1 : i32, i32, i32
  }
  func.func @transform_13(%arg0: i32) -> (i32, i32, i32) {
    %c0_i32 = arith.constant 0 : i32
    %c0_i32_0 = arith.constant 0 : i32
    %c0_i32_1 = arith.constant 0 : i32
    %c0_i32_2 = arith.constant 0 : i32
    return %c0_i32, %c0_i32_0, %c0_i32_1 : i32, i32, i32
  }
  func.func @transform_14(%arg0: i32) -> (i32, i32, i32) {
    %c0_i32 = arith.constant 0 : i32
    %c0_i32_0 = arith.constant 0 : i32
    %c0_i32_1 = arith.constant 0 : i32
    return %arg0, %c0_i32, %c0_i32_0 : i32, i32, i32
  }
}

module attributes {stable_mosaic.version = 11 : i64} {
  func.func @_dec_layer_kernel(%arg0: i32, %arg1: memref<1x8x32xf32, #tpu.memory_space<vmem>>, %arg2: memref<1x8x32xf32, #tpu.memory_space<vmem>>, %arg3: memref<1x1x8xf32, #tpu.memory_space<vmem>>, %arg4: memref<1x1x8xf32, #tpu.memory_space<vmem>>, %arg5: memref<32x96xbf16, #tpu.memory_space<vmem>>, %arg6: memref<1x1x96xf32, #tpu.memory_space<vmem>>, %arg7: memref<32x32xbf16, #tpu.memory_space<vmem>>, %arg8: memref<1x1x32xf32, #tpu.memory_space<vmem>>, %arg9: memref<1x1x32xf32, #tpu.memory_space<vmem>>, %arg10: memref<1x1x32xf32, #tpu.memory_space<vmem>>, %arg11: memref<32x32xbf16, #tpu.memory_space<vmem>>, %arg12: memref<1x1x32xf32, #tpu.memory_space<vmem>>, %arg13: memref<32x64xbf16, #tpu.memory_space<vmem>>, %arg14: memref<1x1x64xf32, #tpu.memory_space<vmem>>, %arg15: memref<32x32xbf16, #tpu.memory_space<vmem>>, %arg16: memref<1x1x32xf32, #tpu.memory_space<vmem>>, %arg17: memref<1x1x32xf32, #tpu.memory_space<vmem>>, %arg18: memref<1x1x32xf32, #tpu.memory_space<vmem>>, %arg19: memref<32x64xbf16, #tpu.memory_space<vmem>>, %arg20: memref<1x1x64xf32, #tpu.memory_space<vmem>>, %arg21: memref<64x32xbf16, #tpu.memory_space<vmem>>, %arg22: memref<1x1x32xf32, #tpu.memory_space<vmem>>, %arg23: memref<1x1x32xf32, #tpu.memory_space<vmem>>, %arg24: memref<1x1x32xf32, #tpu.memory_space<vmem>>, %arg25: memref<1x8x32xf32, #tpu.memory_space<vmem>>) attributes {dimension_semantics = [#tpu.dimension_semantics<parallel>], iteration_bounds = array<i64: 2>, scalar_prefetch = 0 : i64, scratch_operands = 0 : i64, tpu.core_type = #tpu.core_type<tc>, window_params = [{transform_indices = @transform_0, window_bounds = array<i64: 1, 8, 32>}, {transform_indices = @transform_1, window_bounds = array<i64: 1, 8, 32>}, {transform_indices = @transform_2, window_bounds = array<i64: 1, 1, 8>}, {transform_indices = @transform_3, window_bounds = array<i64: 1, 1, 8>}, {pipeline_mode = #tpu.pipeline_mode<synchronous>, transform_indices = @transform_4, window_bounds = array<i64: 32, 96>}, {pipeline_mode = #tpu.pipeline_mode<synchronous>, transform_indices = @transform_5, window_bounds = array<i64: 1, 1, 96>}, {pipeline_mode = #tpu.pipeline_mode<synchronous>, transform_indices = @transform_6, window_bounds = array<i64: 32, 32>}, {pipeline_mode = #tpu.pipeline_mode<synchronous>, transform_indices = @transform_7, window_bounds = array<i64: 1, 1, 32>}, {pipeline_mode = #tpu.pipeline_mode<synchronous>, transform_indices = @transform_8, window_bounds = array<i64: 1, 1, 32>}, {pipeline_mode = #tpu.pipeline_mode<synchronous>, transform_indices = @transform_9, window_bounds = array<i64: 1, 1, 32>}, {pipeline_mode = #tpu.pipeline_mode<synchronous>, transform_indices = @transform_10, window_bounds = array<i64: 32, 32>}, {pipeline_mode = #tpu.pipeline_mode<synchronous>, transform_indices = @transform_11, window_bounds = array<i64: 1, 1, 32>}, {pipeline_mode = #tpu.pipeline_mode<synchronous>, transform_indices = @transform_12, window_bounds = array<i64: 32, 64>}, {pipeline_mode = #tpu.pipeline_mode<synchronous>, transform_indices = @transform_13, window_bounds = array<i64: 1, 1, 64>}, {pipeline_mode = #tpu.pipeline_mode<synchronous>, transform_indices = @transform_14, window_bounds = array<i64: 32, 32>}, {pipeline_mode = #tpu.pipeline_mode<synchronous>, transform_indices = @transform_15, window_bounds = array<i64: 1, 1, 32>}, {pipeline_mode = #tpu.pipeline_mode<synchronous>, transform_indices = @transform_16, window_bounds = array<i64: 1, 1, 32>}, {pipeline_mode = #tpu.pipeline_mode<synchronous>, transform_indices = @transform_17, window_bounds = array<i64: 1, 1, 32>}, {pipeline_mode = #tpu.pipeline_mode<synchronous>, transform_indices = @transform_18, window_bounds = array<i64: 32, 64>}, {pipeline_mode = #tpu.pipeline_mode<synchronous>, transform_indices = @transform_19, window_bounds = array<i64: 1, 1, 64>}, {pipeline_mode = #tpu.pipeline_mode<synchronous>, transform_indices = @transform_20, window_bounds = array<i64: 64, 32>}, {pipeline_mode = #tpu.pipeline_mode<synchronous>, transform_indices = @transform_21, window_bounds = array<i64: 1, 1, 32>}, {pipeline_mode = #tpu.pipeline_mode<synchronous>, transform_indices = @transform_22, window_bounds = array<i64: 1, 1, 32>}, {pipeline_mode = #tpu.pipeline_mode<synchronous>, transform_indices = @transform_23, window_bounds = array<i64: 1, 1, 32>}, {transform_indices = @transform_24, window_bounds = array<i64: 1, 8, 32>}]} {
    %c0 = arith.constant 0 : index
    %c0_0 = arith.constant 0 : index
    %c0_1 = arith.constant 0 : index
    %0 = vector.load %arg1[%c0, %c0_0, %c0_1] : memref<1x8x32xf32, #tpu.memory_space<vmem>>, vector<1x8x32xf32>
    %1 = tpu.iota {dimensions = array<i32: 1>} : vector<1x8x8xi32>
    %2 = tpu.iota {dimensions = array<i32: 2>} : vector<1x8x8xi32>
    %3 = arith.cmpi sge, %1, %2 : vector<1x8x8xi32>
    %cst = arith.constant 0.000000e+00 : f32
    %cst_2 = arith.constant -1.000000e+09 : f32
    %4 = vector.broadcast %cst : f32 to vector<1x8x8xf32>
    %5 = vector.broadcast %cst_2 : f32 to vector<1x8x8xf32>
    %6 = arith.select %3, %4, %5 : vector<1x8x8xi1>, vector<1x8x8xf32>
    %c0_3 = arith.constant 0 : index
    %c0_4 = arith.constant 0 : index
    %c0_5 = arith.constant 0 : index
    %7 = vector.load %arg3[%c0_3, %c0_4, %c0_5] : memref<1x1x8xf32, #tpu.memory_space<vmem>>, vector<1x1x8xf32>
    %8 = vector.broadcast %7 : vector<1x1x8xf32> to vector<1x8x8xf32>
    %9 = arith.addf %6, %8 : vector<1x8x8xf32>
    %c0_6 = arith.constant 0 : index
    %c0_7 = arith.constant 0 : index
    %10 = vector.load %arg5[%c0_6, %c0_7] : memref<32x96xbf16, #tpu.memory_space<vmem>>, vector<32x96xbf16>
    %c0_8 = arith.constant 0 : index
    %c0_9 = arith.constant 0 : index
    %c0_10 = arith.constant 0 : index
    %11 = vector.load %arg6[%c0_8, %c0_9, %c0_10] : memref<1x1x96xf32, #tpu.memory_space<vmem>>, vector<1x1x96xf32>
    %12 = arith.truncf %0 : vector<1x8x32xf32> to vector<1x8x32xbf16>
    "tpu.trace_start"() <{level = 10 : i32, message = "bld,de->ble"}> : () -> ()
    %cst_11 = arith.constant dense<0.000000e+00> : vector<1x8x96xf32>
    %13 = tpu.matmul %12, %10, %cst_11 {dimension_numbers = #tpu.dot_dimension_numbers<[2], [0], [0, 1], [1], [0, 0, 0, 1, 1, 1], [], []>} : vector<1x8x32xbf16>, vector<32x96xbf16>, vector<1x8x96xf32> -> vector<1x8x96xf32>
    "tpu.trace_stop"() : () -> ()
    %14 = vector.broadcast %11 : vector<1x1x96xf32> to vector<1x8x96xf32>
    %15 = arith.addf %13, %14 : vector<1x8x96xf32>
    %16 = vector.extract_strided_slice %15 {offsets = [0, 0, 0], sizes = [1, 8, 32], strides = [1, 1, 1]} : vector<1x8x96xf32> to vector<1x8x32xf32>
    %17 = vector.extract_strided_slice %15 {offsets = [0, 0, 32], sizes = [1, 8, 32], strides = [1, 1, 1]} : vector<1x8x96xf32> to vector<1x8x32xf32>
    %18 = vector.extract_strided_slice %15 {offsets = [0, 0, 64], sizes = [1, 8, 32], strides = [1, 1, 1]} : vector<1x8x96xf32> to vector<1x8x32xf32>
    %c0_12 = arith.constant 0 : index
    %c0_13 = arith.constant 0 : index
    %19 = vector.load %arg7[%c0_12, %c0_13] : memref<32x32xbf16, #tpu.memory_space<vmem>>, vector<32x32xbf16>
    %c0_14 = arith.constant 0 : index
    %c0_15 = arith.constant 0 : index
    %c0_16 = arith.constant 0 : index
    %20 = vector.load %arg8[%c0_14, %c0_15, %c0_16] : memref<1x1x32xf32, #tpu.memory_space<vmem>>, vector<1x1x32xf32>
    %21 = vector.extract_strided_slice %16 {offsets = [0, 0, 0], sizes = [1, 8, 16], strides = [1, 1, 1]} : vector<1x8x32xf32> to vector<1x8x16xf32>
    %22 = arith.truncf %21 : vector<1x8x16xf32> to vector<1x8x16xbf16>
    %23 = vector.extract_strided_slice %17 {offsets = [0, 0, 0], sizes = [1, 8, 16], strides = [1, 1, 1]} : vector<1x8x32xf32> to vector<1x8x16xf32>
    %24 = arith.truncf %23 : vector<1x8x16xf32> to vector<1x8x16xbf16>
    %25 = vector.extract_strided_slice %18 {offsets = [0, 0, 0], sizes = [1, 8, 16], strides = [1, 1, 1]} : vector<1x8x32xf32> to vector<1x8x16xf32>
    %26 = arith.truncf %25 : vector<1x8x16xf32> to vector<1x8x16xbf16>
    "tpu.trace_start"() <{level = 10 : i32, message = "bqd,bkd->bqk"}> : () -> ()
    %cst_17 = arith.constant dense<0.000000e+00> : vector<1x8x8xf32>
    %27 = tpu.matmul %22, %24, %cst_17 {dimension_numbers = #tpu.dot_dimension_numbers<[2], [2], [1], [1], [0, 0, 0, 1, 1, 1], [0], [0]>} : vector<1x8x16xbf16>, vector<1x8x16xbf16>, vector<1x8x8xf32> -> vector<1x8x8xf32>
    "tpu.trace_stop"() : () -> ()
    %cst_18 = arith.constant 2.500000e-01 : f32
    %28 = vector.broadcast %cst_18 : f32 to vector<1x8x8xf32>
    %29 = arith.mulf %27, %28 : vector<1x8x8xf32>
    %30 = arith.addf %29, %9 : vector<1x8x8xf32>
    %cst_19 = arith.constant dense<0xFF800000> : vector<1x8xf32>
    %31 = vector.multi_reduction <maximumf>, %30, %cst_19 [2] : vector<1x8x8xf32> to vector<1x8xf32>
    %32 = vector.shape_cast %31 : vector<1x8xf32> to vector<1x8x1xf32>
    %33 = vector.broadcast %32 : vector<1x8x1xf32> to vector<1x8x8xf32>
    %34 = arith.subf %30, %33 : vector<1x8x8xf32>
    %35 = math.exp %34 : vector<1x8x8xf32>
    %cst_20 = arith.constant dense<0.000000e+00> : vector<1x8xf32>
    %36 = vector.multi_reduction <add>, %35, %cst_20 [2] : vector<1x8x8xf32> to vector<1x8xf32>
    %37 = vector.shape_cast %36 : vector<1x8xf32> to vector<1x8x1xf32>
    %38 = vector.broadcast %37 : vector<1x8x1xf32> to vector<1x8x8xf32>
    %39 = arith.divf %35, %38 : vector<1x8x8xf32>
    %40 = arith.truncf %39 : vector<1x8x8xf32> to vector<1x8x8xbf16>
    "tpu.trace_start"() <{level = 10 : i32, message = "bqk,bkd->bqd"}> : () -> ()
    %cst_21 = arith.constant dense<0.000000e+00> : vector<1x8x16xf32>
    %41 = tpu.matmul %40, %26, %cst_21 {dimension_numbers = #tpu.dot_dimension_numbers<[2], [1], [1], [2], [0, 0, 0, 1, 1, 2], [0], [0]>} : vector<1x8x8xbf16>, vector<1x8x16xbf16>, vector<1x8x16xf32> -> vector<1x8x16xf32>
    "tpu.trace_stop"() : () -> ()
    %42 = vector.extract_strided_slice %16 {offsets = [0, 0, 16], sizes = [1, 8, 16], strides = [1, 1, 1]} : vector<1x8x32xf32> to vector<1x8x16xf32>
    %43 = arith.truncf %42 : vector<1x8x16xf32> to vector<1x8x16xbf16>
    %44 = vector.extract_strided_slice %17 {offsets = [0, 0, 16], sizes = [1, 8, 16], strides = [1, 1, 1]} : vector<1x8x32xf32> to vector<1x8x16xf32>
    %45 = arith.truncf %44 : vector<1x8x16xf32> to vector<1x8x16xbf16>
    %46 = vector.extract_strided_slice %18 {offsets = [0, 0, 16], sizes = [1, 8, 16], strides = [1, 1, 1]} : vector<1x8x32xf32> to vector<1x8x16xf32>
    %47 = arith.truncf %46 : vector<1x8x16xf32> to vector<1x8x16xbf16>
    "tpu.trace_start"() <{level = 10 : i32, message = "bqd,bkd->bqk"}> : () -> ()
    %cst_22 = arith.constant dense<0.000000e+00> : vector<1x8x8xf32>
    %48 = tpu.matmul %43, %45, %cst_22 {dimension_numbers = #tpu.dot_dimension_numbers<[2], [2], [1], [1], [0, 0, 0, 1, 1, 1], [0], [0]>} : vector<1x8x16xbf16>, vector<1x8x16xbf16>, vector<1x8x8xf32> -> vector<1x8x8xf32>
    "tpu.trace_stop"() : () -> ()
    %cst_23 = arith.constant 2.500000e-01 : f32
    %49 = vector.broadcast %cst_23 : f32 to vector<1x8x8xf32>
    %50 = arith.mulf %48, %49 : vector<1x8x8xf32>
    %51 = arith.addf %50, %9 : vector<1x8x8xf32>
    %cst_24 = arith.constant dense<0xFF800000> : vector<1x8xf32>
    %52 = vector.multi_reduction <maximumf>, %51, %cst_24 [2] : vector<1x8x8xf32> to vector<1x8xf32>
    %53 = vector.shape_cast %52 : vector<1x8xf32> to vector<1x8x1xf32>
    %54 = vector.broadcast %53 : vector<1x8x1xf32> to vector<1x8x8xf32>
    %55 = arith.subf %51, %54 : vector<1x8x8xf32>
    %56 = math.exp %55 : vector<1x8x8xf32>
    %cst_25 = arith.constant dense<0.000000e+00> : vector<1x8xf32>
    %57 = vector.multi_reduction <add>, %56, %cst_25 [2] : vector<1x8x8xf32> to vector<1x8xf32>
    %58 = vector.shape_cast %57 : vector<1x8xf32> to vector<1x8x1xf32>
    %59 = vector.broadcast %58 : vector<1x8x1xf32> to vector<1x8x8xf32>
    %60 = arith.divf %56, %59 : vector<1x8x8xf32>
    %61 = arith.truncf %60 : vector<1x8x8xf32> to vector<1x8x8xbf16>
    "tpu.trace_start"() <{level = 10 : i32, message = "bqk,bkd->bqd"}> : () -> ()
    %cst_26 = arith.constant dense<0.000000e+00> : vector<1x8x16xf32>
    %62 = tpu.matmul %61, %47, %cst_26 {dimension_numbers = #tpu.dot_dimension_numbers<[2], [1], [1], [2], [0, 0, 0, 1, 1, 2], [0], [0]>} : vector<1x8x8xbf16>, vector<1x8x16xbf16>, vector<1x8x16xf32> -> vector<1x8x16xf32>
    "tpu.trace_stop"() : () -> ()
    %63 = tpu.concatenate %41, %62 in 2 : vector<1x8x16xf32>, vector<1x8x16xf32> -> vector<1x8x32xf32>
    %64 = arith.truncf %63 : vector<1x8x32xf32> to vector<1x8x32xbf16>
    "tpu.trace_start"() <{level = 10 : i32, message = "bqd,de->bqe"}> : () -> ()
    %cst_27 = arith.constant dense<0.000000e+00> : vector<1x8x32xf32>
    %65 = tpu.matmul %64, %19, %cst_27 {dimension_numbers = #tpu.dot_dimension_numbers<[2], [0], [0, 1], [1], [0, 0, 0, 1, 1, 1], [], []>} : vector<1x8x32xbf16>, vector<32x32xbf16>, vector<1x8x32xf32> -> vector<1x8x32xf32>
    "tpu.trace_stop"() : () -> ()
    %66 = vector.broadcast %20 : vector<1x1x32xf32> to vector<1x8x32xf32>
    %67 = arith.addf %65, %66 : vector<1x8x32xf32>
    %68 = arith.addf %0, %67 : vector<1x8x32xf32>
    %c0_28 = arith.constant 0 : index
    %c0_29 = arith.constant 0 : index
    %c0_30 = arith.constant 0 : index
    %69 = vector.load %arg9[%c0_28, %c0_29, %c0_30] : memref<1x1x32xf32, #tpu.memory_space<vmem>>, vector<1x1x32xf32>
    %c0_31 = arith.constant 0 : index
    %c0_32 = arith.constant 0 : index
    %c0_33 = arith.constant 0 : index
    %70 = vector.load %arg10[%c0_31, %c0_32, %c0_33] : memref<1x1x32xf32, #tpu.memory_space<vmem>>, vector<1x1x32xf32>
    %cst_34 = arith.constant dense<0.000000e+00> : vector<1x8xf32>
    %71 = vector.multi_reduction <add>, %68, %cst_34 [2] : vector<1x8x32xf32> to vector<1x8xf32>
    %72 = vector.shape_cast %71 : vector<1x8xf32> to vector<1x8x1xf32>
    %cst_35 = arith.constant 3.200000e+01 : f32
    %73 = vector.broadcast %cst_35 : f32 to vector<1x8x1xf32>
    %74 = arith.divf %72, %73 : vector<1x8x1xf32>
    %75 = vector.broadcast %74 : vector<1x8x1xf32> to vector<1x8x32xf32>
    %76 = arith.subf %68, %75 : vector<1x8x32xf32>
    %77 = arith.mulf %76, %76 : vector<1x8x32xf32>
    %cst_36 = arith.constant dense<0.000000e+00> : vector<1x8xf32>
    %78 = vector.multi_reduction <add>, %77, %cst_36 [2] : vector<1x8x32xf32> to vector<1x8xf32>
    %79 = vector.shape_cast %78 : vector<1x8xf32> to vector<1x8x1xf32>
    %cst_37 = arith.constant 3.200000e+01 : f32
    %80 = vector.broadcast %cst_37 : f32 to vector<1x8x1xf32>
    %81 = arith.divf %79, %80 : vector<1x8x1xf32>
    %82 = vector.broadcast %74 : vector<1x8x1xf32> to vector<1x8x32xf32>
    %83 = arith.subf %68, %82 : vector<1x8x32xf32>
    %cst_38 = arith.constant 9.99999974E-6 : f32
    %84 = vector.broadcast %cst_38 : f32 to vector<1x8x1xf32>
    %85 = arith.addf %81, %84 : vector<1x8x1xf32>
    %86 = math.rsqrt %85 : vector<1x8x1xf32>
    %87 = vector.broadcast %86 : vector<1x8x1xf32> to vector<1x8x32xf32>
    %88 = arith.mulf %83, %87 : vector<1x8x32xf32>
    %89 = vector.broadcast %69 : vector<1x1x32xf32> to vector<1x8x32xf32>
    %90 = arith.mulf %88, %89 : vector<1x8x32xf32>
    %91 = vector.broadcast %70 : vector<1x1x32xf32> to vector<1x8x32xf32>
    %92 = arith.addf %90, %91 : vector<1x8x32xf32>
    %c0_39 = arith.constant 0 : index
    %c0_40 = arith.constant 0 : index
    %93 = vector.load %arg11[%c0_39, %c0_40] : memref<32x32xbf16, #tpu.memory_space<vmem>>, vector<32x32xbf16>
    %c0_41 = arith.constant 0 : index
    %c0_42 = arith.constant 0 : index
    %c0_43 = arith.constant 0 : index
    %94 = vector.load %arg12[%c0_41, %c0_42, %c0_43] : memref<1x1x32xf32, #tpu.memory_space<vmem>>, vector<1x1x32xf32>
    %95 = arith.truncf %92 : vector<1x8x32xf32> to vector<1x8x32xbf16>
    "tpu.trace_start"() <{level = 10 : i32, message = "bld,de->ble"}> : () -> ()
    %cst_44 = arith.constant dense<0.000000e+00> : vector<1x8x32xf32>
    %96 = tpu.matmul %95, %93, %cst_44 {dimension_numbers = #tpu.dot_dimension_numbers<[2], [0], [0, 1], [1], [0, 0, 0, 1, 1, 1], [], []>} : vector<1x8x32xbf16>, vector<32x32xbf16>, vector<1x8x32xf32> -> vector<1x8x32xf32>
    "tpu.trace_stop"() : () -> ()
    %97 = vector.broadcast %94 : vector<1x1x32xf32> to vector<1x8x32xf32>
    %98 = arith.addf %96, %97 : vector<1x8x32xf32>
    %c0_45 = arith.constant 0 : index
    %c0_46 = arith.constant 0 : index
    %c0_47 = arith.constant 0 : index
    %99 = vector.load %arg2[%c0_45, %c0_46, %c0_47] : memref<1x8x32xf32, #tpu.memory_space<vmem>>, vector<1x8x32xf32>
    %c0_48 = arith.constant 0 : index
    %c0_49 = arith.constant 0 : index
    %100 = vector.load %arg13[%c0_48, %c0_49] : memref<32x64xbf16, #tpu.memory_space<vmem>>, vector<32x64xbf16>
    %c0_50 = arith.constant 0 : index
    %c0_51 = arith.constant 0 : index
    %c0_52 = arith.constant 0 : index
    %101 = vector.load %arg14[%c0_50, %c0_51, %c0_52] : memref<1x1x64xf32, #tpu.memory_space<vmem>>, vector<1x1x64xf32>
    %102 = arith.truncf %99 : vector<1x8x32xf32> to vector<1x8x32xbf16>
    "tpu.trace_start"() <{level = 10 : i32, message = "bld,de->ble"}> : () -> ()
    %cst_53 = arith.constant dense<0.000000e+00> : vector<1x8x64xf32>
    %103 = tpu.matmul %102, %100, %cst_53 {dimension_numbers = #tpu.dot_dimension_numbers<[2], [0], [0, 1], [1], [0, 0, 0, 1, 1, 1], [], []>} : vector<1x8x32xbf16>, vector<32x64xbf16>, vector<1x8x64xf32> -> vector<1x8x64xf32>
    "tpu.trace_stop"() : () -> ()
    %104 = vector.broadcast %101 : vector<1x1x64xf32> to vector<1x8x64xf32>
    %105 = arith.addf %103, %104 : vector<1x8x64xf32>
    %106 = vector.extract_strided_slice %105 {offsets = [0, 0, 0], sizes = [1, 8, 32], strides = [1, 1, 1]} : vector<1x8x64xf32> to vector<1x8x32xf32>
    %107 = vector.extract_strided_slice %105 {offsets = [0, 0, 32], sizes = [1, 8, 32], strides = [1, 1, 1]} : vector<1x8x64xf32> to vector<1x8x32xf32>
    %c0_54 = arith.constant 0 : index
    %c0_55 = arith.constant 0 : index
    %c0_56 = arith.constant 0 : index
    %108 = vector.load %arg4[%c0_54, %c0_55, %c0_56] : memref<1x1x8xf32, #tpu.memory_space<vmem>>, vector<1x1x8xf32>
    %c0_57 = arith.constant 0 : index
    %c0_58 = arith.constant 0 : index
    %109 = vector.load %arg15[%c0_57, %c0_58] : memref<32x32xbf16, #tpu.memory_space<vmem>>, vector<32x32xbf16>
    %c0_59 = arith.constant 0 : index
    %c0_60 = arith.constant 0 : index
    %c0_61 = arith.constant 0 : index
    %110 = vector.load %arg16[%c0_59, %c0_60, %c0_61] : memref<1x1x32xf32, #tpu.memory_space<vmem>>, vector<1x1x32xf32>
    %111 = vector.extract_strided_slice %98 {offsets = [0, 0, 0], sizes = [1, 8, 16], strides = [1, 1, 1]} : vector<1x8x32xf32> to vector<1x8x16xf32>
    %112 = arith.truncf %111 : vector<1x8x16xf32> to vector<1x8x16xbf16>
    %113 = vector.extract_strided_slice %106 {offsets = [0, 0, 0], sizes = [1, 8, 16], strides = [1, 1, 1]} : vector<1x8x32xf32> to vector<1x8x16xf32>
    %114 = arith.truncf %113 : vector<1x8x16xf32> to vector<1x8x16xbf16>
    %115 = vector.extract_strided_slice %107 {offsets = [0, 0, 0], sizes = [1, 8, 16], strides = [1, 1, 1]} : vector<1x8x32xf32> to vector<1x8x16xf32>
    %116 = arith.truncf %115 : vector<1x8x16xf32> to vector<1x8x16xbf16>
    "tpu.trace_start"() <{level = 10 : i32, message = "bqd,bkd->bqk"}> : () -> ()
    %cst_62 = arith.constant dense<0.000000e+00> : vector<1x8x8xf32>
    %117 = tpu.matmul %112, %114, %cst_62 {dimension_numbers = #tpu.dot_dimension_numbers<[2], [2], [1], [1], [0, 0, 0, 1, 1, 1], [0], [0]>} : vector<1x8x16xbf16>, vector<1x8x16xbf16>, vector<1x8x8xf32> -> vector<1x8x8xf32>
    "tpu.trace_stop"() : () -> ()
    %cst_63 = arith.constant 2.500000e-01 : f32
    %118 = vector.broadcast %cst_63 : f32 to vector<1x8x8xf32>
    %119 = arith.mulf %117, %118 : vector<1x8x8xf32>
    %120 = vector.broadcast %108 : vector<1x1x8xf32> to vector<1x8x8xf32>
    %121 = arith.addf %119, %120 : vector<1x8x8xf32>
    %cst_64 = arith.constant dense<0xFF800000> : vector<1x8xf32>
    %122 = vector.multi_reduction <maximumf>, %121, %cst_64 [2] : vector<1x8x8xf32> to vector<1x8xf32>
    %123 = vector.shape_cast %122 : vector<1x8xf32> to vector<1x8x1xf32>
    %124 = vector.broadcast %123 : vector<1x8x1xf32> to vector<1x8x8xf32>
    %125 = arith.subf %121, %124 : vector<1x8x8xf32>
    %126 = math.exp %125 : vector<1x8x8xf32>
    %cst_65 = arith.constant dense<0.000000e+00> : vector<1x8xf32>
    %127 = vector.multi_reduction <add>, %126, %cst_65 [2] : vector<1x8x8xf32> to vector<1x8xf32>
    %128 = vector.shape_cast %127 : vector<1x8xf32> to vector<1x8x1xf32>
    %129 = vector.broadcast %128 : vector<1x8x1xf32> to vector<1x8x8xf32>
    %130 = arith.divf %126, %129 : vector<1x8x8xf32>
    %131 = arith.truncf %130 : vector<1x8x8xf32> to vector<1x8x8xbf16>
    "tpu.trace_start"() <{level = 10 : i32, message = "bqk,bkd->bqd"}> : () -> ()
    %cst_66 = arith.constant dense<0.000000e+00> : vector<1x8x16xf32>
    %132 = tpu.matmul %131, %116, %cst_66 {dimension_numbers = #tpu.dot_dimension_numbers<[2], [1], [1], [2], [0, 0, 0, 1, 1, 2], [0], [0]>} : vector<1x8x8xbf16>, vector<1x8x16xbf16>, vector<1x8x16xf32> -> vector<1x8x16xf32>
    "tpu.trace_stop"() : () -> ()
    %133 = vector.extract_strided_slice %98 {offsets = [0, 0, 16], sizes = [1, 8, 16], strides = [1, 1, 1]} : vector<1x8x32xf32> to vector<1x8x16xf32>
    %134 = arith.truncf %133 : vector<1x8x16xf32> to vector<1x8x16xbf16>
    %135 = vector.extract_strided_slice %106 {offsets = [0, 0, 16], sizes = [1, 8, 16], strides = [1, 1, 1]} : vector<1x8x32xf32> to vector<1x8x16xf32>
    %136 = arith.truncf %135 : vector<1x8x16xf32> to vector<1x8x16xbf16>
    %137 = vector.extract_strided_slice %107 {offsets = [0, 0, 16], sizes = [1, 8, 16], strides = [1, 1, 1]} : vector<1x8x32xf32> to vector<1x8x16xf32>
    %138 = arith.truncf %137 : vector<1x8x16xf32> to vector<1x8x16xbf16>
    "tpu.trace_start"() <{level = 10 : i32, message = "bqd,bkd->bqk"}> : () -> ()
    %cst_67 = arith.constant dense<0.000000e+00> : vector<1x8x8xf32>
    %139 = tpu.matmul %134, %136, %cst_67 {dimension_numbers = #tpu.dot_dimension_numbers<[2], [2], [1], [1], [0, 0, 0, 1, 1, 1], [0], [0]>} : vector<1x8x16xbf16>, vector<1x8x16xbf16>, vector<1x8x8xf32> -> vector<1x8x8xf32>
    "tpu.trace_stop"() : () -> ()
    %cst_68 = arith.constant 2.500000e-01 : f32
    %140 = vector.broadcast %cst_68 : f32 to vector<1x8x8xf32>
    %141 = arith.mulf %139, %140 : vector<1x8x8xf32>
    %142 = vector.broadcast %108 : vector<1x1x8xf32> to vector<1x8x8xf32>
    %143 = arith.addf %141, %142 : vector<1x8x8xf32>
    %cst_69 = arith.constant dense<0xFF800000> : vector<1x8xf32>
    %144 = vector.multi_reduction <maximumf>, %143, %cst_69 [2] : vector<1x8x8xf32> to vector<1x8xf32>
    %145 = vector.shape_cast %144 : vector<1x8xf32> to vector<1x8x1xf32>
    %146 = vector.broadcast %145 : vector<1x8x1xf32> to vector<1x8x8xf32>
    %147 = arith.subf %143, %146 : vector<1x8x8xf32>
    %148 = math.exp %147 : vector<1x8x8xf32>
    %cst_70 = arith.constant dense<0.000000e+00> : vector<1x8xf32>
    %149 = vector.multi_reduction <add>, %148, %cst_70 [2] : vector<1x8x8xf32> to vector<1x8xf32>
    %150 = vector.shape_cast %149 : vector<1x8xf32> to vector<1x8x1xf32>
    %151 = vector.broadcast %150 : vector<1x8x1xf32> to vector<1x8x8xf32>
    %152 = arith.divf %148, %151 : vector<1x8x8xf32>
    %153 = arith.truncf %152 : vector<1x8x8xf32> to vector<1x8x8xbf16>
    "tpu.trace_start"() <{level = 10 : i32, message = "bqk,bkd->bqd"}> : () -> ()
    %cst_71 = arith.constant dense<0.000000e+00> : vector<1x8x16xf32>
    %154 = tpu.matmul %153, %138, %cst_71 {dimension_numbers = #tpu.dot_dimension_numbers<[2], [1], [1], [2], [0, 0, 0, 1, 1, 2], [0], [0]>} : vector<1x8x8xbf16>, vector<1x8x16xbf16>, vector<1x8x16xf32> -> vector<1x8x16xf32>
    "tpu.trace_stop"() : () -> ()
    %155 = tpu.concatenate %132, %154 in 2 : vector<1x8x16xf32>, vector<1x8x16xf32> -> vector<1x8x32xf32>
    %156 = arith.truncf %155 : vector<1x8x32xf32> to vector<1x8x32xbf16>
    "tpu.trace_start"() <{level = 10 : i32, message = "bqd,de->bqe"}> : () -> ()
    %cst_72 = arith.constant dense<0.000000e+00> : vector<1x8x32xf32>
    %157 = tpu.matmul %156, %109, %cst_72 {dimension_numbers = #tpu.dot_dimension_numbers<[2], [0], [0, 1], [1], [0, 0, 0, 1, 1, 1], [], []>} : vector<1x8x32xbf16>, vector<32x32xbf16>, vector<1x8x32xf32> -> vector<1x8x32xf32>
    "tpu.trace_stop"() : () -> ()
    %158 = vector.broadcast %110 : vector<1x1x32xf32> to vector<1x8x32xf32>
    %159 = arith.addf %157, %158 : vector<1x8x32xf32>
    %160 = arith.addf %92, %159 : vector<1x8x32xf32>
    %c0_73 = arith.constant 0 : index
    %c0_74 = arith.constant 0 : index
    %c0_75 = arith.constant 0 : index
    %161 = vector.load %arg17[%c0_73, %c0_74, %c0_75] : memref<1x1x32xf32, #tpu.memory_space<vmem>>, vector<1x1x32xf32>
    %c0_76 = arith.constant 0 : index
    %c0_77 = arith.constant 0 : index
    %c0_78 = arith.constant 0 : index
    %162 = vector.load %arg18[%c0_76, %c0_77, %c0_78] : memref<1x1x32xf32, #tpu.memory_space<vmem>>, vector<1x1x32xf32>
    %cst_79 = arith.constant dense<0.000000e+00> : vector<1x8xf32>
    %163 = vector.multi_reduction <add>, %160, %cst_79 [2] : vector<1x8x32xf32> to vector<1x8xf32>
    %164 = vector.shape_cast %163 : vector<1x8xf32> to vector<1x8x1xf32>
    %cst_80 = arith.constant 3.200000e+01 : f32
    %165 = vector.broadcast %cst_80 : f32 to vector<1x8x1xf32>
    %166 = arith.divf %164, %165 : vector<1x8x1xf32>
    %167 = vector.broadcast %166 : vector<1x8x1xf32> to vector<1x8x32xf32>
    %168 = arith.subf %160, %167 : vector<1x8x32xf32>
    %169 = arith.mulf %168, %168 : vector<1x8x32xf32>
    %cst_81 = arith.constant dense<0.000000e+00> : vector<1x8xf32>
    %170 = vector.multi_reduction <add>, %169, %cst_81 [2] : vector<1x8x32xf32> to vector<1x8xf32>
    %171 = vector.shape_cast %170 : vector<1x8xf32> to vector<1x8x1xf32>
    %cst_82 = arith.constant 3.200000e+01 : f32
    %172 = vector.broadcast %cst_82 : f32 to vector<1x8x1xf32>
    %173 = arith.divf %171, %172 : vector<1x8x1xf32>
    %174 = vector.broadcast %166 : vector<1x8x1xf32> to vector<1x8x32xf32>
    %175 = arith.subf %160, %174 : vector<1x8x32xf32>
    %cst_83 = arith.constant 9.99999974E-6 : f32
    %176 = vector.broadcast %cst_83 : f32 to vector<1x8x1xf32>
    %177 = arith.addf %173, %176 : vector<1x8x1xf32>
    %178 = math.rsqrt %177 : vector<1x8x1xf32>
    %179 = vector.broadcast %178 : vector<1x8x1xf32> to vector<1x8x32xf32>
    %180 = arith.mulf %175, %179 : vector<1x8x32xf32>
    %181 = vector.broadcast %161 : vector<1x1x32xf32> to vector<1x8x32xf32>
    %182 = arith.mulf %180, %181 : vector<1x8x32xf32>
    %183 = vector.broadcast %162 : vector<1x1x32xf32> to vector<1x8x32xf32>
    %184 = arith.addf %182, %183 : vector<1x8x32xf32>
    %c0_84 = arith.constant 0 : index
    %c0_85 = arith.constant 0 : index
    %185 = vector.load %arg19[%c0_84, %c0_85] : memref<32x64xbf16, #tpu.memory_space<vmem>>, vector<32x64xbf16>
    %c0_86 = arith.constant 0 : index
    %c0_87 = arith.constant 0 : index
    %c0_88 = arith.constant 0 : index
    %186 = vector.load %arg20[%c0_86, %c0_87, %c0_88] : memref<1x1x64xf32, #tpu.memory_space<vmem>>, vector<1x1x64xf32>
    %187 = arith.truncf %184 : vector<1x8x32xf32> to vector<1x8x32xbf16>
    "tpu.trace_start"() <{level = 10 : i32, message = "bld,de->ble"}> : () -> ()
    %cst_89 = arith.constant dense<0.000000e+00> : vector<1x8x64xf32>
    %188 = tpu.matmul %187, %185, %cst_89 {dimension_numbers = #tpu.dot_dimension_numbers<[2], [0], [0, 1], [1], [0, 0, 0, 1, 1, 1], [], []>} : vector<1x8x32xbf16>, vector<32x64xbf16>, vector<1x8x64xf32> -> vector<1x8x64xf32>
    "tpu.trace_stop"() : () -> ()
    %189 = vector.broadcast %186 : vector<1x1x64xf32> to vector<1x8x64xf32>
    %190 = arith.addf %188, %189 : vector<1x8x64xf32>
    %cst_90 = arith.constant 5.000000e-01 : f32
    %191 = vector.broadcast %cst_90 : f32 to vector<1x8x64xf32>
    %192 = arith.mulf %191, %190 : vector<1x8x64xf32>
    %cst_91 = arith.constant 4.471500e-02 : f32
    %193 = vector.broadcast %cst_91 : f32 to vector<1x8x64xf32>
    %194 = arith.mulf %193, %190 : vector<1x8x64xf32>
    %195 = arith.mulf %194, %190 : vector<1x8x64xf32>
    %196 = arith.mulf %195, %190 : vector<1x8x64xf32>
    %197 = arith.addf %190, %196 : vector<1x8x64xf32>
    %cst_92 = arith.constant 0.797884583 : f32
    %198 = vector.broadcast %cst_92 : f32 to vector<1x8x64xf32>
    %199 = arith.mulf %198, %197 : vector<1x8x64xf32>
    %200 = math.tanh %199 : vector<1x8x64xf32>
    %cst_93 = arith.constant 1.000000e+00 : f32
    %201 = vector.broadcast %cst_93 : f32 to vector<1x8x64xf32>
    %202 = arith.addf %201, %200 : vector<1x8x64xf32>
    %203 = arith.mulf %192, %202 : vector<1x8x64xf32>
    %c0_94 = arith.constant 0 : index
    %c0_95 = arith.constant 0 : index
    %204 = vector.load %arg21[%c0_94, %c0_95] : memref<64x32xbf16, #tpu.memory_space<vmem>>, vector<64x32xbf16>
    %c0_96 = arith.constant 0 : index
    %c0_97 = arith.constant 0 : index
    %c0_98 = arith.constant 0 : index
    %205 = vector.load %arg22[%c0_96, %c0_97, %c0_98] : memref<1x1x32xf32, #tpu.memory_space<vmem>>, vector<1x1x32xf32>
    %206 = arith.truncf %203 : vector<1x8x64xf32> to vector<1x8x64xbf16>
    "tpu.trace_start"() <{level = 10 : i32, message = "bld,de->ble"}> : () -> ()
    %cst_99 = arith.constant dense<0.000000e+00> : vector<1x8x32xf32>
    %207 = tpu.matmul %206, %204, %cst_99 {dimension_numbers = #tpu.dot_dimension_numbers<[2], [0], [0, 1], [1], [0, 0, 0, 1, 1, 1], [], []>} : vector<1x8x64xbf16>, vector<64x32xbf16>, vector<1x8x32xf32> -> vector<1x8x32xf32>
    "tpu.trace_stop"() : () -> ()
    %208 = vector.broadcast %205 : vector<1x1x32xf32> to vector<1x8x32xf32>
    %209 = arith.addf %207, %208 : vector<1x8x32xf32>
    %210 = arith.addf %184, %209 : vector<1x8x32xf32>
    %c0_100 = arith.constant 0 : index
    %c0_101 = arith.constant 0 : index
    %c0_102 = arith.constant 0 : index
    %211 = vector.load %arg23[%c0_100, %c0_101, %c0_102] : memref<1x1x32xf32, #tpu.memory_space<vmem>>, vector<1x1x32xf32>
    %c0_103 = arith.constant 0 : index
    %c0_104 = arith.constant 0 : index
    %c0_105 = arith.constant 0 : index
    %212 = vector.load %arg24[%c0_103, %c0_104, %c0_105] : memref<1x1x32xf32, #tpu.memory_space<vmem>>, vector<1x1x32xf32>
    %cst_106 = arith.constant dense<0.000000e+00> : vector<1x8xf32>
    %213 = vector.multi_reduction <add>, %210, %cst_106 [2] : vector<1x8x32xf32> to vector<1x8xf32>
    %214 = vector.shape_cast %213 : vector<1x8xf32> to vector<1x8x1xf32>
    %cst_107 = arith.constant 3.200000e+01 : f32
    %215 = vector.broadcast %cst_107 : f32 to vector<1x8x1xf32>
    %216 = arith.divf %214, %215 : vector<1x8x1xf32>
    %217 = vector.broadcast %216 : vector<1x8x1xf32> to vector<1x8x32xf32>
    %218 = arith.subf %210, %217 : vector<1x8x32xf32>
    %219 = arith.mulf %218, %218 : vector<1x8x32xf32>
    %cst_108 = arith.constant dense<0.000000e+00> : vector<1x8xf32>
    %220 = vector.multi_reduction <add>, %219, %cst_108 [2] : vector<1x8x32xf32> to vector<1x8xf32>
    %221 = vector.shape_cast %220 : vector<1x8xf32> to vector<1x8x1xf32>
    %cst_109 = arith.constant 3.200000e+01 : f32
    %222 = vector.broadcast %cst_109 : f32 to vector<1x8x1xf32>
    %223 = arith.divf %221, %222 : vector<1x8x1xf32>
    %224 = vector.broadcast %216 : vector<1x8x1xf32> to vector<1x8x32xf32>
    %225 = arith.subf %210, %224 : vector<1x8x32xf32>
    %cst_110 = arith.constant 9.99999974E-6 : f32
    %226 = vector.broadcast %cst_110 : f32 to vector<1x8x1xf32>
    %227 = arith.addf %223, %226 : vector<1x8x1xf32>
    %228 = math.rsqrt %227 : vector<1x8x1xf32>
    %229 = vector.broadcast %228 : vector<1x8x1xf32> to vector<1x8x32xf32>
    %230 = arith.mulf %225, %229 : vector<1x8x32xf32>
    %231 = vector.broadcast %211 : vector<1x1x32xf32> to vector<1x8x32xf32>
    %232 = arith.mulf %230, %231 : vector<1x8x32xf32>
    %233 = vector.broadcast %212 : vector<1x1x32xf32> to vector<1x8x32xf32>
    %234 = arith.addf %232, %233 : vector<1x8x32xf32>
    %c0_111 = arith.constant 0 : index
    %c0_112 = arith.constant 0 : index
    %c0_113 = arith.constant 0 : index
    %235 = vector.load %arg25[%c0_111, %c0_112, %c0_113] : memref<1x8x32xf32, #tpu.memory_space<vmem>>, vector<1x8x32xf32>
    tpu.vector_store %arg25[%c0_111, %c0_112, %c0_113], %234 {strides = array<i32>} : memref<1x8x32xf32, #tpu.memory_space<vmem>>, vector<1x8x32xf32>,
    return
  }
  func.func @transform_0(%arg0: i32) -> (i32, i32, i32) {
    %c0_i32 = arith.constant 0 : i32
    %c0_i32_0 = arith.constant 0 : i32
    %c0_i32_1 = arith.constant 0 : i32
    return %arg0, %c0_i32, %c0_i32_0 : i32, i32, i32
  }
  func.func @transform_1(%arg0: i32) -> (i32, i32, i32) {
    %c0_i32 = arith.constant 0 : i32
    %c0_i32_0 = arith.constant 0 : i32
    %c0_i32_1 = arith.constant 0 : i32
    return %arg0, %c0_i32, %c0_i32_0 : i32, i32, i32
  }
  func.func @transform_2(%arg0: i32) -> (i32, i32, i32) {
    %c0_i32 = arith.constant 0 : i32
    %c0_i32_0 = arith.constant 0 : i32
    %c0_i32_1 = arith.constant 0 : i32
    return %arg0, %c0_i32, %c0_i32_0 : i32, i32, i32
  }
  func.func @transform_3(%arg0: i32) -> (i32, i32, i32) {
    %c0_i32 = arith.constant 0 : i32
    %c0_i32_0 = arith.constant 0 : i32
    %c0_i32_1 = arith.constant 0 : i32
    return %arg0, %c0_i32, %c0_i32_0 : i32, i32, i32
  }
  func.func @transform_4(%arg0: i32) -> (i32, i32) {
    %c0_i32 = arith.constant 0 : i32
    %c0_i32_0 = arith.constant 0 : i32
    %c0_i32_1 = arith.constant 0 : i32
    return %c0_i32, %c0_i32_0 : i32, i32
  }
  func.func @transform_5(%arg0: i32) -> (i32, i32, i32) {
    %c0_i32 = arith.constant 0 : i32
    %c0_i32_0 = arith.constant 0 : i32
    %c0_i32_1 = arith.constant 0 : i32
    %c0_i32_2 = arith.constant 0 : i32
    return %c0_i32, %c0_i32_0, %c0_i32_1 : i32, i32, i32
  }
  func.func @transform_6(%arg0: i32) -> (i32, i32) {
    %c0_i32 = arith.constant 0 : i32
    %c0_i32_0 = arith.constant 0 : i32
    %c0_i32_1 = arith.constant 0 : i32
    return %c0_i32, %c0_i32_0 : i32, i32
  }
  func.func @transform_7(%arg0: i32) -> (i32, i32, i32) {
    %c0_i32 = arith.constant 0 : i32
    %c0_i32_0 = arith.constant 0 : i32
    %c0_i32_1 = arith.constant 0 : i32
    %c0_i32_2 = arith.constant 0 : i32
    return %c0_i32, %c0_i32_0, %c0_i32_1 : i32, i32, i32
  }
  func.func @transform_8(%arg0: i32) -> (i32, i32, i32) {
    %c0_i32 = arith.constant 0 : i32
    %c0_i32_0 = arith.constant 0 : i32
    %c0_i32_1 = arith.constant 0 : i32
    %c0_i32_2 = arith.constant 0 : i32
    return %c0_i32, %c0_i32_0, %c0_i32_1 : i32, i32, i32
  }
  func.func @transform_9(%arg0: i32) -> (i32, i32, i32) {
    %c0_i32 = arith.constant 0 : i32
    %c0_i32_0 = arith.constant 0 : i32
    %c0_i32_1 = arith.constant 0 : i32
    %c0_i32_2 = arith.constant 0 : i32
    return %c0_i32, %c0_i32_0, %c0_i32_1 : i32, i32, i32
  }
  func.func @transform_10(%arg0: i32) -> (i32, i32) {
    %c0_i32 = arith.constant 0 : i32
    %c0_i32_0 = arith.constant 0 : i32
    %c0_i32_1 = arith.constant 0 : i32
    return %c0_i32, %c0_i32_0 : i32, i32
  }
  func.func @transform_11(%arg0: i32) -> (i32, i32, i32) {
    %c0_i32 = arith.constant 0 : i32
    %c0_i32_0 = arith.constant 0 : i32
    %c0_i32_1 = arith.constant 0 : i32
    %c0_i32_2 = arith.constant 0 : i32
    return %c0_i32, %c0_i32_0, %c0_i32_1 : i32, i32, i32
  }
  func.func @transform_12(%arg0: i32) -> (i32, i32) {
    %c0_i32 = arith.constant 0 : i32
    %c0_i32_0 = arith.constant 0 : i32
    %c0_i32_1 = arith.constant 0 : i32
    return %c0_i32, %c0_i32_0 : i32, i32
  }
  func.func @transform_13(%arg0: i32) -> (i32, i32, i32) {
    %c0_i32 = arith.constant 0 : i32
    %c0_i32_0 = arith.constant 0 : i32
    %c0_i32_1 = arith.constant 0 : i32
    %c0_i32_2 = arith.constant 0 : i32
    return %c0_i32, %c0_i32_0, %c0_i32_1 : i32, i32, i32
  }
  func.func @transform_14(%arg0: i32) -> (i32, i32) {
    %c0_i32 = arith.constant 0 : i32
    %c0_i32_0 = arith.constant 0 : i32
    %c0_i32_1 = arith.constant 0 : i32
    return %c0_i32, %c0_i32_0 : i32, i32
  }
  func.func @transform_15(%arg0: i32) -> (i32, i32, i32) {
    %c0_i32 = arith.constant 0 : i32
    %c0_i32_0 = arith.constant 0 : i32
    %c0_i32_1 = arith.constant 0 : i32
    %c0_i32_2 = arith.constant 0 : i32
    return %c0_i32, %c0_i32_0, %c0_i32_1 : i32, i32, i32
  }
  func.func @transform_16(%arg0: i32) -> (i32, i32, i32) {
    %c0_i32 = arith.constant 0 : i32
    %c0_i32_0 = arith.constant 0 : i32
    %c0_i32_1 = arith.constant 0 : i32
    %c0_i32_2 = arith.constant 0 : i32
    return %c0_i32, %c0_i32_0, %c0_i32_1 : i32, i32, i32
  }
  func.func @transform_17(%arg0: i32) -> (i32, i32, i32) {
    %c0_i32 = arith.constant 0 : i32
    %c0_i32_0 = arith.constant 0 : i32
    %c0_i32_1 = arith.constant 0 : i32
    %c0_i32_2 = arith.constant 0 : i32
    return %c0_i32, %c0_i32_0, %c0_i32_1 : i32, i32, i32
  }
  func.func @transform_18(%arg0: i32) -> (i32, i32) {
    %c0_i32 = arith.constant 0 : i32
    %c0_i32_0 = arith.constant 0 : i32
    %c0_i32_1 = arith.constant 0 : i32
    return %c0_i32, %c0_i32_0 : i32, i32
  }
  func.func @transform_19(%arg0: i32) -> (i32, i32, i32) {
    %c0_i32 = arith.constant 0 : i32
    %c0_i32_0 = arith.constant 0 : i32
    %c0_i32_1 = arith.constant 0 : i32
    %c0_i32_2 = arith.constant 0 : i32
    return %c0_i32, %c0_i32_0, %c0_i32_1 : i32, i32, i32
  }
  func.func @transform_20(%arg0: i32) -> (i32, i32) {
    %c0_i32 = arith.constant 0 : i32
    %c0_i32_0 = arith.constant 0 : i32
    %c0_i32_1 = arith.constant 0 : i32
    return %c0_i32, %c0_i32_0 : i32, i32
  }
  func.func @transform_21(%arg0: i32) -> (i32, i32, i32) {
    %c0_i32 = arith.constant 0 : i32
    %c0_i32_0 = arith.constant 0 : i32
    %c0_i32_1 = arith.constant 0 : i32
    %c0_i32_2 = arith.constant 0 : i32
    return %c0_i32, %c0_i32_0, %c0_i32_1 : i32, i32, i32
  }
  func.func @transform_22(%arg0: i32) -> (i32, i32, i32) {
    %c0_i32 = arith.constant 0 : i32
    %c0_i32_0 = arith.constant 0 : i32
    %c0_i32_1 = arith.constant 0 : i32
    %c0_i32_2 = arith.constant 0 : i32
    return %c0_i32, %c0_i32_0, %c0_i32_1 : i32, i32, i32
  }
  func.func @transform_23(%arg0: i32) -> (i32, i32, i32) {
    %c0_i32 = arith.constant 0 : i32
    %c0_i32_0 = arith.constant 0 : i32
    %c0_i32_1 = arith.constant 0 : i32
    %c0_i32_2 = arith.constant 0 : i32
    return %c0_i32, %c0_i32_0, %c0_i32_1 : i32, i32, i32
  }
  func.func @transform_24(%arg0: i32) -> (i32, i32, i32) {
    %c0_i32 = arith.constant 0 : i32
    %c0_i32_0 = arith.constant 0 : i32
    %c0_i32_1 = arith.constant 0 : i32
    return %arg0, %c0_i32, %c0_i32_0 : i32, i32, i32
  }
}

module attributes {stable_mosaic.version = 11 : i64} {
  func.func @_head_kernel(%arg0: i32, %arg1: i32, %arg2: memref<2x8x32xf32, #tpu.memory_space<vmem>>, %arg3: memref<32x128xbf16, #tpu.memory_space<vmem>>, %arg4: memref<1x1x128xf32, #tpu.memory_space<vmem>>, %arg5: memref<2x8x1xi32, #tpu.memory_space<vmem>>, %arg6: memref<2x8x128xbf16, #tpu.memory_space<vmem>>, %arg7: memref<2x8x1xf32, #tpu.memory_space<vmem>>, %arg8: memref<2x8x1xi32, #tpu.memory_space<vmem>>, %arg9: memref<2x8x1xf32, #tpu.memory_space<vmem>>, %arg10: memref<2x8x1xf32, #tpu.memory_space<vmem>>, %arg11: memref<2x8x1xi32, #tpu.memory_space<vmem>>, %arg12: memref<2x8x1xf32, #tpu.memory_space<vmem>>) attributes {dimension_semantics = [#tpu.dimension_semantics<parallel>, #tpu.dimension_semantics<arbitrary>], iteration_bounds = array<i64: 1, 1>, scalar_prefetch = 0 : i64, scratch_operands = 4 : i64, tpu.core_type = #tpu.core_type<tc>, window_params = [{transform_indices = @transform_0, window_bounds = array<i64: 2, 8, 32>}, {transform_indices = @transform_1, window_bounds = array<i64: 32, 128>}, {transform_indices = @transform_2, window_bounds = array<i64: 1, 1, 128>}, {transform_indices = @transform_3, window_bounds = array<i64: 2, 8, 1>}, {transform_indices = @transform_4, window_bounds = array<i64: 2, 8, 128>}, {transform_indices = @transform_5, window_bounds = array<i64: 2, 8, 1>}, {transform_indices = @transform_6, window_bounds = array<i64: 2, 8, 1>}]} {
    %c0_i32 = arith.constant 0 : i32
    %0 = arith.cmpi eq, %arg1, %c0_i32 : i32
    %1 = arith.extui %0 : i1 to i32
    %c0_i32_0 = arith.constant 0 : i32
    %2 = arith.cmpi ne, %1, %c0_i32_0 : i32
    scf.if %2 {
      %cst_56 = arith.constant 0xFF800000 : f32
      %67 = vector.broadcast %cst_56 : f32 to vector<2x8x1xf32>
      %c0_57 = arith.constant 0 : index
      %c0_58 = arith.constant 0 : index
      %c0_59 = arith.constant 0 : index
      %68 = vector.load %arg9[%c0_57, %c0_58, %c0_59] : memref<2x8x1xf32, #tpu.memory_space<vmem>>, vector<2x8x1xf32>
      tpu.vector_store %arg9[%c0_57, %c0_58, %c0_59], %67 {strides = array<i32>} : memref<2x8x1xf32, #tpu.memory_space<vmem>>, vector<2x8x1xf32>,
      %cst_60 = arith.constant 0.000000e+00 : f32
      %69 = vector.broadcast %cst_60 : f32 to vector<2x8x1xf32>
      %c0_61 = arith.constant 0 : index
      %c0_62 = arith.constant 0 : index
      %c0_63 = arith.constant 0 : index
      %70 = vector.load %arg10[%c0_61, %c0_62, %c0_63] : memref<2x8x1xf32, #tpu.memory_space<vmem>>, vector<2x8x1xf32>
      tpu.vector_store %arg10[%c0_61, %c0_62, %c0_63], %69 {strides = array<i32>} : memref<2x8x1xf32, #tpu.memory_space<vmem>>, vector<2x8x1xf32>,
      %c0_i32_64 = arith.constant 0 : i32
      %71 = vector.broadcast %c0_i32_64 : i32 to vector<2x8x1xi32>
      %c0_65 = arith.constant 0 : index
      %c0_66 = arith.constant 0 : index
      %c0_67 = arith.constant 0 : index
      %72 = vector.load %arg11[%c0_65, %c0_66, %c0_67] : memref<2x8x1xi32, #tpu.memory_space<vmem>>, vector<2x8x1xi32>
      tpu.vector_store %arg11[%c0_65, %c0_66, %c0_67], %71 {strides = array<i32>} : memref<2x8x1xi32, #tpu.memory_space<vmem>>, vector<2x8x1xi32>,
      %cst_68 = arith.constant 0.000000e+00 : f32
      %73 = vector.broadcast %cst_68 : f32 to vector<2x8x1xf32>
      %c0_69 = arith.constant 0 : index
      %c0_70 = arith.constant 0 : index
      %c0_71 = arith.constant 0 : index
      %74 = vector.load %arg12[%c0_69, %c0_70, %c0_71] : memref<2x8x1xf32, #tpu.memory_space<vmem>>, vector<2x8x1xf32>
      tpu.vector_store %arg12[%c0_69, %c0_70, %c0_71], %73 {strides = array<i32>} : memref<2x8x1xf32, #tpu.memory_space<vmem>>, vector<2x8x1xf32>,
    } else {
    }
    %c0 = arith.constant 0 : index
    %c0_1 = arith.constant 0 : index
    %c0_2 = arith.constant 0 : index
    %3 = vector.load %arg2[%c0, %c0_1, %c0_2] : memref<2x8x32xf32, #tpu.memory_space<vmem>>, vector<2x8x32xf32>
    %4 = arith.truncf %3 : vector<2x8x32xf32> to vector<2x8x32xbf16>
    %c0_3 = arith.constant 0 : index
    %c0_4 = arith.constant 0 : index
    %5 = vector.load %arg3[%c0_3, %c0_4] : memref<32x128xbf16, #tpu.memory_space<vmem>>, vector<32x128xbf16>
    "tpu.trace_start"() <{level = 10 : i32, message = "btd,dv->btv"}> : () -> ()
    %cst = arith.constant dense<0.000000e+00> : vector<2x8x128xf32>
    %6 = tpu.matmul %4, %5, %cst {dimension_numbers = #tpu.dot_dimension_numbers<[2], [0], [0, 1], [1], [0, 0, 0, 1, 1, 1], [], []>} : vector<2x8x32xbf16>, vector<32x128xbf16>, vector<2x8x128xf32> -> vector<2x8x128xf32>
    "tpu.trace_stop"() : () -> ()
    %c0_5 = arith.constant 0 : index
    %c0_6 = arith.constant 0 : index
    %c0_7 = arith.constant 0 : index
    %7 = vector.load %arg4[%c0_5, %c0_6, %c0_7] : memref<1x1x128xf32, #tpu.memory_space<vmem>>, vector<1x1x128xf32>
    %8 = vector.broadcast %7 : vector<1x1x128xf32> to vector<2x8x128xf32>
    %9 = arith.addf %6, %8 : vector<2x8x128xf32>
    %10 = arith.truncf %9 : vector<2x8x128xf32> to vector<2x8x128xbf16>
    %c0_8 = arith.constant 0 : index
    %c0_9 = arith.constant 0 : index
    %c0_10 = arith.constant 0 : index
    %11 = vector.load %arg6[%c0_8, %c0_9, %c0_10] : memref<2x8x128xbf16, #tpu.memory_space<vmem>>, vector<2x8x128xbf16>
    tpu.vector_store %arg6[%c0_8, %c0_9, %c0_10], %10 {strides = array<i32>} : memref<2x8x128xbf16, #tpu.memory_space<vmem>>, vector<2x8x128xbf16>,
    %c0_11 = arith.constant 0 : index
    %c0_12 = arith.constant 0 : index
    %c0_13 = arith.constant 0 : index
    %12 = vector.load %arg5[%c0_11, %c0_12, %c0_13] : memref<2x8x1xi32, #tpu.memory_space<vmem>>, vector<2x8x1xi32>
    %cst_14 = arith.constant dense<0xFF800000> : vector<2x8xf32>
    %13 = vector.multi_reduction <maximumf>, %9, %cst_14 [2] : vector<2x8x128xf32> to vector<2x8xf32>
    %14 = vector.shape_cast %13 : vector<2x8xf32> to vector<2x8x1xf32>
    %15 = tpu.iota {dimensions = array<i32: 2>} : vector<2x8x128xi32>
    %16 = vector.broadcast %14 : vector<2x8x1xf32> to vector<2x8x128xf32>
    %17 = arith.cmpf oeq, %9, %16 : vector<2x8x128xf32>
    %c128_i32 = arith.constant 128 : i32
    %18 = vector.broadcast %c128_i32 : i32 to vector<2x8x128xi32>
    %19 = arith.select %17, %15, %18 : vector<2x8x128xi1>, vector<2x8x128xi32>
    %cst_15 = arith.constant dense<2147483647> : vector<2x8xi32>
    %20 = vector.multi_reduction <minsi>, %19, %cst_15 [2] : vector<2x8x128xi32> to vector<2x8xi32>
    %21 = vector.shape_cast %20 : vector<2x8xi32> to vector<2x8x1xi32>
    %c128_i32_16 = arith.constant 128 : i32
    %22 = arith.muli %arg1, %c128_i32_16 : i32
    %23 = vector.broadcast %22 : i32 to vector<2x8x1xi32>
    %24 = arith.addi %21, %23 : vector<2x8x1xi32>
    %c0_17 = arith.constant 0 : index
    %c0_18 = arith.constant 0 : index
    %c0_19 = arith.constant 0 : index
    %25 = vector.load %arg9[%c0_17, %c0_18, %c0_19] : memref<2x8x1xf32, #tpu.memory_space<vmem>>, vector<2x8x1xf32>
    %26 = arith.cmpf ogt, %14, %25 : vector<2x8x1xf32>
    %c0_20 = arith.constant 0 : index
    %c0_21 = arith.constant 0 : index
    %c0_22 = arith.constant 0 : index
    %27 = vector.load %arg11[%c0_20, %c0_21, %c0_22] : memref<2x8x1xi32, #tpu.memory_space<vmem>>, vector<2x8x1xi32>
    %28 = arith.select %26, %24, %27 : vector<2x8x1xi1>, vector<2x8x1xi32>
    %c0_23 = arith.constant 0 : index
    %c0_24 = arith.constant 0 : index
    %c0_25 = arith.constant 0 : index
    %29 = vector.load %arg11[%c0_23, %c0_24, %c0_25] : memref<2x8x1xi32, #tpu.memory_space<vmem>>, vector<2x8x1xi32>
    tpu.vector_store %arg11[%c0_23, %c0_24, %c0_25], %28 {strides = array<i32>} : memref<2x8x1xi32, #tpu.memory_space<vmem>>, vector<2x8x1xi32>,
    %c0_26 = arith.constant 0 : index
    %c0_27 = arith.constant 0 : index
    %c0_28 = arith.constant 0 : index
    %30 = vector.load %arg9[%c0_26, %c0_27, %c0_28] : memref<2x8x1xf32, #tpu.memory_space<vmem>>, vector<2x8x1xf32>
    %31 = arith.maximumf %30, %14 : vector<2x8x1xf32>
    %c0_29 = arith.constant 0 : index
    %c0_30 = arith.constant 0 : index
    %c0_31 = arith.constant 0 : index
    %32 = vector.load %arg10[%c0_29, %c0_30, %c0_31] : memref<2x8x1xf32, #tpu.memory_space<vmem>>, vector<2x8x1xf32>
    %c0_32 = arith.constant 0 : index
    %c0_33 = arith.constant 0 : index
    %c0_34 = arith.constant 0 : index
    %33 = vector.load %arg9[%c0_32, %c0_33, %c0_34] : memref<2x8x1xf32, #tpu.memory_space<vmem>>, vector<2x8x1xf32>
    %34 = arith.subf %33, %31 : vector<2x8x1xf32>
    %35 = math.exp %34 : vector<2x8x1xf32>
    %36 = arith.mulf %32, %35 : vector<2x8x1xf32>
    %37 = vector.broadcast %31 : vector<2x8x1xf32> to vector<2x8x128xf32>
    %38 = arith.subf %9, %37 : vector<2x8x128xf32>
    %39 = math.exp %38 : vector<2x8x128xf32>
    %cst_35 = arith.constant dense<0.000000e+00> : vector<2x8xf32>
    %40 = vector.multi_reduction <add>, %39, %cst_35 [2] : vector<2x8x128xf32> to vector<2x8xf32>
    %41 = vector.shape_cast %40 : vector<2x8xf32> to vector<2x8x1xf32>
    %42 = arith.addf %36, %41 : vector<2x8x1xf32>
    %c0_36 = arith.constant 0 : index
    %c0_37 = arith.constant 0 : index
    %c0_38 = arith.constant 0 : index
    %43 = vector.load %arg10[%c0_36, %c0_37, %c0_38] : memref<2x8x1xf32, #tpu.memory_space<vmem>>, vector<2x8x1xf32>
    tpu.vector_store %arg10[%c0_36, %c0_37, %c0_38], %42 {strides = array<i32>} : memref<2x8x1xf32, #tpu.memory_space<vmem>>, vector<2x8x1xf32>,
    %c0_39 = arith.constant 0 : index
    %c0_40 = arith.constant 0 : index
    %c0_41 = arith.constant 0 : index
    %44 = vector.load %arg9[%c0_39, %c0_40, %c0_41] : memref<2x8x1xf32, #tpu.memory_space<vmem>>, vector<2x8x1xf32>
    tpu.vector_store %arg9[%c0_39, %c0_40, %c0_41], %31 {strides = array<i32>} : memref<2x8x1xf32, #tpu.memory_space<vmem>>, vector<2x8x1xf32>,
    %c128_i32_42 = arith.constant 128 : i32
    %45 = arith.muli %arg1, %c128_i32_42 : i32
    %46 = vector.broadcast %45 : i32 to vector<2x8x1xi32>
    %47 = arith.subi %12, %46 : vector<2x8x1xi32>
    %c0_i32_43 = arith.constant 0 : i32
    %48 = vector.broadcast %c0_i32_43 : i32 to vector<2x8x1xi32>
    %49 = arith.cmpi sge, %47, %48 : vector<2x8x1xi32>
    %c128_i32_44 = arith.constant 128 : i32
    %50 = vector.broadcast %c128_i32_44 : i32 to vector<2x8x1xi32>
    %51 = arith.cmpi slt, %47, %50 : vector<2x8x1xi32>
    %52 = arith.andi %49, %51 : vector<2x8x1xi1>
    %53 = vector.broadcast %47 : vector<2x8x1xi32> to vector<2x8x128xi32>
    %54 = arith.cmpi eq, %15, %53 : vector<2x8x128xi32>
    %cst_45 = arith.constant 0.000000e+00 : f32
    %55 = vector.broadcast %cst_45 : f32 to vector<2x8x128xf32>
    %56 = arith.select %54, %9, %55 : vector<2x8x128xi1>, vector<2x8x128xf32>
    %cst_46 = arith.constant dense<0.000000e+00> : vector<2x8xf32>
    %57 = vector.multi_reduction <add>, %56, %cst_46 [2] : vector<2x8x128xf32> to vector<2x8xf32>
    %58 = vector.shape_cast %57 : vector<2x8xf32> to vector<2x8x1xf32>
    %c0_47 = arith.constant 0 : index
    %c0_48 = arith.constant 0 : index
    %c0_49 = arith.constant 0 : index
    %59 = vector.load %arg12[%c0_47, %c0_48, %c0_49] : memref<2x8x1xf32, #tpu.memory_space<vmem>>, vector<2x8x1xf32>
    %cst_50 = arith.constant 0.000000e+00 : f32
    %60 = vector.broadcast %cst_50 : f32 to vector<2x8x1xf32>
    %61 = arith.select %52, %58, %60 : vector<2x8x1xi1>, vector<2x8x1xf32>
    %62 = arith.addf %59, %61 : vector<2x8x1xf32>
    %c0_51 = arith.constant 0 : index
    %c0_52 = arith.constant 0 : index
    %c0_53 = arith.constant 0 : index
    %63 = vector.load %arg12[%c0_51, %c0_52, %c0_53] : memref<2x8x1xf32, #tpu.memory_space<vmem>>, vector<2x8x1xf32>
    tpu.vector_store %arg12[%c0_51, %c0_52, %c0_53], %62 {strides = array<i32>} : memref<2x8x1xf32, #tpu.memory_space<vmem>>, vector<2x8x1xf32>,
    %c0_i32_54 = arith.constant 0 : i32
    %64 = arith.cmpi eq, %arg1, %c0_i32_54 : i32
    %65 = arith.extui %64 : i1 to i32
    %c0_i32_55 = arith.constant 0 : i32
    %66 = arith.cmpi ne, %65, %c0_i32_55 : i32
    scf.if %66 {
      %c0_56 = arith.constant 0 : index
      %c0_57 = arith.constant 0 : index
      %c0_58 = arith.constant 0 : index
      %67 = vector.load %arg9[%c0_56, %c0_57, %c0_58] : memref<2x8x1xf32, #tpu.memory_space<vmem>>, vector<2x8x1xf32>
      %c0_59 = arith.constant 0 : index
      %c0_60 = arith.constant 0 : index
      %c0_61 = arith.constant 0 : index
      %68 = vector.load %arg10[%c0_59, %c0_60, %c0_61] : memref<2x8x1xf32, #tpu.memory_space<vmem>>, vector<2x8x1xf32>
      %69 = math.log %68 : vector<2x8x1xf32>
      %70 = arith.addf %67, %69 : vector<2x8x1xf32>
      %c0_62 = arith.constant 0 : index
      %c0_63 = arith.constant 0 : index
      %c0_64 = arith.constant 0 : index
      %71 = vector.load %arg12[%c0_62, %c0_63, %c0_64] : memref<2x8x1xf32, #tpu.memory_space<vmem>>, vector<2x8x1xf32>
      %72 = arith.subf %70, %71 : vector<2x8x1xf32>
      %c0_65 = arith.constant 0 : index
      %c0_66 = arith.constant 0 : index
      %c0_67 = arith.constant 0 : index
      %73 = vector.load %arg7[%c0_65, %c0_66, %c0_67] : memref<2x8x1xf32, #tpu.memory_space<vmem>>, vector<2x8x1xf32>
      tpu.vector_store %arg7[%c0_65, %c0_66, %c0_67], %72 {strides = array<i32>} : memref<2x8x1xf32, #tpu.memory_space<vmem>>, vector<2x8x1xf32>,
      %c0_68 = arith.constant 0 : index
      %c0_69 = arith.constant 0 : index
      %c0_70 = arith.constant 0 : index
      %74 = vector.load %arg11[%c0_68, %c0_69, %c0_70] : memref<2x8x1xi32, #tpu.memory_space<vmem>>, vector<2x8x1xi32>
      %c0_71 = arith.constant 0 : index
      %c0_72 = arith.constant 0 : index
      %c0_73 = arith.constant 0 : index
      %75 = vector.load %arg8[%c0_71, %c0_72, %c0_73] : memref<2x8x1xi32, #tpu.memory_space<vmem>>, vector<2x8x1xi32>
      tpu.vector_store %arg8[%c0_71, %c0_72, %c0_73], %74 {strides = array<i32>} : memref<2x8x1xi32, #tpu.memory_space<vmem>>, vector<2x8x1xi32>,
    } else {
    }
    return
  }
  func.func @transform_0(%arg0: i32, %arg1: i32) -> (i32, i32, i32) {
    %c0_i32 = arith.constant 0 : i32
    %c0_i32_0 = arith.constant 0 : i32
    %c0_i32_1 = arith.constant 0 : i32
    return %c0_i32, %arg0, %c0_i32_0 : i32, i32, i32
  }
  func.func @transform_1(%arg0: i32, %arg1: i32) -> (i32, i32) {
    %c0_i32 = arith.constant 0 : i32
    %c0_i32_0 = arith.constant 0 : i32
    return %c0_i32, %arg1 : i32, i32
  }
  func.func @transform_2(%arg0: i32, %arg1: i32) -> (i32, i32, i32) {
    %c0_i32 = arith.constant 0 : i32
    %c0_i32_0 = arith.constant 0 : i32
    %c0_i32_1 = arith.constant 0 : i32
    return %c0_i32, %c0_i32_0, %arg1 : i32, i32, i32
  }
  func.func @transform_3(%arg0: i32, %arg1: i32) -> (i32, i32, i32) {
    %c0_i32 = arith.constant 0 : i32
    %c0_i32_0 = arith.constant 0 : i32
    %c0_i32_1 = arith.constant 0 : i32
    return %c0_i32, %arg0, %c0_i32_0 : i32, i32, i32
  }
  func.func @transform_4(%arg0: i32, %arg1: i32) -> (i32, i32, i32) {
    %c0_i32 = arith.constant 0 : i32
    %c0_i32_0 = arith.constant 0 : i32
    return %c0_i32, %arg0, %arg1 : i32, i32, i32
  }
  func.func @transform_5(%arg0: i32, %arg1: i32) -> (i32, i32, i32) {
    %c0_i32 = arith.constant 0 : i32
    %c0_i32_0 = arith.constant 0 : i32
    %c0_i32_1 = arith.constant 0 : i32
    return %c0_i32, %arg0, %c0_i32_0 : i32, i32, i32
  }
  func.func @transform_6(%arg0: i32, %arg1: i32) -> (i32, i32, i32) {
    %c0_i32 = arith.constant 0 : i32
    %c0_i32_0 = arith.constant 0 : i32
    %c0_i32_1 = arith.constant 0 : i32
    return %c0_i32, %arg0, %c0_i32_0 : i32, i32, i32
  }
}

</mosaic_0001>

<llo_original>
// kernel: bart_generator_train_forward.7
$region0: #{bart_generator_train_forward.7}
  #allocation0 [shape = 'u32[]', space=smem, size = 0x4, offset = 0x4, fixed_abs, tag = 'smem constant byte address 0x4 - core index']
  #allocation1 [shape = 'u32[144,128]{1,0:T(1,128)}', space=vmem, size = 0x12000, scoped, tag = 'internal scratch']
  %s0 = inlined_call_operand.vmem [shape: f32[2,8,32], index: 0, kind: input, shape index: {}]
  %s1 = inlined_call_operand.vmem [shape: f32[1,8,32], index: 1, kind: input, shape index: {}]
  %s2 = inlined_call_operand.vmem [shape: f32[1,1,32], index: 2, kind: input, shape index: {}]
  %s3 = inlined_call_operand.vmem [shape: f32[1,1,32], index: 3, kind: input, shape index: {}]
  %s4 = inlined_call_operand.vmem [shape: f32[2,8,32], index: 4, kind: output, shape index: {}]
  %s5 = sld [smem:[#allocation0]]
  $region49: #{bart_generator_train_forward.7} parent=0
    _
  %s7 = ssub.s32 1, %s5
  %s8 = scalar_select 0, %s7, %s5
  loop: start=0, step=1, limit=4
  $region2: #{bart_generator_train_forward.7} parent=0 // loop_pre_header
    _
  $region3: #{bart_generator_train_forward.7} parent=0 // loop_header
    %s10 = sphi 0, %s14
    %p11 = scmp.ge.s32.totalorder %s10, 4
    %s20 = sphi 0, %s22
    %s23 = sphi 0, %s20
    %s24 = sphi 0, %s23
    %s40 = sphi 0, %s24
    %s44 = sphi 0, %s44
    %s46 = sphi 0, %s44
    %s47 = sphi 0, %s46
    %s61 = sphi 0, %s47
    %s65 = sphi 0, %s65
    %s67 = sphi 0, %s65
    %s68 = sphi 0, %s67
    %s82 = sphi 0, %s68
    %s86 = sphi 0, %s86
    %s88 = sphi 0, %s86
    %s89 = sphi 0, %s88
    %s103 = sphi 0, %s89
    %s109 = sphi 0, %s111
    %s112 = sphi 0, %s109
    %s113 = sphi 0, %s112
    %s129 = sphi 0, %s113
  $region4: #{bart_generator_train_forward.7} parent=0 // loop_header_branch
    %13 = sbr.rel (%p11) target = $region8
  $region5: #{bart_generator_train_forward.7} parent=0 // loop_body
    %s15 = ssub.s32 %s10, 1
    %s16 = ssub.s32 %s10, 2
    %s17 = sadd.s32 %s10, 1
    %s18 = ssub.s32 %s10, %s17
    %p19 = scmp.eq.s32.totalorder %s18, 0
    %s21 = sadd.s32 %s20, 1
    %s22 = scalar_select %p19, %s20, %s21
    %p25 = pneg %p19
    %p26 = scmp.eq.s32.totalorder %s10, 1
    %p27 = por %p25, %p26
    %p28 = scmp.ne.s32.totalorder %s20, %s23
    %p29 = scmp.eq.s32.totalorder %s10, 0
    %p30 = por %p28, %p29
    %p31 = scmp.ne.s32.totalorder %s20, %s23
    %p32 = scmp.eq.s32.totalorder %s15, 1
    %p33 = por %p31, %p32
    %p34 = scmp.ne.s32.totalorder %s23, %s24
    %p35 = scmp.eq.s32.totalorder %s15, 0
    %p36 = por %p34, %p35
    %p37 = scmp.ne.s32.totalorder %s23, %s24
    %p38 = scmp.eq.s32.totalorder %s16, 1
    %p39 = por %p37, %p38
    %p41 = scmp.ne.s32.totalorder %s24, %s40
    %p42 = scmp.eq.s32.totalorder %s16, 0
    %p43 = por %p41, %p42
    %s45 = sadd.s32 %s44, 1
    %p48 = scmp.eq.s32.totalorder %s10, 1
    %p49 = scmp.ne.s32.totalorder %s44, %s46
    %p50 = scmp.eq.s32.totalorder %s10, 0
    %p51 = por %p49, %p50
    %p52 = scmp.ne.s32.totalorder %s44, %s46
    %p53 = scmp.eq.s32.totalorder %s15, 1
    %p54 = por %p52, %p53
    %p55 = scmp.ne.s32.totalorder %s46, %s47
    %p56 = scmp.eq.s32.totalorder %s15, 0
    %p57 = por %p55, %p56
    %p58 = scmp.ne.s32.totalorder %s46, %s47
    %p59 = scmp.eq.s32.totalorder %s16, 1
    %p60 = por %p58, %p59
    %p62 = scmp.ne.s32.totalorder %s47, %s61
    %p63 = scmp.eq.s32.totalorder %s16, 0
    %p64 = por %p62, %p63
    %s66 = sadd.s32 %s65, 1
    %p69 = scmp.eq.s32.totalorder %s10, 1
    %p70 = scmp.ne.s32.totalorder %s65, %s67
    %p71 = scmp.eq.s32.totalorder %s10, 0
    %p72 = por %p70, %p71
    %p73 = scmp.ne.s32.totalorder %s65, %s67
    %p74 = scmp.eq.s32.totalorder %s15, 1
    %p75 = por %p73, %p74
    %p76 = scmp.ne.s32.totalorder %s67, %s68
    %p77 = scmp.eq.s32.totalorder %s15, 0
    %p78 = por %p76, %p77
    %p79 = scmp.ne.s32.totalorder %s67, %s68
    %p80 = scmp.eq.s32.totalorder %s16, 1
    %p81 = por %p79, %p80
    %p83 = scmp.ne.s32.totalorder %s68, %s82
    %p84 = scmp.eq.s32.totalorder %s16, 0
    %p85 = por %p83, %p84
    %s87 = sadd.s32 %s86, 1
    %p90 = scmp.eq.s32.totalorder %s10, 1
    %p91 = scmp.ne.s32.totalorder %s86, %s88
    %p92 = scmp.eq.s32.totalorder %s10, 0
    %p93 = por %p91, %p92
    %p94 = scmp.ne.s32.totalorder %s86, %s88
    %p95 = scmp.eq.s32.totalorder %s15, 1
    %p96 = por %p94, %p95
    %p97 = scmp.ne.s32.totalorder %s88, %s89
    %p98 = scmp.eq.s32.totalorder %s15, 0
    %p99 = por %p97, %p98
    %p100 = scmp.ne.s32.totalorder %s88, %s89
    %p101 = scmp.eq.s32.totalorder %s16, 1
    %p102 = por %p100, %p101
    %p104 = scmp.ne.s32.totalorder %s89, %s103
    %p105 = scmp.eq.s32.totalorder %s16, 0
    %p106 = por %p104, %p105
    %s107 = ssub.s32 %s10, %s17
    %p108 = scmp.eq.s32.totalorder %s107, 0
    %s110 = sadd.s32 %s109, 1
    %s111 = scalar_select %p108, %s109, %s110
    %p114 = pneg %p108
    %p115 = scmp.eq.s32.totalorder %s10, 1
    %p116 = por %p114, %p115
    %p117 = scmp.ne.s32.totalorder %s109, %s112
    %p118 = scmp.eq.s32.totalorder %s10, 0
    %p119 = por %p117, %p118
    %p120 = scmp.ne.s32.totalorder %s109, %s112
    %p121 = scmp.eq.s32.totalorder %s15, 1
    %p122 = por %p120, %p121
    %p123 = scmp.ne.s32.totalorder %s112, %s113
    %p124 = scmp.eq.s32.totalorder %s15, 0
    %p125 = por %p123, %p124
    %p126 = scmp.ne.s32.totalorder %s112, %s113
    %p127 = scmp.eq.s32.totalorder %s16, 1
    %p128 = por %p126, %p127
    %p130 = scmp.ne.s32.totalorder %s113, %s129
    %p131 = scmp.eq.s32.totalorder %s16, 0
    %p132 = por %p130, %p131
    %p133 = scmp.le.s32.totalorder 1, %s10
    %p134 = scmp.lt.s32.totalorder %s10, 3
    %p135 = pnand %p133, %p134
    %p136 = pneg %p135
    // Predicated region
    $region9: #{bart_generator_train_forward.7} parent=5 // pred_check
      _
    $region10: #{bart_generator_train_forward.7} parent=5 // pred_check_branch
      %138 = sbr.rel (%p135) target = $region12
    $region11: #{bart_generator_train_forward.7} parent=5 // pred_region
      %s139 = ssub.s32 %s10, 1
      // Predicated region
      $region13: #{bart_generator_train_forward.7} parent=11 // pred_check
        %p140 = pneg %p57
      $region14: #{bart_generator_train_forward.7} parent=11 // pred_check_branch
        %142 = sbr.rel (%p140) target = $region16
      $region15: #{bart_generator_train_forward.7} parent=11 // pred_region
        _
      $region16: #{bart_generator_train_forward.7} parent=11 // pred_fallthru
        _
      // Predicated region
      $region17: #{bart_generator_train_forward.7} parent=11 // pred_check
        %p143 = pneg %p78
      $region18: #{bart_generator_train_forward.7} parent=11 // pred_check_branch
        %145 = sbr.rel (%p143) target = $region20
      $region19: #{bart_generator_train_forward.7} parent=11 // pred_region
        _
      $region20: #{bart_generator_train_forward.7} parent=11 // pred_fallthru
        _
      // Predicated region
      $region21: #{bart_generator_train_forward.7} parent=11 // pred_check
        %p146 = pneg %p99
      $region22: #{bart_generator_train_forward.7} parent=11 // pred_check_branch
        %148 = sbr.rel (%p146) target = $region24
      $region23: #{bart_generator_train_forward.7} parent=11 // pred_region
        _
      $region24: #{bart_generator_train_forward.7} parent=11 // pred_fallthru
        _
    $region12: #{bart_generator_train_forward.7} parent=5 // pred_fallthru
      _
    %p149 = scmp.lt.s32.totalorder %s10, 2
    // Predicated region
    $region25: #{bart_generator_train_forward.7} parent=5 // pred_check
      %p150 = pneg %p149
    $region26: #{bart_generator_train_forward.7} parent=5 // pred_check_branch
      %152 = sbr.rel (%p150) target = $region28
    $region27: #{bart_generator_train_forward.7} parent=5 // pred_region
      // Predicated region
      $region29: #{bart_generator_train_forward.7} parent=27 // pred_check
        %p153 = pneg %p30
      $region30: #{bart_generator_train_forward.7} parent=27 // pred_check_branch
        %155 = sbr.rel (%p153) target = $region32
      $region31: #{bart_generator_train_forward.7} parent=27 // pred_region
        %p156 = scmp.lt.s32.totalorder %s10, 1
        %s157 = scalar_select %p156, %s10, 1
        %s158 = smul.addr %s157, 8
        %s159 = scalar_lea.vmem %s0, %s158
      $region32: #{bart_generator_train_forward.7} parent=27 // pred_fallthru
        _
    $region28: #{bart_generator_train_forward.7} parent=5 // pred_fallthru
      _
    %p160 = scmp.le.s32.totalorder 1, %s10
    %p161 = scmp.lt.s32.totalorder %s10, 3
    %p162 = pnand %p160, %p161
    %p163 = pneg %p162
    // Predicated region
    $region33: #{bart_generator_train_forward.7} parent=5 // pred_check
      _
    $region34: #{bart_generator_train_forward.7} parent=5 // pred_check_branch
      %165 = sbr.rel (%p162) target = $region36
    $region35: #{bart_generator_train_forward.7} parent=5 // pred_region
      %s166 = ssub.s32 %s10, 1
      %p167 = scmp.lt.s32.totalorder %s15, 1
      %s168 = scalar_select %p167, %s15, 1
      %s169 = smul.addr %s168, 8
      %s170 = scalar_lea.vmem %s0, %s169
      %p171 = pneg %p36
      %p172 = pneg %p33
      %p173 = pneg %p57
      %p174 = pneg %p54
      %p175 = pneg %p78
      %p176 = pneg %p75
      %p177 = pneg %p99
      %p178 = pneg %p96
      %p179 = pneg %p125
      %p180 = pneg %p122
      %p181 = scmp.lt.s32.totalorder %s15, 1
      %s182 = scalar_select %p181, %s15, 1
      %s183 = smul.addr %s182, 8
      %s184 = scalar_lea.vmem %s4, %s183
      %p185 = scmp.lt.s32.totalorder %s15, 1
      %s186 = scalar_select %p185, %s15, 1
      %s187 = smul.addr %s186, 8
      %s188 = scalar_lea.vmem %s0, %s187
      %p189 = scmp.lt.s32.totalorder %s15, 1
      %s190 = scalar_select %p189, %s15, 1
      %s191 = smul.addr %s190, 8
      %s192 = scalar_lea.vmem %s4, %s191
      %v193 = vld [vmem:[%s188] sm:$0xff]
      %v194 = vld [vmem:[%s1] sm:$0xff]
      %v195 = vadd.f32 %v193, %v194
      %v196 = vld [vmem:[%s2] sm:$0x1]
      %v197 = vld [vmem:[%s3] sm:$0x1]
      %vm198 = vcmask 261120
      %v199 = vsel %vm198, %v195, 0.0
      %200 = vadd.xlane.f32.xlu0 %v199
      %v201 = vpop.xlane.xlu0 %200
      %v202 = vrcp.pop 32.0
      %v203 = vmul.f32 %v201, %v202
      %v204 = vsub.f32 %v195, %v203
      %v205 = vmul.f32 %v204, %v204
      %v206 = vsel %vm198, %v205, 0.0
      %207 = vadd.xlane.f32.xlu0 %v206
      %v208 = vpop.xlane.xlu0 %207
      %v209 = vmul.f32 %v208, %v202
      %v210 = vadd.f32 %v209, 1e-05
      %v211 = vrsqrt.pop %v210
      %v212 = vmul.f32 %v204, %v211
      %v214 = vlaneseq
      %v215 = vshrl.u32 %v214, 7
      %v216 = vsub.s32 0, %v215
      %v217 = vrot.slane %v196, %v216
      %v219 = vmul.f32 %v212, %v217
      %v221 = vlaneseq
      %v222 = vshrl.u32 %v221, 7
      %v223 = vsub.s32 0, %v222
      %v224 = vrot.slane %v197, %v223
      %v226 = vadd.f32 %v219, %v224
      %227 = vst.msk [vmem:[%s192] sm:$0xff] %vm198, %v226
      %p228 = scmp.lt.s32.totalorder %s15, 1
      %s229 = scalar_select %p228, %s15, 1
      %s230 = smul.addr %s229, 8
      %s231 = scalar_lea.vmem %s4, %s230
      // Predicated region
      $region37: #{bart_generator_train_forward.7} parent=35 // pred_check
        %p232 = pneg %p122
      $region38: #{bart_generator_train_forward.7} parent=35 // pred_check_branch
        %234 = sbr.rel (%p232) target = $region40
      $region39: #{bart_generator_train_forward.7} parent=35 // pred_region
        _
      $region40: #{bart_generator_train_forward.7} parent=35 // pred_fallthru
        _
    $region36: #{bart_generator_train_forward.7} parent=5 // pred_fallthru
      _
    %p235 = scmp.le.s32.totalorder 2, %s10
    // Predicated region
    $region41: #{bart_generator_train_forward.7} parent=5 // pred_check
      %p236 = pneg %p235
    $region42: #{bart_generator_train_forward.7} parent=5 // pred_check_branch
      %238 = sbr.rel (%p236) target = $region44
    $region43: #{bart_generator_train_forward.7} parent=5 // pred_region
      %s239 = ssub.s32 %s10, 2
      // Predicated region
      $region45: #{bart_generator_train_forward.7} parent=43 // pred_check
        %p240 = pneg %p128
      $region46: #{bart_generator_train_forward.7} parent=43 // pred_check_branch
        %242 = sbr.rel (%p240) target = $region48
      $region47: #{bart_generator_train_forward.7} parent=43 // pred_region
        %p243 = scmp.lt.s32.totalorder %s16, 1
        %s244 = scalar_select %p243, %s16, 1
        %s245 = smul.addr %s244, 8
        %s246 = scalar_lea.vmem %s4, %s245
      $region48: #{bart_generator_train_forward.7} parent=43 // pred_fallthru
        _
    $region44: #{bart_generator_train_forward.7} parent=5 // pred_fallthru
      _
  $region6: #{bart_generator_train_forward.7} parent=0 // loop_footer
    %s14 = sadd.s32 1, %s10
  $region7: #{bart_generator_train_forward.7} parent=0 // loop_footer_branch
    %9 = sbr.rel target = $region3
  $region8: #{bart_generator_train_forward.7} parent=0 // loop_exit
    _

// kernel: bart_generator_train_forward.9
$region0: #{bart_generator_train_forward.9}
  #allocation0 [shape = 'u32[]', space=smem, size = 0x4, offset = 0x4, fixed_abs, tag = 'smem constant byte address 0x4 - core index']
  #allocation1 [shape = 'u32[144,128]{1,0:T(1,128)}', space=vmem, size = 0x12000, scoped, tag = 'internal scratch']
  #allocation2 [shape = 'f32[2,8,1]{2,1,0:T(8,128)}', space=vmem, size = 0x2000, scoped, tag = 'scratch operand']
  #allocation3 [shape = 'f32[2,8,1]{2,1,0:T(8,128)}', space=vmem, size = 0x2000, scoped, tag = 'scratch operand']
  #allocation4 [shape = 's32[2,8,1]{2,1,0:T(8,128)}', space=vmem, size = 0x2000, scoped, tag = 'scratch operand']
  #allocation5 [shape = 'f32[2,8,1]{2,1,0:T(8,128)}', space=vmem, size = 0x2000, scoped, tag = 'scratch operand']
  %s0 = inlined_call_operand.vmem [shape: f32[2,8,32], index: 0, kind: input, shape index: {}]
  %s1 = inlined_call_operand.vmem [shape: bf16[32,128], index: 1, kind: input, shape index: {}]
  %s2 = inlined_call_operand.vmem [shape: f32[1,1,128], index: 2, kind: input, shape index: {}]
  %s3 = inlined_call_operand.vmem [shape: s32[2,8,1], index: 3, kind: input, shape index: {}]
  %s4 = inlined_call_operand.hbm [shape: bf16[2,8,128], index: 4, kind: output, shape index: {0}]
  %s5 = inlined_call_operand.vmem [shape: f32[2,8,1], index: 5, kind: output, shape index: {1}]
  %s6 = inlined_call_operand.vmem [shape: s32[2,8,1], index: 6, kind: output, shape index: {2}]
  %7 = xla_tuple %s4, %s5, %s6
  %s8 = sld [smem:[#allocation0]]
  $region50: #{bart_generator_train_forward.9} parent=0
    _
  %s10 = ssub.s32 1, %s8
  %s11 = scalar_select 0, %s10, %s8
  $region1: #{bart_generator_train_forward.9} parent=0
    #allocation6 [shape = 'u8[4096]{0}', space=vmem, size = 0x1000, scoped, tag = 'output window, operand 0, single buffered']
    #allocation7 [shape = 's32[1]{0}', space=sflag, size = 0x4, scoped, tag = 'scoped memory for bart_generator_train_forward.9']
    %12 = vsyncpa [#allocation7], 0
    // Predicated region
    $region2: #{bart_generator_train_forward.9} parent=1 // pred_check
      _
    $region3: #{bart_generator_train_forward.9} parent=1 // pred_check_branch
      %14 = sbr.rel (0) target = $region5
    $region4: #{bart_generator_train_forward.9} parent=1 // pred_region
      _
    $region5: #{bart_generator_train_forward.9} parent=1 // pred_fallthru
      _
    // Predicated region
    $region6: #{bart_generator_train_forward.9} parent=1 // pred_check
      _
    $region7: #{bart_generator_train_forward.9} parent=1 // pred_check_branch
      %16 = sbr.rel (0) target = $region9
    $region8: #{bart_generator_train_forward.9} parent=1 // pred_region
      _
    $region9: #{bart_generator_train_forward.9} parent=1 // pred_fallthru
      _
    // Predicated region
    $region10: #{bart_generator_train_forward.9} parent=1 // pred_check
      _
    $region11: #{bart_generator_train_forward.9} parent=1 // pred_check_branch
      %18 = sbr.rel (0) target = $region13
    $region12: #{bart_generator_train_forward.9} parent=1 // pred_region
      _
    $region13: #{bart_generator_train_forward.9} parent=1 // pred_fallthru
      _
    // Predicated region
    $region14: #{bart_generator_train_forward.9} parent=1 // pred_check
      _
    $region15: #{bart_generator_train_forward.9} parent=1 // pred_check_branch
      %20 = sbr.rel (0) target = $region17
    $region16: #{bart_generator_train_forward.9} parent=1 // pred_region
      _
    $region17: #{bart_generator_train_forward.9} parent=1 // pred_fallthru
      _
    %p22 = scmp.eq.s32.totalorder 0, 0
    // Predicated region
    $region18: #{bart_generator_train_forward.9} parent=1 // pred_check
      %p23 = pneg %p22
    $region19: #{bart_generator_train_forward.9} parent=1 // pred_check_branch
      %25 = sbr.rel (%p23) target = $region21
    $region20: #{bart_generator_train_forward.9} parent=1 // pred_region
      %vm26 = vcmask 7168
      %27 = vst.msk [vmem:[#allocation2] sm:$0xff] %vm26, -inf
      %28 = vst.msk [vmem:[#allocation2 + $0x8] sm:$0xff] %vm26, -inf
      %29 = vst.msk [vmem:[#allocation3] sm:$0xff] %vm26, 0.0
      %30 = vst.msk [vmem:[#allocation3 + $0x8] sm:$0xff] %vm26, 0.0
      %31 = vst.msk [vmem:[#allocation4] sm:$0xff] %vm26, 0
      %32 = vst.msk [vmem:[#allocation4 + $0x8] sm:$0xff] %vm26, 0
      %33 = vst.msk [vmem:[#allocation5] sm:$0xff] %vm26, 0.0
      %34 = vst.msk [vmem:[#allocation5 + $0x8] sm:$0xff] %vm26, 0.0
    $region21: #{bart_generator_train_forward.9} parent=1 // pred_fallthru
      _
    %v35 = vld [vmem:[%s0] sm:$0xff]
    %v36 = vld [vmem:[%s0 + $0x8] sm:$0xff]
    %v37 = vpack.c.bf16 %v35, %v35
    %v38 = vpack.c.bf16 %v36, %v36
    %v39 = vld [vmem:[%s1] sm:$0xf]
    %v40 = vld [vmem:[%s1 + $0x4] sm:$0xf]
    %v41 = vld [vmem:[%s1 + $0x8] sm:$0xf]
    %v42 = vld [vmem:[%s1 + $0xc] sm:$0xf]
    %v43 = vld [vmem:[%s2] sm:$0x1]
    %v45 = vlaneseq
    %v46 = vshrl.u32 %v45, 7
    %v47 = vsub.s32 0, %v46
    %v48 = vrot.slane %v43, %v47
    %v52 = vunpack.c.l.b16 %v37
    %v53 = vunpack.c.l.b16 %v38
    %v54 = vpack.c.b16 %v53, %v52
    %v59 = vunpack.c.l.b16 %v39
    %v60 = vunpack.c.l.b16 %v40
    %v61 = vunpack.c.l.b16 %v41
    %v62 = vunpack.c.l.b16 %v42
    %v63 = vpack.c.b16 %v60, %v59
    %v64 = vpack.c.b16 %v62, %v61
    %vm67 = vcmask 261120
    %v69 = vsel %vm67, %v54, 0
    %71 = vmatprep.subr.bf16.mxu0 0
    %72 = vmatpush1.bf16.msra.mxu0 %v63
    %73 = vmatprep.subr.bf16.mxu0 0
    %74 = vmatpush1.bf16.msra.mxu0 %v64
    %75 = vmatprep.subr.bf16.mxu0 0
    %76 = vmatpush1.bf16.msra.mxu0 0
    %77 = vmatprep.subr.bf16.mxu0 0
    %78 = vmatpush1.bf16.msra.mxu0 0
    %79 = vmatprep.subr.bf16.mxu0 0
    %80 = vmatpush1.bf16.msra.mxu0 0
    %81 = vmatprep.subr.bf16.mxu0 0
    %82 = vmatpush1.bf16.msra.mxu0 0
    %83 = vmatprep.subr.bf16.mxu0 0
    %84 = vmatpush1.bf16.msra.mxu0 0
    %85 = vmatprep.subr.bf16.mxu0 0
    %86 = vmatpush1.bf16.msra.mxu0 0
    %87 = vmatprep.subr.bf16.mxu0 0
    %88 = vmatpush1.bf16.msra.mxu0 0
    %89 = vmatprep.subr.bf16.mxu0 0
    %90 = vmatpush1.bf16.msra.mxu0 0
    %91 = vmatprep.subr.bf16.mxu0 0
    %92 = vmatpush1.bf16.msra.mxu0 0
    %93 = vmatprep.subr.bf16.mxu0 0
    %94 = vmatpush1.bf16.msra.mxu0 0
    %95 = vmatprep.subr.bf16.mxu0 0
    %96 = vmatpush1.bf16.msra.mxu0 0
    %97 = vmatprep.subr.bf16.mxu0 0
    %98 = vmatpush1.bf16.msra.mxu0 0
    %99 = vmatprep.subr.bf16.mxu0 0
    %100 = vmatpush1.bf16.msra.mxu0 0
    %101 = vmatprep.subr.bf16.mxu0 0
    %102 = vmatpush1.bf16.msra.mxu0 0
    %103 = vmatprep.mubr.bf16.mxu0 0
    %104 = vmatmul.mubr.bf16.gmra.mrb[0].mxu0 %v69
    %v105 = vpop.f32.mrb[0].mxu0
    %v106 = vadd.f32 %v48, %v105
    %v107 = vpop.f32.mrb[0].mxu0
    %v108 = vpop.f32.mrb[0].mxu0
    %v109 = vadd.f32 %v48, %v108
    %v110 = vpop.f32.mrb[0].mxu0
    %111 = vdwg.mxu0
    %v112 = vpack.c.bf16 %v106, %v106
    %v113 = vpack.c.bf16 %v109, %v109
    %114 = vst [vmem:[#allocation6] sm:$0xf] %v112
    %115 = vst [vmem:[#allocation6 + $0x4] sm:$0xf] %v113
    %v116 = vld [vmem:[%s3] sm:$0xff]
    %v117 = vld [vmem:[%s3 + $0x8] sm:$0xff]
    %118 = vmax.xlane.f32.xlu0 %v106
    %v119 = vpop.xlane.xlu0 %118
    %120 = vmax.xlane.f32.xlu0 %v109
    %v121 = vpop.xlane.xlu0 %120
    %v122 = vlaneseq
    %v123 = vand.u32 %v122, 127
    %vm124 = vcmp.eq.f32.partialorder %v106, %v119
    %vm125 = vcmp.eq.f32.partialorder %v109, %v121
    %v126 = vsel %vm124, %v123, 128
    %v127 = vsel %vm125, %v123, 128
    %v128 = vand.u32 %v126, 65535
    %v129 = vshra.s32 %v126, 16
    %v130 = vcvt.s32.f32 %v128
    %v131 = vcvt.s32.f32 %v129
    %132 = vmin.xlane.f32.xlu0 %v131
    %v133 = vpop.xlane.xlu0 %132
    %vm134 = vcmp.eq.f32.partialorder %v131, %v133
    %v135 = vsel %vm134, %v130, inf
    %136 = vmin.xlane.f32.xlu0 %v135
    %v137 = vpop.xlane.xlu0 %136
    %v138 = vcvt.f32.s32 %v137
    %v139 = vcvt.f32.s32 %v133
    %v140 = vshll.u32 %v139, 16
    %v141 = vadd.s32 %v140, %v138
    %v142 = vand.u32 %v127, 65535
    %v143 = vshra.s32 %v127, 16
    %v144 = vcvt.s32.f32 %v142
    %v145 = vcvt.s32.f32 %v143
    %146 = vmin.xlane.f32.xlu0 %v145
    %v147 = vpop.xlane.xlu0 %146
    %vm148 = vcmp.eq.f32.partialorder %v145, %v147
    %v149 = vsel %vm148, %v144, inf
    %150 = vmin.xlane.f32.xlu0 %v149
    %v151 = vpop.xlane.xlu0 %150
    %v152 = vcvt.f32.s32 %v151
    %v153 = vcvt.f32.s32 %v147
    %v154 = vshll.u32 %v153, 16
    %v155 = vadd.s32 %v154, %v152
    %s156 = smul.u32 0, 128
    %v157 = vstv %s156
    %v158 = vadd.s32 %v141, %v157
    %v159 = vadd.s32 %v155, %v157
    %v160 = vld [vmem:[#allocation2] sm:$0xff]
    %v161 = vld [vmem:[#allocation2 + $0x8] sm:$0xff]
    %vm162 = vcmp.gt.f32.partialorder %v119, %v160
    %vm163 = vcmp.gt.f32.partialorder %v121, %v161
    %v164 = vld [vmem:[#allocation4] sm:$0xff]
    %v165 = vld [vmem:[#allocation4 + $0x8] sm:$0xff]
    %v166 = vsel %vm162, %v158, %v164
    %v167 = vsel %vm163, %v159, %v165
    %vm168 = vcmask 7168
    %169 = vst.msk [vmem:[#allocation4] sm:$0xff] %vm168, %v166
    %170 = vst.msk [vmem:[#allocation4 + $0x8] sm:$0xff] %vm168, %v167
    %v171 = vld [vmem:[#allocation2] sm:$0xff]
    %v172 = vld [vmem:[#allocation2 + $0x8] sm:$0xff]
    %v173 = vmax.f32 %v171, %v119
    %v174 = vmax.f32 %v172, %v121
    %v175 = vld [vmem:[#allocation3] sm:$0xff]
    %v176 = vld [vmem:[#allocation3 + $0x8] sm:$0xff]
    %v177 = vsub.f32 %v171, %v173
    %v178 = vsub.f32 %v172, %v174
    %v179 = vmul.f32 %v177, 1.442695
    %v180 = vpow.pop %v179
    %v181 = vmul.f32 %v178, 1.442695
    %v182 = vpow.pop %v181
    %v183 = vmul.f32 %v175, %v180
    %v184 = vmul.f32 %v176, %v182
    %186 = vset.pattern.permute.xlu0 0
    %187 = vperm.xlu0 %186, %v173
    %v188 = vpop.permute.xlu0 %187
    %191 = vset.pattern.permute.xlu0 0
    %192 = vperm.xlu0 %191, %v174
    %v193 = vpop.permute.xlu0 %192
    %v195 = vsub.f32 %v106, %v188
    %v196 = vsub.f32 %v109, %v193
    %v197 = vmul.f32 %v195, 1.442695
    %v198 = vpow.pop %v197
    %v199 = vmul.f32 %v196, 1.442695
    %v200 = vpow.pop %v199
    %201 = vadd.xlane.f32.xlu0 %v198
    %v202 = vpop.xlane.xlu0 %201
    %203 = vadd.xlane.f32.xlu0 %v200
    %v204 = vpop.xlane.xlu0 %203
    %v205 = vadd.f32 %v183, %v202
    %v206 = vadd.f32 %v184, %v204
    %207 = vst.msk [vmem:[#allocation3] sm:$0xff] %vm168, %v205
    %208 = vst.msk [vmem:[#allocation3 + $0x8] sm:$0xff] %vm168, %v206
    %209 = vst.msk [vmem:[#allocation2] sm:$0xff] %vm168, %v173
    %210 = vst.msk [vmem:[#allocation2 + $0x8] sm:$0xff] %vm168, %v174
    %v211 = vsub.s32 %v116, %v157
    %v212 = vsub.s32 %v117, %v157
    %vm213 = vcmp.ge.s32.totalorder %v211, 0
    %vm214 = vcmp.ge.s32.totalorder %v212, 0
    %vm215 = vcmp.lt.s32.totalorder %v211, 128
    %vm216 = vcmp.lt.s32.totalorder %v212, 128
    %vm217 = vmand %vm213, %vm215
    %vm218 = vmand %vm214, %vm216
    %219 = vset.pattern.permute.xlu0 0
    %220 = vperm.xlu0 %219, %v211
    %v221 = vpop.permute.xlu0 %220
    %222 = vset.pattern.permute.xlu0 0
    %223 = vperm.xlu0 %222, %v212
    %v224 = vpop.permute.xlu0 %223
    %vm225 = vcmp.eq.s32.totalorder %v123, %v221
    %vm226 = vcmp.eq.s32.totalorder %v123, %v224
    %v227 = vsel %vm225, %v106, 0.0
    %v228 = vsel %vm226, %v109, 0.0
    %229 = vadd.xlane.f32.xlu0 %v227
    %v230 = vpop.xlane.xlu0 %229
    %231 = vadd.xlane.f32.xlu0 %v228
    %v232 = vpop.xlane.xlu0 %231
    %v233 = vld [vmem:[#allocation5] sm:$0xff]
    %v234 = vld [vmem:[#allocation5 + $0x8] sm:$0xff]
    %v235 = vsel %vm217, %v230, 0.0
    %v236 = vsel %vm218, %v232, 0.0
    %v237 = vadd.f32 %v233, %v235
    %v238 = vadd.f32 %v234, %v236
    %239 = vst.msk [vmem:[#allocation5] sm:$0xff] %vm168, %v237
    %240 = vst.msk [vmem:[#allocation5 + $0x8] sm:$0xff] %vm168, %v238
    // Predicated region
    $region22: #{bart_generator_train_forward.9} parent=1 // pred_check
      %p241 = pneg %p22
    $region23: #{bart_generator_train_forward.9} parent=1 // pred_check_branch
      %243 = sbr.rel (%p241) target = $region25
    $region24: #{bart_generator_train_forward.9} parent=1 // pred_region
      %v244 = vld [vmem:[#allocation2] sm:$0xff]
      %v245 = vld [vmem:[#allocation2 + $0x8] sm:$0xff]
      %v246 = vld [vmem:[#allocation3] sm:$0xff]
      %v247 = vld [vmem:[#allocation3 + $0x8] sm:$0xff]
      %v248 = vlog2.pop %v246
      %v249 = vmul.f32 %v248, 0.6931472
      %v250 = vlog2.pop %v247
      %v251 = vmul.f32 %v250, 0.6931472
      %v252 = vadd.f32 %v244, %v249
      %v253 = vadd.f32 %v245, %v251
      %v254 = vld [vmem:[#allocation5] sm:$0xff]
      %v255 = vld [vmem:[#allocation5 + $0x8] sm:$0xff]
      %v256 = vsub.f32 %v252, %v254
      %v257 = vsub.f32 %v253, %v255
      %258 = vst.msk [vmem:[%s5] sm:$0xff] %vm168, %v256
      %259 = vst.msk [vmem:[%s5 + $0x8] sm:$0xff] %vm168, %v257
      %v260 = vld [vmem:[#allocation4] sm:$0xff]
      %v261 = vld [vmem:[#allocation4 + $0x8] sm:$0xff]
      %262 = vst.msk [vmem:[%s6] sm:$0xff] %vm168, %v260
      %263 = vst.msk [vmem:[%s6 + $0x8] sm:$0xff] %vm168, %v261
    $region25: #{bart_generator_train_forward.9} parent=1 // pred_fallthru
      _
    // Predicated region
    $region26: #{bart_generator_train_forward.9} parent=1 // pred_check
      _
    $region27: #{bart_generator_train_forward.9} parent=1 // pred_check_branch
      %265 = sbr.rel (0) target = $region29
    $region28: #{bart_generator_train_forward.9} parent=1 // pred_region
      %s267 = ssub.s32 128, 128
      %268 = vsyncadd [#allocation7], %s267
      %s269 = sshll.u32 [#allocation6], 4
      %s270 = int_to_ptr.vmem [resolvable:$true] %s269
      %275 = dma.vmem_to_hbm [thread:$0]  %s270, 128, %s4, [#allocation7], 64, 64, 4
    $region29: #{bart_generator_train_forward.9} parent=1 // pred_fallthru
      _
    // Predicated region
    $region30: #{bart_generator_train_forward.9} parent=1 // pred_check
      _
    $region31: #{bart_generator_train_forward.9} parent=1 // pred_check_branch
      %277 = sbr.rel (0) target = $region33
    $region32: #{bart_generator_train_forward.9} parent=1 // pred_region
      _
    $region33: #{bart_generator_train_forward.9} parent=1 // pred_fallthru
      _
    // Predicated region
    $region34: #{bart_generator_train_forward.9} parent=1 // pred_check
      _
    $region35: #{bart_generator_train_forward.9} parent=1 // pred_check_branch
      %279 = sbr.rel (0) target = $region37
    $region36: #{bart_generator_train_forward.9} parent=1 // pred_region
      _
    $region37: #{bart_generator_train_forward.9} parent=1 // pred_fallthru
      _
    // Predicated region
    $region38: #{bart_generator_train_forward.9} parent=1 // pred_check
      _
    $region39: #{bart_generator_train_forward.9} parent=1 // pred_check_branch
      %281 = sbr.rel (0) target = $region41
    $region40: #{bart_generator_train_forward.9} parent=1 // pred_region
      %282 = dma.done [#allocation7], 128
    $region41: #{bart_generator_train_forward.9} parent=1 // pred_fallthru
      _
    // Predicated region
    $region42: #{bart_generator_train_forward.9} parent=1 // pred_check
      _
    $region43: #{bart_generator_train_forward.9} parent=1 // pred_check_branch
      %284 = sbr.rel (0) target = $region45
    $region44: #{bart_generator_train_forward.9} parent=1 // pred_region
      _
    $region45: #{bart_generator_train_forward.9} parent=1 // pred_fallthru
      _
    // Predicated region
    $region46: #{bart_generator_train_forward.9} parent=1 // pred_check
      _
    $region47: #{bart_generator_train_forward.9} parent=1 // pred_check_branch
      %286 = sbr.rel (0) target = $region49
    $region48: #{bart_generator_train_forward.9} parent=1 // pred_region
      _
    $region49: #{bart_generator_train_forward.9} parent=1 // pred_fallthru
      _
    %287 = vsyncpa [#allocation7], 1

// kernel: bart_generator_train_forward.6
$region0: #{bart_generator_train_forward.6}
  #allocation0 [shape = 'u32[]', space=smem, size = 0x4, offset = 0x4, fixed_abs, tag = 'smem constant byte address 0x4 - core index']
  #allocation1 [shape = 'u32[144,128]{1,0:T(1,128)}', space=vmem, size = 0x12000, scoped, tag = 'internal scratch']
  %s0 = inlined_call_operand.vmem [shape: f32[2,8,32], index: 0, kind: input, shape index: {}]
  %s1 = inlined_call_operand.vmem [shape: f32[2,1,8], index: 1, kind: input, shape index: {}]
  %s2 = inlined_call_operand.vmem [shape: bf16[32,96], index: 2, kind: input, shape index: {}]
  %s3 = inlined_call_operand.vmem [shape: f32[1,1,96], index: 3, kind: input, shape index: {}]
  %s4 = inlined_call_operand.vmem [shape: bf16[32,32], index: 4, kind: input, shape index: {}]
  %s5 = inlined_call_operand.vmem [shape: f32[1,1,32], index: 5, kind: input, shape index: {}]
  %s6 = inlined_call_operand.vmem [shape: f32[1,1,32], index: 6, kind: input, shape index: {}]
  %s7 = inlined_call_operand.vmem [shape: f32[1,1,32], index: 7, kind: input, shape index: {}]
  %s8 = inlined_call_operand.vmem [shape: bf16[32,64], index: 8, kind: input, shape index: {}]
  %s9 = inlined_call_operand.vmem [shape: f32[1,1,64], index: 9, kind: input, shape index: {}]
  %s10 = inlined_call_operand.vmem [shape: bf16[64,32], index: 10, kind: input, shape index: {}]
  %s11 = inlined_call_operand.vmem [shape: f32[1,1,32], index: 11, kind: input, shape index: {}]
  %s12 = inlined_call_operand.vmem [shape: f32[1,1,32], index: 12, kind: input, shape index: {}]
  %s13 = inlined_call_operand.vmem [shape: f32[1,1,32], index: 13, kind: input, shape index: {}]
  %s14 = inlined_call_operand.vmem [shape: f32[2,8,32], index: 14, kind: output, shape index: {}]
  %s15 = sld [smem:[#allocation0]]
  $region89: #{bart_generator_train_forward.6} parent=0
    _
  %s17 = ssub.s32 1, %s15
  %s18 = scalar_select 0, %s17, %s15
  loop: start=0, step=1, limit=4
  $region2: #{bart_generator_train_forward.6} parent=0 // loop_pre_header
    _
  $region3: #{bart_generator_train_forward.6} parent=0 // loop_header
    %s20 = sphi 0, %s24
    %p21 = scmp.ge.s32.totalorder %s20, 4
    %s30 = sphi 0, %s32
    %s33 = sphi 0, %s30
    %s34 = sphi 0, %s33
    %s50 = sphi 0, %s34
    %s56 = sphi 0, %s58
    %s59 = sphi 0, %s56
    %s60 = sphi 0, %s59
    %s76 = sphi 0, %s60
    %s80 = sphi 0, %s80
    %s82 = sphi 0, %s80
    %s83 = sphi 0, %s82
    %s97 = sphi 0, %s83
    %s101 = sphi 0, %s101
    %s103 = sphi 0, %s101
    %s104 = sphi 0, %s103
    %s118 = sphi 0, %s104
    %s122 = sphi 0, %s122
    %s124 = sphi 0, %s122
    %s125 = sphi 0, %s124
    %s139 = sphi 0, %s125
    %s143 = sphi 0, %s143
    %s145 = sphi 0, %s143
    %s146 = sphi 0, %s145
    %s160 = sphi 0, %s146
    %s164 = sphi 0, %s164
    %s166 = sphi 0, %s164
    %s167 = sphi 0, %s166
    %s181 = sphi 0, %s167
    %s185 = sphi 0, %s185
    %s187 = sphi 0, %s185
    %s188 = sphi 0, %s187
    %s202 = sphi 0, %s188
    %s206 = sphi 0, %s206
    %s208 = sphi 0, %s206
    %s209 = sphi 0, %s208
    %s223 = sphi 0, %s209
    %s227 = sphi 0, %s227
    %s229 = sphi 0, %s227
    %s230 = sphi 0, %s229
    %s244 = sphi 0, %s230
    %s248 = sphi 0, %s248
    %s250 = sphi 0, %s248
    %s251 = sphi 0, %s250
    %s265 = sphi 0, %s251
    %s269 = sphi 0, %s269
    %s271 = sphi 0, %s269
    %s272 = sphi 0, %s271
    %s286 = sphi 0, %s272
    %s290 = sphi 0, %s290
    %s292 = sphi 0, %s290
    %s293 = sphi 0, %s292
    %s307 = sphi 0, %s293
    %s311 = sphi 0, %s311
    %s313 = sphi 0, %s311
    %s314 = sphi 0, %s313
    %s328 = sphi 0, %s314
    %s334 = sphi 0, %s336
    %s337 = sphi 0, %s334
    %s338 = sphi 0, %s337
    %s354 = sphi 0, %s338
  $region4: #{bart_generator_train_forward.6} parent=0 // loop_header_branch
    %23 = sbr.rel (%p21) target = $region8
  $region5: #{bart_generator_train_forward.6} parent=0 // loop_body
    %s25 = ssub.s32 %s20, 1
    %s26 = ssub.s32 %s20, 2
    %s27 = sadd.s32 %s20, 1
    %s28 = ssub.s32 %s20, %s27
    %p29 = scmp.eq.s32.totalorder %s28, 0
    %s31 = sadd.s32 %s30, 1
    %s32 = scalar_select %p29, %s30, %s31
    %p35 = pneg %p29
    %p36 = scmp.eq.s32.totalorder %s20, 1
    %p37 = por %p35, %p36
    %p38 = scmp.ne.s32.totalorder %s30, %s33
    %p39 = scmp.eq.s32.totalorder %s20, 0
    %p40 = por %p38, %p39
    %p41 = scmp.ne.s32.totalorder %s30, %s33
    %p42 = scmp.eq.s32.totalorder %s25, 1
    %p43 = por %p41, %p42
    %p44 = scmp.ne.s32.totalorder %s33, %s34
    %p45 = scmp.eq.s32.totalorder %s25, 0
    %p46 = por %p44, %p45
    %p47 = scmp.ne.s32.totalorder %s33, %s34
    %p48 = scmp.eq.s32.totalorder %s26, 1
    %p49 = por %p47, %p48
    %p51 = scmp.ne.s32.totalorder %s34, %s50
    %p52 = scmp.eq.s32.totalorder %s26, 0
    %p53 = por %p51, %p52
    %s54 = ssub.s32 %s20, %s27
    %p55 = scmp.eq.s32.totalorder %s54, 0
    %s57 = sadd.s32 %s56, 1
    %s58 = scalar_select %p55, %s56, %s57
    %p61 = pneg %p55
    %p62 = scmp.eq.s32.totalorder %s20, 1
    %p63 = por %p61, %p62
    %p64 = scmp.ne.s32.totalorder %s56, %s59
    %p65 = scmp.eq.s32.totalorder %s20, 0
    %p66 = por %p64, %p65
    %p67 = scmp.ne.s32.totalorder %s56, %s59
    %p68 = scmp.eq.s32.totalorder %s25, 1
    %p69 = por %p67, %p68
    %p70 = scmp.ne.s32.totalorder %s59, %s60
    %p71 = scmp.eq.s32.totalorder %s25, 0
    %p72 = por %p70, %p71
    %p73 = scmp.ne.s32.totalorder %s59, %s60
    %p74 = scmp.eq.s32.totalorder %s26, 1
    %p75 = por %p73, %p74
    %p77 = scmp.ne.s32.totalorder %s60, %s76
    %p78 = scmp.eq.s32.totalorder %s26, 0
    %p79 = por %p77, %p78
    %s81 = sadd.s32 %s80, 1
    %p84 = scmp.eq.s32.totalorder %s20, 1
    %p85 = scmp.ne.s32.totalorder %s80, %s82
    %p86 = scmp.eq.s32.totalorder %s20, 0
    %p87 = por %p85, %p86
    %p88 = scmp.ne.s32.totalorder %s80, %s82
    %p89 = scmp.eq.s32.totalorder %s25, 1
    %p90 = por %p88, %p89
    %p91 = scmp.ne.s32.totalorder %s82, %s83
    %p92 = scmp.eq.s32.totalorder %s25, 0
    %p93 = por %p91, %p92
    %p94 = scmp.ne.s32.totalorder %s82, %s83
    %p95 = scmp.eq.s32.totalorder %s26, 1
    %p96 = por %p94, %p95
    %p98 = scmp.ne.s32.totalorder %s83, %s97
    %p99 = scmp.eq.s32.totalorder %s26, 0
    %p100 = por %p98, %p99
    %s102 = sadd.s32 %s101, 1
    %p105 = scmp.eq.s32.totalorder %s20, 1
    %p106 = scmp.ne.s32.totalorder %s101, %s103
    %p107 = scmp.eq.s32.totalorder %s20, 0
    %p108 = por %p106, %p107
    %p109 = scmp.ne.s32.totalorder %s101, %s103
    %p110 = scmp.eq.s32.totalorder %s25, 1
    %p111 = por %p109, %p110
    %p112 = scmp.ne.s32.totalorder %s103, %s104
    %p113 = scmp.eq.s32.totalorder %s25, 0
    %p114 = por %p112, %p113
    %p115 = scmp.ne.s32.totalorder %s103, %s104
    %p116 = scmp.eq.s32.totalorder %s26, 1
    %p117 = por %p115, %p116
    %p119 = scmp.ne.s32.totalorder %s104, %s118
    %p120 = scmp.eq.s32.totalorder %s26, 0
    %p121 = por %p119, %p120
    %s123 = sadd.s32 %s122, 1
    %p126 = scmp.eq.s32.totalorder %s20, 1
    %p127 = scmp.ne.s32.totalorder %s122, %s124
    %p128 = scmp.eq.s32.totalorder %s20, 0
    %p129 = por %p127, %p128
    %p130 = scmp.ne.s32.totalorder %s122, %s124
    %p131 = scmp.eq.s32.totalorder %s25, 1
    %p132 = por %p130, %p131
    %p133 = scmp.ne.s32.totalorder %s124, %s125
    %p134 = scmp.eq.s32.totalorder %s25, 0
    %p135 = por %p133, %p134
    %p136 = scmp.ne.s32.totalorder %s124, %s125
    %p137 = scmp.eq.s32.totalorder %s26, 1
    %p138 = por %p136, %p137
    %p140 = scmp.ne.s32.totalorder %s125, %s139
    %p141 = scmp.eq.s32.totalorder %s26, 0
    %p142 = por %p140, %p141
    %s144 = sadd.s32 %s143, 1
    %p147 = scmp.eq.s32.totalorder %s20, 1
    %p148 = scmp.ne.s32.totalorder %s143, %s145
    %p149 = scmp.eq.s32.totalorder %s20, 0
    %p150 = por %p148, %p149
    %p151 = scmp.ne.s32.totalorder %s143, %s145
    %p152 = scmp.eq.s32.totalorder %s25, 1
    %p153 = por %p151, %p152
    %p154 = scmp.ne.s32.totalorder %s145, %s146
    %p155 = scmp.eq.s32.totalorder %s25, 0
    %p156 = por %p154, %p155
    %p157 = scmp.ne.s32.totalorder %s145, %s146
    %p158 = scmp.eq.s32.totalorder %s26, 1
    %p159 = por %p157, %p158
    %p161 = scmp.ne.s32.totalorder %s146, %s160
    %p162 = scmp.eq.s32.totalorder %s26, 0
    %p163 = por %p161, %p162
    %s165 = sadd.s32 %s164, 1
    %p168 = scmp.eq.s32.totalorder %s20, 1
    %p169 = scmp.ne.s32.totalorder %s164, %s166
    %p170 = scmp.eq.s32.totalorder %s20, 0
    %p171 = por %p169, %p170
    %p172 = scmp.ne.s32.totalorder %s164, %s166
    %p173 = scmp.eq.s32.totalorder %s25, 1
    %p174 = por %p172, %p173
    %p175 = scmp.ne.s32.totalorder %s166, %s167
    %p176 = scmp.eq.s32.totalorder %s25, 0
    %p177 = por %p175, %p176
    %p178 = scmp.ne.s32.totalorder %s166, %s167
    %p179 = scmp.eq.s32.totalorder %s26, 1
    %p180 = por %p178, %p179
    %p182 = scmp.ne.s32.totalorder %s167, %s181
    %p183 = scmp.eq.s32.totalorder %s26, 0
    %p184 = por %p182, %p183
    %s186 = sadd.s32 %s185, 1
    %p189 = scmp.eq.s32.totalorder %s20, 1
    %p190 = scmp.ne.s32.totalorder %s185, %s187
    %p191 = scmp.eq.s32.totalorder %s20, 0
    %p192 = por %p190, %p191
    %p193 = scmp.ne.s32.totalorder %s185, %s187
    %p194 = scmp.eq.s32.totalorder %s25, 1
    %p195 = por %p193, %p194
    %p196 = scmp.ne.s32.totalorder %s187, %s188
    %p197 = scmp.eq.s32.totalorder %s25, 0
    %p198 = por %p196, %p197
    %p199 = scmp.ne.s32.totalorder %s187, %s188
    %p200 = scmp.eq.s32.totalorder %s26, 1
    %p201 = por %p199, %p200
    %p203 = scmp.ne.s32.totalorder %s188, %s202
    %p204 = scmp.eq.s32.totalorder %s26, 0
    %p205 = por %p203, %p204
    %s207 = sadd.s32 %s206, 1
    %p210 = scmp.eq.s32.totalorder %s20, 1
    %p211 = scmp.ne.s32.totalorder %s206, %s208
    %p212 = scmp.eq.s32.totalorder %s20, 0
    %p213 = por %p211, %p212
    %p214 = scmp.ne.s32.totalorder %s206, %s208
    %p215 = scmp.eq.s32.totalorder %s25, 1
    %p216 = por %p214, %p215
    %p217 = scmp.ne.s32.totalorder %s208, %s209
    %p218 = scmp.eq.s32.totalorder %s25, 0
    %p219 = por %p217, %p218
    %p220 = scmp.ne.s32.totalorder %s208, %s209
    %p221 = scmp.eq.s32.totalorder %s26, 1
    %p222 = por %p220, %p221
    %p224 = scmp.ne.s32.totalorder %s209, %s223
    %p225 = scmp.eq.s32.totalorder %s26, 0
    %p226 = por %p224, %p225
    %s228 = sadd.s32 %s227, 1
    %p231 = scmp.eq.s32.totalorder %s20, 1
    %p232 = scmp.ne.s32.totalorder %s227, %s229
    %p233 = scmp.eq.s32.totalorder %s20, 0
    %p234 = por %p232, %p233
    %p235 = scmp.ne.s32.totalorder %s227, %s229
    %p236 = scmp.eq.s32.totalorder %s25, 1
    %p237 = por %p235, %p236
    %p238 = scmp.ne.s32.totalorder %s229, %s230
    %p239 = scmp.eq.s32.totalorder %s25, 0
    %p240 = por %p238, %p239
    %p241 = scmp.ne.s32.totalorder %s229, %s230
    %p242 = scmp.eq.s32.totalorder %s26, 1
    %p243 = por %p241, %p242
    %p245 = scmp.ne.s32.totalorder %s230, %s244
    %p246 = scmp.eq.s32.totalorder %s26, 0
    %p247 = por %p245, %p246
    %s249 = sadd.s32 %s248, 1
    %p252 = scmp.eq.s32.totalorder %s20, 1
    %p253 = scmp.ne.s32.totalorder %s248, %s250
    %p254 = scmp.eq.s32.totalorder %s20, 0
    %p255 = por %p253, %p254
    %p256 = scmp.ne.s32.totalorder %s248, %s250
    %p257 = scmp.eq.s32.totalorder %s25, 1
    %p258 = por %p256, %p257
    %p259 = scmp.ne.s32.totalorder %s250, %s251
    %p260 = scmp.eq.s32.totalorder %s25, 0
    %p261 = por %p259, %p260
    %p262 = scmp.ne.s32.totalorder %s250, %s251
    %p263 = scmp.eq.s32.totalorder %s26, 1
    %p264 = por %p262, %p263
    %p266 = scmp.ne.s32.totalorder %s251, %s265
    %p267 = scmp.eq.s32.totalorder %s26, 0
    %p268 = por %p266, %p267
    %s270 = sadd.s32 %s269, 1
    %p273 = scmp.eq.s32.totalorder %s20, 1
    %p274 = scmp.ne.s32.totalorder %s269, %s271
    %p275 = scmp.eq.s32.totalorder %s20, 0
    %p276 = por %p274, %p275
    %p277 = scmp.ne.s32.totalorder %s269, %s271
    %p278 = scmp.eq.s32.totalorder %s25, 1
    %p279 = por %p277, %p278
    %p280 = scmp.ne.s32.totalorder %s271, %s272
    %p281 = scmp.eq.s32.totalorder %s25, 0
    %p282 = por %p280, %p281
    %p283 = scmp.ne.s32.totalorder %s271, %s272
    %p284 = scmp.eq.s32.totalorder %s26, 1
    %p285 = por %p283, %p284
    %p287 = scmp.ne.s32.totalorder %s272, %s286
    %p288 = scmp.eq.s32.totalorder %s26, 0
    %p289 = por %p287, %p288
    %s291 = sadd.s32 %s290, 1
    %p294 = scmp.eq.s32.totalorder %s20, 1
    %p295 = scmp.ne.s32.totalorder %s290, %s292
    %p296 = scmp.eq.s32.totalorder %s20, 0
    %p297 = por %p295, %p296
    %p298 = scmp.ne.s32.totalorder %s290, %s292
    %p299 = scmp.eq.s32.totalorder %s25, 1
    %p300 = por %p298, %p299
    %p301 = scmp.ne.s32.totalorder %s292, %s293
    %p302 = scmp.eq.s32.totalorder %s25, 0
    %p303 = por %p301, %p302
    %p304 = scmp.ne.s32.totalorder %s292, %s293
    %p305 = scmp.eq.s32.totalorder %s26, 1
    %p306 = por %p304, %p305
    %p308 = scmp.ne.s32.totalorder %s293, %s307
    %p309 = scmp.eq.s32.totalorder %s26, 0
    %p310 = por %p308, %p309
    %s312 = sadd.s32 %s311, 1
    %p315 = scmp.eq.s32.totalorder %s20, 1
    %p316 = scmp.ne.s32.totalorder %s311, %s313
    %p317 = scmp.eq.s32.totalorder %s20, 0
    %p318 = por %p316, %p317
    %p319 = scmp.ne.s32.totalorder %s311, %s313
    %p320 = scmp.eq.s32.totalorder %s25, 1
    %p321 = por %p319, %p320
    %p322 = scmp.ne.s32.totalorder %s313, %s314
    %p323 = scmp.eq.s32.totalorder %s25, 0
    %p324 = por %p322, %p323
    %p325 = scmp.ne.s32.totalorder %s313, %s314
    %p326 = scmp.eq.s32.totalorder %s26, 1
    %p327 = por %p325, %p326
    %p329 = scmp.ne.s32.totalorder %s314, %s328
    %p330 = scmp.eq.s32.totalorder %s26, 0
    %p331 = por %p329, %p330
    %s332 = ssub.s32 %s20, %s27
    %p333 = scmp.eq.s32.totalorder %s332, 0
    %s335 = sadd.s32 %s334, 1
    %s336 = scalar_select %p333, %s334, %s335
    %p339 = pneg %p333
    %p340 = scmp.eq.s32.totalorder %s20, 1
    %p341 = por %p339, %p340
    %p342 = scmp.ne.s32.totalorder %s334, %s337
    %p343 = scmp.eq.s32.totalorder %s20, 0
    %p344 = por %p342, %p343
    %p345 = scmp.ne.s32.totalorder %s334, %s337
    %p346 = scmp.eq.s32.totalorder %s25, 1
    %p347 = por %p345, %p346
    %p348 = scmp.ne.s32.totalorder %s337, %s338
    %p349 = scmp.eq.s32.totalorder %s25, 0
    %p350 = por %p348, %p349
    %p351 = scmp.ne.s32.totalorder %s337, %s338
    %p352 = scmp.eq.s32.totalorder %s26, 1
    %p353 = por %p351, %p352
    %p355 = scmp.ne.s32.totalorder %s338, %s354
    %p356 = scmp.eq.s32.totalorder %s26, 0
    %p357 = por %p355, %p356
    %p358 = scmp.le.s32.totalorder 1, %s20
    %p359 = scmp.lt.s32.totalorder %s20, 3
    %p360 = pnand %p358, %p359
    %p361 = pneg %p360
    // Predicated region
    $region9: #{bart_generator_train_forward.6} parent=5 // pred_check
      _
    $region10: #{bart_generator_train_forward.6} parent=5 // pred_check_branch
      %363 = sbr.rel (%p360) target = $region12
    $region11: #{bart_generator_train_forward.6} parent=5 // pred_region
      %s364 = ssub.s32 %s20, 1
      // Predicated region
      $region13: #{bart_generator_train_forward.6} parent=11 // pred_check
        %p365 = pneg %p93
      $region14: #{bart_generator_train_forward.6} parent=11 // pred_check_branch
        %367 = sbr.rel (%p365) target = $region16
      $region15: #{bart_generator_train_forward.6} parent=11 // pred_region
        _
      $region16: #{bart_generator_train_forward.6} parent=11 // pred_fallthru
        _
      // Predicated region
      $region17: #{bart_generator_train_forward.6} parent=11 // pred_check
        %p368 = pneg %p114
      $region18: #{bart_generator_train_forward.6} parent=11 // pred_check_branch
        %370 = sbr.rel (%p368) target = $region20
      $region19: #{bart_generator_train_forward.6} parent=11 // pred_region
        _
      $region20: #{bart_generator_train_forward.6} parent=11 // pred_fallthru
        _
      // Predicated region
      $region21: #{bart_generator_train_forward.6} parent=11 // pred_check
        %p371 = pneg %p135
      $region22: #{bart_generator_train_forward.6} parent=11 // pred_check_branch
        %373 = sbr.rel (%p371) target = $region24
      $region23: #{bart_generator_train_forward.6} parent=11 // pred_region
        _
      $region24: #{bart_generator_train_forward.6} parent=11 // pred_fallthru
        _
      // Predicated region
      $region25: #{bart_generator_train_forward.6} parent=11 // pred_check
        %p374 = pneg %p156
      $region26: #{bart_generator_train_forward.6} parent=11 // pred_check_branch
        %376 = sbr.rel (%p374) target = $region28
      $region27: #{bart_generator_train_forward.6} parent=11 // pred_region
        _
      $region28: #{bart_generator_train_forward.6} parent=11 // pred_fallthru
        _
      // Predicated region
      $region29: #{bart_generator_train_forward.6} parent=11 // pred_check
        %p377 = pneg %p177
      $region30: #{bart_generator_train_forward.6} parent=11 // pred_check_branch
        %379 = sbr.rel (%p377) target = $region32
      $region31: #{bart_generator_train_forward.6} parent=11 // pred_region
        _
      $region32: #{bart_generator_train_forward.6} parent=11 // pred_fallthru
        _
      // Predicated region
      $region33: #{bart_generator_train_forward.6} parent=11 // pred_check
        %p380 = pneg %p198
      $region34: #{bart_generator_train_forward.6} parent=11 // pred_check_branch
        %382 = sbr.rel (%p380) target = $region36
      $region35: #{bart_generator_train_forward.6} parent=11 // pred_region
        _
      $region36: #{bart_generator_train_forward.6} parent=11 // pred_fallthru
        _
      // Predicated region
      $region37: #{bart_generator_train_forward.6} parent=11 // pred_check
        %p383 = pneg %p219
      $region38: #{bart_generator_train_forward.6} parent=11 // pred_check_branch
        %385 = sbr.rel (%p383) target = $region40
      $region39: #{bart_generator_train_forward.6} parent=11 // pred_region
        _
      $region40: #{bart_generator_train_forward.6} parent=11 // pred_fallthru
        _
      // Predicated region
      $region41: #{bart_generator_train_forward.6} parent=11 // pred_check
        %p386 = pneg %p240
      $region42: #{bart_generator_train_forward.6} parent=11 // pred_check_branch
        %388 = sbr.rel (%p386) target = $region44
      $region43: #{bart_generator_train_forward.6} parent=11 // pred_region
        _
      $region44: #{bart_generator_train_forward.6} parent=11 // pred_fallthru
        _
      // Predicated region
      $region45: #{bart_generator_train_forward.6} parent=11 // pred_check
        %p389 = pneg %p261
      $region46: #{bart_generator_train_forward.6} parent=11 // pred_check_branch
        %391 = sbr.rel (%p389) target = $region48
      $region47: #{bart_generator_train_forward.6} parent=11 // pred_region
        _
      $region48: #{bart_generator_train_forward.6} parent=11 // pred_fallthru
        _
      // Predicated region
      $region49: #{bart_generator_train_forward.6} parent=11 // pred_check
        %p392 = pneg %p282
      $region50: #{bart_generator_train_forward.6} parent=11 // pred_check_branch
        %394 = sbr.rel (%p392) target = $region52
      $region51: #{bart_generator_train_forward.6} parent=11 // pred_region
        _
      $region52: #{bart_generator_train_forward.6} parent=11 // pred_fallthru
        _
      // Predicated region
      $region53: #{bart_generator_train_forward.6} parent=11 // pred_check
        %p395 = pneg %p303
      $region54: #{bart_generator_train_forward.6} parent=11 // pred_check_branch
        %397 = sbr.rel (%p395) target = $region56
      $region55: #{bart_generator_train_forward.6} parent=11 // pred_region
        _
      $region56: #{bart_generator_train_forward.6} parent=11 // pred_fallthru
        _
      // Predicated region
      $region57: #{bart_generator_train_forward.6} parent=11 // pred_check
        %p398 = pneg %p324
      $region58: #{bart_generator_train_forward.6} parent=11 // pred_check_branch
        %400 = sbr.rel (%p398) target = $region60
      $region59: #{bart_generator_train_forward.6} parent=11 // pred_region
        _
      $region60: #{bart_generator_train_forward.6} parent=11 // pred_fallthru
        _
    $region12: #{bart_generator_train_forward.6} parent=5 // pred_fallthru
      _
    %p401 = scmp.lt.s32.totalorder %s20, 2
    // Predicated region
    $region61: #{bart_generator_train_forward.6} parent=5 // pred_check
      %p402 = pneg %p401
    $region62: #{bart_generator_train_forward.6} parent=5 // pred_check_branch
      %404 = sbr.rel (%p402) target = $region64
    $region63: #{bart_generator_train_forward.6} parent=5 // pred_region
      // Predicated region
      $region65: #{bart_generator_train_forward.6} parent=63 // pred_check
        %p405 = pneg %p40
      $region66: #{bart_generator_train_forward.6} parent=63 // pred_check_branch
        %407 = sbr.rel (%p405) target = $region68
      $region67: #{bart_generator_train_forward.6} parent=63 // pred_region
        %p408 = scmp.lt.s32.totalorder %s20, 1
        %s409 = scalar_select %p408, %s20, 1
        %s410 = smul.addr %s409, 8
        %s411 = scalar_lea.vmem %s0, %s410
      $region68: #{bart_generator_train_forward.6} parent=63 // pred_fallthru
        _
      // Predicated region
      $region69: #{bart_generator_train_forward.6} parent=63 // pred_check
        %p412 = pneg %p66
      $region70: #{bart_generator_train_forward.6} parent=63 // pred_check_branch
        %414 = sbr.rel (%p412) target = $region72
      $region71: #{bart_generator_train_forward.6} parent=63 // pred_region
        %p415 = scmp.lt.s32.totalorder %s20, 1
        %s416 = scalar_select %p415, %s20, 1
        %s417 = scalar_lea.vmem %s1, %s416
      $region72: #{bart_generator_train_forward.6} parent=63 // pred_fallthru
        _
    $region64: #{bart_generator_train_forward.6} parent=5 // pred_fallthru
      _
    %p418 = scmp.le.s32.totalorder 1, %s20
    %p419 = scmp.lt.s32.totalorder %s20, 3
    %p420 = pnand %p418, %p419
    %p421 = pneg %p420
    // Predicated region
    $region73: #{bart_generator_train_forward.6} parent=5 // pred_check
      _
    $region74: #{bart_generator_train_forward.6} parent=5 // pred_check_branch
      %423 = sbr.rel (%p420) target = $region76
    $region75: #{bart_generator_train_forward.6} parent=5 // pred_region
      %s424 = ssub.s32 %s20, 1
      %p425 = scmp.lt.s32.totalorder %s25, 1
      %s426 = scalar_select %p425, %s25, 1
      %s427 = smul.addr %s426, 8
      %s428 = scalar_lea.vmem %s0, %s427
      %p429 = pneg %p46
      %p430 = pneg %p43
      %p431 = scmp.lt.s32.totalorder %s25, 1
      %s432 = scalar_select %p431, %s25, 1
      %s433 = scalar_lea.vmem %s1, %s432
      %p434 = pneg %p72
      %p435 = pneg %p69
      %p436 = pneg %p93
      %p437 = pneg %p90
      %p438 = pneg %p114
      %p439 = pneg %p111
      %p440 = pneg %p135
      %p441 = pneg %p132
      %p442 = pneg %p156
      %p443 = pneg %p153
      %p444 = pneg %p177
      %p445 = pneg %p174
      %p446 = pneg %p198
      %p447 = pneg %p195
      %p448 = pneg %p219
      %p449 = pneg %p216
      %p450 = pneg %p240
      %p451 = pneg %p237
      %p452 = pneg %p261
      %p453 = pneg %p258
      %p454 = pneg %p282
      %p455 = pneg %p279
      %p456 = pneg %p303
      %p457 = pneg %p300
      %p458 = pneg %p324
      %p459 = pneg %p321
      %p460 = pneg %p350
      %p461 = pneg %p347
      %p462 = scmp.lt.s32.totalorder %s25, 1
      %s463 = scalar_select %p462, %s25, 1
      %s464 = smul.addr %s463, 8
      %s465 = scalar_lea.vmem %s14, %s464
      %p466 = scmp.lt.s32.totalorder %s25, 1
      %s467 = scalar_select %p466, %s25, 1
      %s468 = smul.addr %s467, 8
      %s469 = scalar_lea.vmem %s0, %s468
      %p470 = scmp.lt.s32.totalorder %s25, 1
      %s471 = scalar_select %p470, %s25, 1
      %s472 = scalar_lea.vmem %s1, %s471
      %p473 = scmp.lt.s32.totalorder %s25, 1
      %s474 = scalar_select %p473, %s25, 1
      %s475 = smul.addr %s474, 8
      %s476 = scalar_lea.vmem %s14, %s475
      %v478 = vld [vmem:[%s469] sm:$0xff]
      %v479 = vld [vmem:[%s2] sm:$0xf]
      %v480 = vld [vmem:[%s2 + $0x4] sm:$0xf]
      %v481 = vld [vmem:[%s2 + $0x8] sm:$0xf]
      %v482 = vld [vmem:[%s2 + $0xc] sm:$0xf]
      %v483 = vld [vmem:[%s3] sm:$0x1]
      %v484 = vpack.c.bf16 %v478, %v478
      %v486 = vlaneseq
      %v487 = vshrl.u32 %v486, 7
      %v488 = vsub.s32 0, %v487
      %v489 = vrot.slane %v483, %v488
      %v495 = vunpack.c.l.b16 %v479
      %v496 = vunpack.c.l.b16 %v480
      %v497 = vunpack.c.l.b16 %v481
      %v498 = vunpack.c.l.b16 %v482
      %v499 = vpack.c.b16 %v496, %v495
      %v500 = vpack.c.b16 %v498, %v497
      %vm503 = vcmask 261120
      %v505 = vsel %vm503, %v484, 0
      %507 = vmatprep.subr.bf16.mxu0 0
      %508 = vmatpush1.bf16.msra.mxu0 %v499
      %509 = vmatprep.subr.bf16.mxu0 0
      %510 = vmatpush1.bf16.msra.mxu0 %v500
      %511 = vmatprep.subr.bf16.mxu0 0
      %512 = vmatpush1.bf16.msra.mxu0 0
      %513 = vmatprep.subr.bf16.mxu0 0
      %514 = vmatpush1.bf16.msra.mxu0 0
      %515 = vmatprep.subr.bf16.mxu0 0
      %516 = vmatpush1.bf16.msra.mxu0 0
      %517 = vmatprep.subr.bf16.mxu0 0
      %518 = vmatpush1.bf16.msra.mxu0 0
      %519 = vmatprep.subr.bf16.mxu0 0
      %520 = vmatpush1.bf16.msra.mxu0 0
      %521 = vmatprep.subr.bf16.mxu0 0
      %522 = vmatpush1.bf16.msra.mxu0 0
      %523 = vmatprep.subr.bf16.mxu0 0
      %524 = vmatpush1.bf16.msra.mxu0 0
      %525 = vmatprep.subr.bf16.mxu0 0
      %526 = vmatpush1.bf16.msra.mxu0 0
      %527 = vmatprep.subr.bf16.mxu0 0
      %528 = vmatpush1.bf16.msra.mxu0 0
      %529 = vmatprep.subr.bf16.mxu0 0
      %530 = vmatpush1.bf16.msra.mxu0 0
      %531 = vmatprep.subr.bf16.mxu0 0
      %532 = vmatpush1.bf16.msra.mxu0 0
      %533 = vmatprep.subr.bf16.mxu0 0
      %534 = vmatpush1.bf16.msra.mxu0 0
      %535 = vmatprep.subr.bf16.mxu0 0
      %536 = vmatpush1.bf16.msra.mxu0 0
      %537 = vmatprep.subr.bf16.mxu0 0
      %538 = vmatpush1.bf16.msra.mxu0 0
      %539 = vmatprep.mubr.bf16.mxu0 0
      %540 = vmatmul.mubr.bf16.gmra.mrb[0].mxu0 %v505
      %v541 = vpop.f32.mrb[0].mxu0
      %v542 = vadd.f32 %v489, %v541
      %v543 = vpop.f32.mrb[0].mxu0
      %v544 = vpop.f32.mrb[0].mxu0
      %v545 = vpop.f32.mrb[0].mxu0
      %546 = vdwg.mxu0
      %v547 = vld [vmem:[%s472] sm:$0x1]
      %v548 = vld [vmem:[%s4] sm:$0xf]
      %v549 = vld [vmem:[%s4 + $0x4] sm:$0xf]
      %v550 = vld [vmem:[%s4 + $0x8] sm:$0xf]
      %v551 = vld [vmem:[%s4 + $0xc] sm:$0xf]
      %v552 = vld [vmem:[%s5] sm:$0x1]
      %v553 = vpack.c.bf16 %v542, %v542
      %555 = vrot.lane.b32.xlu0 %v553, 96
      %v556 = vpop.permute.xlu0 %555
      %vm557 = vcmask 130048
      %v559 = vsel %vm557, %v553, 0
      %v562 = vsel %vm557, %v556, 0
      %564 = vmatprep.subr.bf16.mxu0 0
      %565 = vmatpush1.bf16.xpose.msra.mxu0 %v562
      %566 = vmatprep.subr.bf16.mxu0 0
      %567 = vmatpush1.bf16.xpose.msra.mxu0 0
      %568 = vmatprep.subr.bf16.mxu0 0
      %569 = vmatpush1.bf16.xpose.msra.mxu0 0
      %570 = vmatprep.subr.bf16.mxu0 0
      %571 = vmatpush1.bf16.xpose.msra.mxu0 0
      %572 = vmatprep.subr.bf16.mxu0 0
      %573 = vmatpush1.bf16.xpose.msra.mxu0 0
      %574 = vmatprep.subr.bf16.mxu0 0
      %575 = vmatpush1.bf16.xpose.msra.mxu0 0
      %576 = vmatprep.subr.bf16.mxu0 0
      %577 = vmatpush1.bf16.xpose.msra.mxu0 0
      %578 = vmatprep.subr.bf16.mxu0 0
      %579 = vmatpush1.bf16.xpose.msra.mxu0 0
      %580 = vmatprep.subr.bf16.mxu0 0
      %581 = vmatpush1.bf16.xpose.msra.mxu0 0
      %582 = vmatprep.subr.bf16.mxu0 0
      %583 = vmatpush1.bf16.xpose.msra.mxu0 0
      %584 = vmatprep.subr.bf16.mxu0 0
      %585 = vmatpush1.bf16.xpose.msra.mxu0 0
      %586 = vmatprep.subr.bf16.mxu0 0
      %587 = vmatpush1.bf16.xpose.msra.mxu0 0
      %588 = vmatprep.subr.bf16.mxu0 0
      %589 = vmatpush1.bf16.xpose.msra.mxu0 0
      %590 = vmatprep.subr.bf16.mxu0 0
      %591 = vmatpush1.bf16.xpose.msra.mxu0 0
      %592 = vmatprep.subr.bf16.mxu0 0
      %593 = vmatpush1.bf16.xpose.msra.mxu0 0
      %594 = vmatprep.subr.bf16.mxu0 0
      %595 = vmatpush1.bf16.xpose.msra.mxu0 0
      %596 = vmatprep.mubr.bf16.mxu0 0
      %597 = vmatmul.mubr.bf16.gmra.mrb[0].mxu0 %v559
      %v598 = vpop.f32.mrb[0].mxu0
      %v599 = vadd.f32 0.0, %v598
      %v600 = vpop.f32.mrb[0].mxu0
      %v601 = vpop.f32.mrb[0].mxu0
      %v602 = vpop.f32.mrb[0].mxu0
      %603 = vdwg.mxu0
      %v604 = vmul.f32 %v599, 0.25
      %v606 = vlaneseq
      %v607 = vshrl.u32 %v606, 7
      %v608 = vsub.s32 0, %v607
      %v609 = vrot.slane %v547, %v608
      %v611 = vadd.f32 %v604, %v609
      %vm612 = vcmask 64512
      %v613 = vsel %vm612, %v611, -inf
      %614 = vmax.xlane.f32.xlu0 %v613
      %v615 = vpop.xlane.xlu0 %614
      %v616 = vsub.f32 %v611, %v615
      %v617 = vmul.f32 %v616, 1.442695
      %v618 = vpow.pop %v617
      %v619 = vsel %vm612, %v618, 0.0
      %620 = vadd.xlane.f32.xlu0 %v619
      %v621 = vpop.xlane.xlu0 %620
      %v622 = vrcp.pop %v621
      %v623 = vmul.f32 %v618, %v622
      %v624 = vpack.c.bf16 %v623, %v623
      %625 = vrot.lane.b32.xlu0 %v553, 64
      %v626 = vpop.permute.xlu0 %625
      %v628 = vsel %vm612, %v624, 0
      %vm630 = vcmask 1043456
      %v632 = vsel %vm630, %v626, 0
      %634 = vmatprep.subr.bf16.mxu0 0
      %635 = vmatpush1.bf16.msra.mxu0 %v632
      %636 = vmatprep.subr.bf16.mxu0 0
      %637 = vmatpush1.bf16.msra.mxu0 0
      %638 = vmatprep.subr.bf16.mxu0 0
      %639 = vmatpush1.bf16.msra.mxu0 0
      %640 = vmatprep.subr.bf16.mxu0 0
      %641 = vmatpush1.bf16.msra.mxu0 0
      %642 = vmatprep.subr.bf16.mxu0 0
      %643 = vmatpush1.bf16.msra.mxu0 0
      %644 = vmatprep.subr.bf16.mxu0 0
      %645 = vmatpush1.bf16.msra.mxu0 0
      %646 = vmatprep.subr.bf16.mxu0 0
      %647 = vmatpush1.bf16.msra.mxu0 0
      %648 = vmatprep.subr.bf16.mxu0 0
      %649 = vmatpush1.bf16.msra.mxu0 0
      %650 = vmatprep.subr.bf16.mxu0 0
      %651 = vmatpush1.bf16.msra.mxu0 0
      %652 = vmatprep.subr.bf16.mxu0 0
      %653 = vmatpush1.bf16.msra.mxu0 0
      %654 = vmatprep.subr.bf16.mxu0 0
      %655 = vmatpush1.bf16.msra.mxu0 0
      %656 = vmatprep.subr.bf16.mxu0 0
      %657 = vmatpush1.bf16.msra.mxu0 0
      %658 = vmatprep.subr.bf16.mxu0 0
      %659 = vmatpush1.bf16.msra.mxu0 0
      %660 = vmatprep.subr.bf16.mxu0 0
      %661 = vmatpush1.bf16.msra.mxu0 0
      %662 = vmatprep.subr.bf16.mxu0 0
      %663 = vmatpush1.bf16.msra.mxu0 0
      %664 = vmatprep.subr.bf16.mxu0 0
      %665 = vmatpush1.bf16.msra.mxu0 0
      %666 = vmatprep.mubr.bf16.mxu0 0
      %667 = vmatmul.mubr.bf16.gmra.mrb[0].mxu0 %v628
      %v668 = vpop.f32.mrb[0].mxu0
      %v669 = vadd.f32 0.0, %v668
      %v670 = vpop.f32.mrb[0].mxu0
      %v671 = vpop.f32.mrb[0].mxu0
      %v672 = vpop.f32.mrb[0].mxu0
      %673 = vdwg.mxu0
      %674 = vrot.lane.b32.xlu0 %v553, 112
      %v675 = vpop.permute.xlu0 %674
      %676 = vrot.lane.b32.xlu0 %v553, 80
      %v677 = vpop.permute.xlu0 %676
      %v679 = vsel %vm557, %v675, 0
      %v682 = vsel %vm557, %v677, 0
      %684 = vmatprep.subr.bf16.mxu0 0
      %685 = vmatpush1.bf16.xpose.msra.mxu0 %v682
      %686 = vmatprep.subr.bf16.mxu0 0
      %687 = vmatpush1.bf16.xpose.msra.mxu0 0
      %688 = vmatprep.subr.bf16.mxu0 0
      %689 = vmatpush1.bf16.xpose.msra.mxu0 0
      %690 = vmatprep.subr.bf16.mxu0 0
      %691 = vmatpush1.bf16.xpose.msra.mxu0 0
      %692 = vmatprep.subr.bf16.mxu0 0
      %693 = vmatpush1.bf16.xpose.msra.mxu0 0
      %694 = vmatprep.subr.bf16.mxu0 0
      %695 = vmatpush1.bf16.xpose.msra.mxu0 0
      %696 = vmatprep.subr.bf16.mxu0 0
      %697 = vmatpush1.bf16.xpose.msra.mxu0 0
      %698 = vmatprep.subr.bf16.mxu0 0
      %699 = vmatpush1.bf16.xpose.msra.mxu0 0
      %700 = vmatprep.subr.bf16.mxu0 0
      %701 = vmatpush1.bf16.xpose.msra.mxu0 0
      %702 = vmatprep.subr.bf16.mxu0 0
      %703 = vmatpush1.bf16.xpose.msra.mxu0 0
      %704 = vmatprep.subr.bf16.mxu0 0
      %705 = vmatpush1.bf16.xpose.msra.mxu0 0
      %706 = vmatprep.subr.bf16.mxu0 0
      %707 = vmatpush1.bf16.xpose.msra.mxu0 0
      %708 = vmatprep.subr.bf16.mxu0 0
      %709 = vmatpush1.bf16.xpose.msra.mxu0 0
      %710 = vmatprep.subr.bf16.mxu0 0
      %711 = vmatpush1.bf16.xpose.msra.mxu0 0
      %712 = vmatprep.subr.bf16.mxu0 0
      %713 = vmatpush1.bf16.xpose.msra.mxu0 0
      %714 = vmatprep.subr.bf16.mxu0 0
      %715 = vmatpush1.bf16.xpose.msra.mxu0 0
      %716 = vmatprep.mubr.bf16.mxu0 0
      %717 = vmatmul.mubr.bf16.gmra.mrb[0].mxu0 %v679
      %v718 = vpop.f32.mrb[0].mxu0
      %v719 = vadd.f32 0.0, %v718
      %v720 = vpop.f32.mrb[0].mxu0
      %v721 = vpop.f32.mrb[0].mxu0
      %v722 = vpop.f32.mrb[0].mxu0
      %723 = vdwg.mxu0
      %v724 = vmul.f32 %v719, 0.25
      %v725 = vadd.f32 %v724, %v609
      %v726 = vsel %vm612, %v725, -inf
      %727 = vmax.xlane.f32.xlu0 %v726
      %v728 = vpop.xlane.xlu0 %727
      %v729 = vsub.f32 %v725, %v728
      %v730 = vmul.f32 %v729, 1.442695
      %v731 = vpow.pop %v730
      %v732 = vsel %vm612, %v731, 0.0
      %733 = vadd.xlane.f32.xlu0 %v732
      %v734 = vpop.xlane.xlu0 %733
      %v735 = vrcp.pop %v734
      %v736 = vmul.f32 %v731, %v735
      %v737 = vpack.c.bf16 %v736, %v736
      %738 = vrot.lane.b32.xlu0 %v553, 48
      %v739 = vpop.permute.xlu0 %738
      %v741 = vsel %vm612, %v737, 0
      %v744 = vsel %vm630, %v739, 0
      %746 = vmatprep.subr.bf16.mxu0 0
      %747 = vmatpush1.bf16.msra.mxu0 %v744
      %748 = vmatprep.subr.bf16.mxu0 0
      %749 = vmatpush1.bf16.msra.mxu0 0
      %750 = vmatprep.subr.bf16.mxu0 0
      %751 = vmatpush1.bf16.msra.mxu0 0
      %752 = vmatprep.subr.bf16.mxu0 0
      %753 = vmatpush1.bf16.msra.mxu0 0
      %754 = vmatprep.subr.bf16.mxu0 0
      %755 = vmatpush1.bf16.msra.mxu0 0
      %756 = vmatprep.subr.bf16.mxu0 0
      %757 = vmatpush1.bf16.msra.mxu0 0
      %758 = vmatprep.subr.bf16.mxu0 0
      %759 = vmatpush1.bf16.msra.mxu0 0
      %760 = vmatprep.subr.bf16.mxu0 0
      %761 = vmatpush1.bf16.msra.mxu0 0
      %762 = vmatprep.subr.bf16.mxu0 0
      %763 = vmatpush1.bf16.msra.mxu0 0
      %764 = vmatprep.subr.bf16.mxu0 0
      %765 = vmatpush1.bf16.msra.mxu0 0
      %766 = vmatprep.subr.bf16.mxu0 0
      %767 = vmatpush1.bf16.msra.mxu0 0
      %768 = vmatprep.subr.bf16.mxu0 0
      %769 = vmatpush1.bf16.msra.mxu0 0
      %770 = vmatprep.subr.bf16.mxu0 0
      %771 = vmatpush1.bf16.msra.mxu0 0
      %772 = vmatprep.subr.bf16.mxu0 0
      %773 = vmatpush1.bf16.msra.mxu0 0
      %774 = vmatprep.subr.bf16.mxu0 0
      %775 = vmatpush1.bf16.msra.mxu0 0
      %776 = vmatprep.subr.bf16.mxu0 0
      %777 = vmatpush1.bf16.msra.mxu0 0
      %778 = vmatprep.mubr.bf16.mxu0 0
      %779 = vmatmul.mubr.bf16.gmra.mrb[0].mxu0 %v741
      %v780 = vpop.f32.mrb[0].mxu0
      %v781 = vadd.f32 0.0, %v780
      %v782 = vpop.f32.mrb[0].mxu0
      %v783 = vpop.f32.mrb[0].mxu0
      %v784 = vpop.f32.mrb[0].mxu0
      %785 = vdwg.mxu0
      %787 = vrot.lane.b32.xlu0 %v781, 16
      %v788 = vpop.permute.xlu0 %787
      %v790 = vsel %vm557, %v669, %v788
      %v791 = vpack.c.bf16 %v790, %v790
      %v793 = vlaneseq
      %v794 = vshrl.u32 %v793, 7
      %v795 = vsub.s32 0, %v794
      %v796 = vrot.slane %v552, %v795
      %v802 = vunpack.c.l.b16 %v548
      %v803 = vunpack.c.l.b16 %v549
      %v804 = vunpack.c.l.b16 %v550
      %v805 = vunpack.c.l.b16 %v551
      %v806 = vpack.c.b16 %v803, %v802
      %v807 = vpack.c.b16 %v805, %v804
      %v811 = vsel %vm503, %v791, 0
      %813 = vmatprep.subr.bf16.mxu0 0
      %814 = vmatpush1.bf16.msra.mxu0 %v806
      %815 = vmatprep.subr.bf16.mxu0 0
      %816 = vmatpush1.bf16.msra.mxu0 %v807
      %817 = vmatprep.subr.bf16.mxu0 0
      %818 = vmatpush1.bf16.msra.mxu0 0
      %819 = vmatprep.subr.bf16.mxu0 0
      %820 = vmatpush1.bf16.msra.mxu0 0
      %821 = vmatprep.subr.bf16.mxu0 0
      %822 = vmatpush1.bf16.msra.mxu0 0
      %823 = vmatprep.subr.bf16.mxu0 0
      %824 = vmatpush1.bf16.msra.mxu0 0
      %825 = vmatprep.subr.bf16.mxu0 0
      %826 = vmatpush1.bf16.msra.mxu0 0
      %827 = vmatprep.subr.bf16.mxu0 0
      %828 = vmatpush1.bf16.msra.mxu0 0
      %829 = vmatprep.subr.bf16.mxu0 0
      %830 = vmatpush1.bf16.msra.mxu0 0
      %831 = vmatprep.subr.bf16.mxu0 0
      %832 = vmatpush1.bf16.msra.mxu0 0
      %833 = vmatprep.subr.bf16.mxu0 0
      %834 = vmatpush1.bf16.msra.mxu0 0
      %835 = vmatprep.subr.bf16.mxu0 0
      %836 = vmatpush1.bf16.msra.mxu0 0
      %837 = vmatprep.subr.bf16.mxu0 0
      %838 = vmatpush1.bf16.msra.mxu0 0
      %839 = vmatprep.subr.bf16.mxu0 0
      %840 = vmatpush1.bf16.msra.mxu0 0
      %841 = vmatprep.subr.bf16.mxu0 0
      %842 = vmatpush1.bf16.msra.mxu0 0
      %843 = vmatprep.subr.bf16.mxu0 0
      %844 = vmatpush1.bf16.msra.mxu0 0
      %845 = vmatprep.mubr.bf16.mxu0 0
      %846 = vmatmul.mubr.bf16.gmra.mrb[0].mxu0 %v811
      %v847 = vpop.f32.mrb[0].mxu0
      %v848 = vadd.f32 %v796, %v847
      %v849 = vpop.f32.mrb[0].mxu0
      %v850 = vpop.f32.mrb[0].mxu0
      %v851 = vpop.f32.mrb[0].mxu0
      %852 = vdwg.mxu0
      %v853 = vadd.f32 %v478, %v848
      %v854 = vld [vmem:[%s6] sm:$0x1]
      %v855 = vld [vmem:[%s7] sm:$0x1]
      %v856 = vsel %vm503, %v853, 0.0
      %857 = vadd.xlane.f32.xlu0 %v856
      %v858 = vpop.xlane.xlu0 %857
      %v859 = vrcp.pop 32.0
      %v860 = vmul.f32 %v858, %v859
      %v861 = vsub.f32 %v853, %v860
      %v862 = vmul.f32 %v861, %v861
      %v863 = vsel %vm503, %v862, 0.0
      %864 = vadd.xlane.f32.xlu0 %v863
      %v865 = vpop.xlane.xlu0 %864
      %v866 = vmul.f32 %v865, %v859
      %v867 = vadd.f32 %v866, 1e-05
      %v868 = vrsqrt.pop %v867
      %v869 = vmul.f32 %v861, %v868
      %v871 = vlaneseq
      %v872 = vshrl.u32 %v871, 7
      %v873 = vsub.s32 0, %v872
      %v874 = vrot.slane %v854, %v873
      %v876 = vmul.f32 %v869, %v874
      %v878 = vlaneseq
      %v879 = vshrl.u32 %v878, 7
      %v880 = vsub.s32 0, %v879
      %v881 = vrot.slane %v855, %v880
      %v883 = vadd.f32 %v876, %v881
      %v884 = vld [vmem:[%s8] sm:$0xf]
      %v885 = vld [vmem:[%s8 + $0x4] sm:$0xf]
      %v886 = vld [vmem:[%s8 + $0x8] sm:$0xf]
      %v887 = vld [vmem:[%s8 + $0xc] sm:$0xf]
      %v888 = vld [vmem:[%s9] sm:$0x1]
      %v889 = vpack.c.bf16 %v883, %v883
      %v891 = vlaneseq
      %v892 = vshrl.u32 %v891, 7
      %v893 = vsub.s32 0, %v892
      %v894 = vrot.slane %v888, %v893
      %v900 = vunpack.c.l.b16 %v884
      %v901 = vunpack.c.l.b16 %v885
      %v902 = vunpack.c.l.b16 %v886
      %v903 = vunpack.c.l.b16 %v887
      %v904 = vpack.c.b16 %v901, %v900
      %v905 = vpack.c.b16 %v903, %v902
      %v909 = vsel %vm503, %v889, 0
      %911 = vmatprep.subr.bf16.mxu0 0
      %912 = vmatpush1.bf16.msra.mxu0 %v904
      %913 = vmatprep.subr.bf16.mxu0 0
      %914 = vmatpush1.bf16.msra.mxu0 %v905
      %915 = vmatprep.subr.bf16.mxu0 0
      %916 = vmatpush1.bf16.msra.mxu0 0
      %917 = vmatprep.subr.bf16.mxu0 0
      %918 = vmatpush1.bf16.msra.mxu0 0
      %919 = vmatprep.subr.bf16.mxu0 0
      %920 = vmatpush1.bf16.msra.mxu0 0
      %921 = vmatprep.subr.bf16.mxu0 0
      %922 = vmatpush1.bf16.msra.mxu0 0
      %923 = vmatprep.subr.bf16.mxu0 0
      %924 = vmatpush1.bf16.msra.mxu0 0
      %925 = vmatprep.subr.bf16.mxu0 0
      %926 = vmatpush1.bf16.msra.mxu0 0
      %927 = vmatprep.subr.bf16.mxu0 0
      %928 = vmatpush1.bf16.msra.mxu0 0
      %929 = vmatprep.subr.bf16.mxu0 0
      %930 = vmatpush1.bf16.msra.mxu0 0
      %931 = vmatprep.subr.bf16.mxu0 0
      %932 = vmatpush1.bf16.msra.mxu0 0
      %933 = vmatprep.subr.bf16.mxu0 0
      %934 = vmatpush1.bf16.msra.mxu0 0
      %935 = vmatprep.subr.bf16.mxu0 0
      %936 = vmatpush1.bf16.msra.mxu0 0
      %937 = vmatprep.subr.bf16.mxu0 0
      %938 = vmatpush1.bf16.msra.mxu0 0
      %939 = vmatprep.subr.bf16.mxu0 0
      %940 = vmatpush1.bf16.msra.mxu0 0
      %941 = vmatprep.subr.bf16.mxu0 0
      %942 = vmatpush1.bf16.msra.mxu0 0
      %943 = vmatprep.mubr.bf16.mxu0 0
      %944 = vmatmul.mubr.bf16.gmra.mrb[0].mxu0 %v909
      %v945 = vpop.f32.mrb[0].mxu0
      %v946 = vadd.f32 %v894, %v945
      %v947 = vpop.f32.mrb[0].mxu0
      %v948 = vpop.f32.mrb[0].mxu0
      %v949 = vpop.f32.mrb[0].mxu0
      %950 = vdwg.mxu0
      %v951 = vmul.f32 %v946, 0.5
      %v952 = vmul.f32 %v946, 0.044715
      %v953 = vmul.f32 %v952, %v946
      %v954 = vmul.f32 %v953, %v946
      %v955 = vadd.f32 %v946, %v954
      %v956 = vmul.f32 %v955, 0.7978846
      %v957 = vtanh.pop %v956
      %v958 = vadd.f32 %v957, 1.0
      %v959 = vmul.f32 %v951, %v958
      %v960 = vld [vmem:[%s10] sm:$0xf]
      %v961 = vld [vmem:[%s10 + $0x4] sm:$0xf]
      %v962 = vld [vmem:[%s10 + $0x8] sm:$0xf]
      %v963 = vld [vmem:[%s10 + $0xc] sm:$0xf]
      %v964 = vld [vmem:[%s10 + $0x10] sm:$0xf]
      %v965 = vld [vmem:[%s10 + $0x14] sm:$0xf]
      %v966 = vld [vmem:[%s10 + $0x18] sm:$0xf]
      %v967 = vld [vmem:[%s10 + $0x1c] sm:$0xf]
      %v968 = vld [vmem:[%s11] sm:$0x1]
      %v969 = vpack.c.bf16 %v959, %v959
      %v971 = vlaneseq
      %v972 = vshrl.u32 %v971, 7
      %v973 = vsub.s32 0, %v972
      %v974 = vrot.slane %v968, %v973
      %v984 = vunpack.c.l.b16 %v960
      %v985 = vunpack.c.l.b16 %v961
      %v986 = vunpack.c.l.b16 %v962
      %v987 = vunpack.c.l.b16 %v963
      %v988 = vunpack.c.l.b16 %v964
      %v989 = vunpack.c.l.b16 %v965
      %v990 = vunpack.c.l.b16 %v966
      %v991 = vunpack.c.l.b16 %v967
      %v992 = vpack.c.b16 %v985, %v984
      %v993 = vpack.c.b16 %v987, %v986
      %v994 = vpack.c.b16 %v989, %v988
      %v995 = vpack.c.b16 %v991, %v990
      %vm1000 = vcmask 523264
      %v1002 = vsel %vm1000, %v969, 0
      %1004 = vmatprep.subr.bf16.mxu0 0
      %1005 = vmatpush1.bf16.msra.mxu0 %v992
      %1006 = vmatprep.subr.bf16.mxu0 0
      %1007 = vmatpush1.bf16.msra.mxu0 %v993
      %1008 = vmatprep.subr.bf16.mxu0 0
      %1009 = vmatpush1.bf16.msra.mxu0 %v994
      %1010 = vmatprep.subr.bf16.mxu0 0
      %1011 = vmatpush1.bf16.msra.mxu0 %v995
      %1012 = vmatprep.subr.bf16.mxu0 0
      %1013 = vmatpush1.bf16.msra.mxu0 0
      %1014 = vmatprep.subr.bf16.mxu0 0
      %1015 = vmatpush1.bf16.msra.mxu0 0
      %1016 = vmatprep.subr.bf16.mxu0 0
      %1017 = vmatpush1.bf16.msra.mxu0 0
      %1018 = vmatprep.subr.bf16.mxu0 0
      %1019 = vmatpush1.bf16.msra.mxu0 0
      %1020 = vmatprep.subr.bf16.mxu0 0
      %1021 = vmatpush1.bf16.msra.mxu0 0
      %1022 = vmatprep.subr.bf16.mxu0 0
      %1023 = vmatpush1.bf16.msra.mxu0 0
      %1024 = vmatprep.subr.bf16.mxu0 0
      %1025 = vmatpush1.bf16.msra.mxu0 0
      %1026 = vmatprep.subr.bf16.mxu0 0
      %1027 = vmatpush1.bf16.msra.mxu0 0
      %1028 = vmatprep.subr.bf16.mxu0 0
      %1029 = vmatpush1.bf16.msra.mxu0 0
      %1030 = vmatprep.subr.bf16.mxu0 0
      %1031 = vmatpush1.bf16.msra.mxu0 0
      %1032 = vmatprep.subr.bf16.mxu0 0
      %1033 = vmatpush1.bf16.msra.mxu0 0
      %1034 = vmatprep.subr.bf16.mxu0 0
      %1035 = vmatpush1.bf16.msra.mxu0 0
      %1036 = vmatprep.mubr.bf16.mxu0 0
      %1037 = vmatmul.mubr.bf16.gmra.mrb[0].mxu0 %v1002
      %v1038 = vpop.f32.mrb[0].mxu0
      %v1039 = vadd.f32 %v974, %v1038
      %v1040 = vpop.f32.mrb[0].mxu0
      %v1041 = vpop.f32.mrb[0].mxu0
      %v1042 = vpop.f32.mrb[0].mxu0
      %1043 = vdwg.mxu0
      %v1044 = vadd.f32 %v883, %v1039
      %v1045 = vld [vmem:[%s12] sm:$0x1]
      %v1046 = vld [vmem:[%s13] sm:$0x1]
      %v1047 = vsel %vm503, %v1044, 0.0
      %1048 = vadd.xlane.f32.xlu0 %v1047
      %v1049 = vpop.xlane.xlu0 %1048
      %v1050 = vmul.f32 %v1049, %v859
      %v1051 = vsub.f32 %v1044, %v1050
      %v1052 = vmul.f32 %v1051, %v1051
      %v1053 = vsel %vm503, %v1052, 0.0
      %1054 = vadd.xlane.f32.xlu0 %v1053
      %v1055 = vpop.xlane.xlu0 %1054
      %v1056 = vmul.f32 %v1055, %v859
      %v1057 = vadd.f32 %v1056, 1e-05
      %v1058 = vrsqrt.pop %v1057
      %v1059 = vmul.f32 %v1051, %v1058
      %v1061 = vlaneseq
      %v1062 = vshrl.u32 %v1061, 7
      %v1063 = vsub.s32 0, %v1062
      %v1064 = vrot.slane %v1045, %v1063
      %v1066 = vmul.f32 %v1059, %v1064
      %v1068 = vlaneseq
      %v1069 = vshrl.u32 %v1068, 7
      %v1070 = vsub.s32 0, %v1069
      %v1071 = vrot.slane %v1046, %v1070
      %v1073 = vadd.f32 %v1066, %v1071
      %1074 = vst.msk [vmem:[%s476] sm:$0xff] %vm503, %v1073
      %p1075 = scmp.lt.s32.totalorder %s25, 1
      %s1076 = scalar_select %p1075, %s25, 1
      %s1077 = smul.addr %s1076, 8
      %s1078 = scalar_lea.vmem %s14, %s1077
      // Predicated region
      $region77: #{bart_generator_train_forward.6} parent=75 // pred_check
        %p1079 = pneg %p347
      $region78: #{bart_generator_train_forward.6} parent=75 // pred_check_branch
        %1081 = sbr.rel (%p1079) target = $region80
      $region79: #{bart_generator_train_forward.6} parent=75 // pred_region
        _
      $region80: #{bart_generator_train_forward.6} parent=75 // pred_fallthru
        _
    $region76: #{bart_generator_train_forward.6} parent=5 // pred_fallthru
      _
    %p1082 = scmp.le.s32.totalorder 2, %s20
    // Predicated region
    $region81: #{bart_generator_train_forward.6} parent=5 // pred_check
      %p1083 = pneg %p1082
    $region82: #{bart_generator_train_forward.6} parent=5 // pred_check_branch
      %1085 = sbr.rel (%p1083) target = $region84
    $region83: #{bart_generator_train_forward.6} parent=5 // pred_region
      %s1086 = ssub.s32 %s20, 2
      // Predicated region
      $region85: #{bart_generator_train_forward.6} parent=83 // pred_check
        %p1087 = pneg %p353
      $region86: #{bart_generator_train_forward.6} parent=83 // pred_check_branch
        %1089 = sbr.rel (%p1087) target = $region88
      $region87: #{bart_generator_train_forward.6} parent=83 // pred_region
        %p1090 = scmp.lt.s32.totalorder %s26, 1
        %s1091 = scalar_select %p1090, %s26, 1
        %s1092 = smul.addr %s1091, 8
        %s1093 = scalar_lea.vmem %s14, %s1092
      $region88: #{bart_generator_train_forward.6} parent=83 // pred_fallthru
        _
    $region84: #{bart_generator_train_forward.6} parent=5 // pred_fallthru
      _
  $region6: #{bart_generator_train_forward.6} parent=0 // loop_footer
    %s24 = sadd.s32 1, %s20
  $region7: #{bart_generator_train_forward.6} parent=0 // loop_footer_branch
    %19 = sbr.rel target = $region3
  $region8: #{bart_generator_train_forward.6} parent=0 // loop_exit
    _

// kernel: bart_generator_train_forward.8
$region0: #{bart_generator_train_forward.8}
  #allocation0 [shape = 'u32[]', space=smem, size = 0x4, offset = 0x4, fixed_abs, tag = 'smem constant byte address 0x4 - core index']
  #allocation1 [shape = 'u32[144,128]{1,0:T(1,128)}', space=vmem, size = 0x12000, scoped, tag = 'internal scratch']
  %s0 = inlined_call_operand.vmem [shape: f32[2,8,32], index: 0, kind: input, shape index: {}]
  %s1 = inlined_call_operand.vmem [shape: f32[2,8,32], index: 1, kind: input, shape index: {}]
  %s2 = inlined_call_operand.vmem [shape: f32[2,1,8], index: 2, kind: input, shape index: {}]
  %s3 = inlined_call_operand.vmem [shape: f32[2,1,8], index: 3, kind: input, shape index: {}]
  %s4 = inlined_call_operand.vmem [shape: bf16[32,96], index: 4, kind: input, shape index: {}]
  %s5 = inlined_call_operand.vmem [shape: f32[1,1,96], index: 5, kind: input, shape index: {}]
  %s6 = inlined_call_operand.vmem [shape: bf16[32,32], index: 6, kind: input, shape index: {}]
  %s7 = inlined_call_operand.vmem [shape: f32[1,1,32], index: 7, kind: input, shape index: {}]
  %s8 = inlined_call_operand.vmem [shape: f32[1,1,32], index: 8, kind: input, shape index: {}]
  %s9 = inlined_call_operand.vmem [shape: f32[1,1,32], index: 9, kind: input, shape index: {}]
  %s10 = inlined_call_operand.vmem [shape: bf16[32,32], index: 10, kind: input, shape index: {}]
  %s11 = inlined_call_operand.vmem [shape: f32[1,1,32], index: 11, kind: input, shape index: {}]
  %s12 = inlined_call_operand.vmem [shape: bf16[32,64], index: 12, kind: input, shape index: {}]
  %s13 = inlined_call_operand.vmem [shape: f32[1,1,64], index: 13, kind: input, shape index: {}]
  %s14 = inlined_call_operand.vmem [shape: bf16[32,32], index: 14, kind: input, shape index: {}]
  %s15 = inlined_call_operand.vmem [shape: f32[1,1,32], index: 15, kind: input, shape index: {}]
  %s16 = inlined_call_operand.vmem [shape: f32[1,1,32], index: 16, kind: input, shape index: {}]
  %s17 = inlined_call_operand.vmem [shape: f32[1,1,32], index: 17, kind: input, shape index: {}]
  %s18 = inlined_call_operand.vmem [shape: bf16[32,64], index: 18, kind: input, shape index: {}]
  %s19 = inlined_call_operand.vmem [shape: f32[1,1,64], index: 19, kind: input, shape index: {}]
  %s20 = inlined_call_operand.vmem [shape: bf16[64,32], index: 20, kind: input, shape index: {}]
  %s21 = inlined_call_operand.vmem [shape: f32[1,1,32], index: 21, kind: input, shape index: {}]
  %s22 = inlined_call_operand.vmem [shape: f32[1,1,32], index: 22, kind: input, shape index: {}]
  %s23 = inlined_call_operand.vmem [shape: f32[1,1,32], index: 23, kind: input, shape index: {}]
  %s24 = inlined_call_operand.vmem [shape: f32[2,8,32], index: 24, kind: output, shape index: {}]
  %s25 = sld [smem:[#allocation0]]
  $region129: #{bart_generator_train_forward.8} parent=0
    _
  %s27 = ssub.s32 1, %s25
  %s28 = scalar_select 0, %s27, %s25
  loop: start=0, step=1, limit=4
  $region2: #{bart_generator_train_forward.8} parent=0 // loop_pre_header
    _
  $region3: #{bart_generator_train_forward.8} parent=0 // loop_header
    %s30 = sphi 0, %s34
    %p31 = scmp.ge.s32.totalorder %s30, 4
    %s40 = sphi 0, %s42
    %s43 = sphi 0, %s40
    %s44 = sphi 0, %s43
    %s60 = sphi 0, %s44
    %s66 = sphi 0, %s68
    %s69 = sphi 0, %s66
    %s70 = sphi 0, %s69
    %s86 = sphi 0, %s70
    %s92 = sphi 0, %s94
    %s95 = sphi 0, %s92
    %s96 = sphi 0, %s95
    %s112 = sphi 0, %s96
    %s118 = sphi 0, %s120
    %s121 = sphi 0, %s118
    %s122 = sphi 0, %s121
    %s138 = sphi 0, %s122
    %s142 = sphi 0, %s142
    %s144 = sphi 0, %s142
    %s145 = sphi 0, %s144
    %s159 = sphi 0, %s145
    %s163 = sphi 0, %s163
    %s165 = sphi 0, %s163
    %s166 = sphi 0, %s165
    %s180 = sphi 0, %s166
    %s184 = sphi 0, %s184
    %s186 = sphi 0, %s184
    %s187 = sphi 0, %s186
    %s201 = sphi 0, %s187
    %s205 = sphi 0, %s205
    %s207 = sphi 0, %s205
    %s208 = sphi 0, %s207
    %s222 = sphi 0, %s208
    %s226 = sphi 0, %s226
    %s228 = sphi 0, %s226
    %s229 = sphi 0, %s228
    %s243 = sphi 0, %s229
    %s247 = sphi 0, %s247
    %s249 = sphi 0, %s247
    %s250 = sphi 0, %s249
    %s264 = sphi 0, %s250
    %s268 = sphi 0, %s268
    %s270 = sphi 0, %s268
    %s271 = sphi 0, %s270
    %s285 = sphi 0, %s271
    %s289 = sphi 0, %s289
    %s291 = sphi 0, %s289
    %s292 = sphi 0, %s291
    %s306 = sphi 0, %s292
    %s310 = sphi 0, %s310
    %s312 = sphi 0, %s310
    %s313 = sphi 0, %s312
    %s327 = sphi 0, %s313
    %s331 = sphi 0, %s331
    %s333 = sphi 0, %s331
    %s334 = sphi 0, %s333
    %s348 = sphi 0, %s334
    %s352 = sphi 0, %s352
    %s354 = sphi 0, %s352
    %s355 = sphi 0, %s354
    %s369 = sphi 0, %s355
    %s373 = sphi 0, %s373
    %s375 = sphi 0, %s373
    %s376 = sphi 0, %s375
    %s390 = sphi 0, %s376
    %s394 = sphi 0, %s394
    %s396 = sphi 0, %s394
    %s397 = sphi 0, %s396
    %s411 = sphi 0, %s397
    %s415 = sphi 0, %s415
    %s417 = sphi 0, %s415
    %s418 = sphi 0, %s417
    %s432 = sphi 0, %s418
    %s436 = sphi 0, %s436
    %s438 = sphi 0, %s436
    %s439 = sphi 0, %s438
    %s453 = sphi 0, %s439
    %s457 = sphi 0, %s457
    %s459 = sphi 0, %s457
    %s460 = sphi 0, %s459
    %s474 = sphi 0, %s460
    %s478 = sphi 0, %s478
    %s480 = sphi 0, %s478
    %s481 = sphi 0, %s480
    %s495 = sphi 0, %s481
    %s499 = sphi 0, %s499
    %s501 = sphi 0, %s499
    %s502 = sphi 0, %s501
    %s516 = sphi 0, %s502
    %s520 = sphi 0, %s520
    %s522 = sphi 0, %s520
    %s523 = sphi 0, %s522
    %s537 = sphi 0, %s523
    %s541 = sphi 0, %s541
    %s543 = sphi 0, %s541
    %s544 = sphi 0, %s543
    %s558 = sphi 0, %s544
    %s564 = sphi 0, %s566
    %s567 = sphi 0, %s564
    %s568 = sphi 0, %s567
    %s584 = sphi 0, %s568
  $region4: #{bart_generator_train_forward.8} parent=0 // loop_header_branch
    %33 = sbr.rel (%p31) target = $region8
  $region5: #{bart_generator_train_forward.8} parent=0 // loop_body
    %s35 = ssub.s32 %s30, 1
    %s36 = ssub.s32 %s30, 2
    %s37 = sadd.s32 %s30, 1
    %s38 = ssub.s32 %s30, %s37
    %p39 = scmp.eq.s32.totalorder %s38, 0
    %s41 = sadd.s32 %s40, 1
    %s42 = scalar_select %p39, %s40, %s41
    %p45 = pneg %p39
    %p46 = scmp.eq.s32.totalorder %s30, 1
    %p47 = por %p45, %p46
    %p48 = scmp.ne.s32.totalorder %s40, %s43
    %p49 = scmp.eq.s32.totalorder %s30, 0
    %p50 = por %p48, %p49
    %p51 = scmp.ne.s32.totalorder %s40, %s43
    %p52 = scmp.eq.s32.totalorder %s35, 1
    %p53 = por %p51, %p52
    %p54 = scmp.ne.s32.totalorder %s43, %s44
    %p55 = scmp.eq.s32.totalorder %s35, 0
    %p56 = por %p54, %p55
    %p57 = scmp.ne.s32.totalorder %s43, %s44
    %p58 = scmp.eq.s32.totalorder %s36, 1
    %p59 = por %p57, %p58
    %p61 = scmp.ne.s32.totalorder %s44, %s60
    %p62 = scmp.eq.s32.totalorder %s36, 0
    %p63 = por %p61, %p62
    %s64 = ssub.s32 %s30, %s37
    %p65 = scmp.eq.s32.totalorder %s64, 0
    %s67 = sadd.s32 %s66, 1
    %s68 = scalar_select %p65, %s66, %s67
    %p71 = pneg %p65
    %p72 = scmp.eq.s32.totalorder %s30, 1
    %p73 = por %p71, %p72
    %p74 = scmp.ne.s32.totalorder %s66, %s69
    %p75 = scmp.eq.s32.totalorder %s30, 0
    %p76 = por %p74, %p75
    %p77 = scmp.ne.s32.totalorder %s66, %s69
    %p78 = scmp.eq.s32.totalorder %s35, 1
    %p79 = por %p77, %p78
    %p80 = scmp.ne.s32.totalorder %s69, %s70
    %p81 = scmp.eq.s32.totalorder %s35, 0
    %p82 = por %p80, %p81
    %p83 = scmp.ne.s32.totalorder %s69, %s70
    %p84 = scmp.eq.s32.totalorder %s36, 1
    %p85 = por %p83, %p84
    %p87 = scmp.ne.s32.totalorder %s70, %s86
    %p88 = scmp.eq.s32.totalorder %s36, 0
    %p89 = por %p87, %p88
    %s90 = ssub.s32 %s30, %s37
    %p91 = scmp.eq.s32.totalorder %s90, 0
    %s93 = sadd.s32 %s92, 1
    %s94 = scalar_select %p91, %s92, %s93
    %p97 = pneg %p91
    %p98 = scmp.eq.s32.totalorder %s30, 1
    %p99 = por %p97, %p98
    %p100 = scmp.ne.s32.totalorder %s92, %s95
    %p101 = scmp.eq.s32.totalorder %s30, 0
    %p102 = por %p100, %p101
    %p103 = scmp.ne.s32.totalorder %s92, %s95
    %p104 = scmp.eq.s32.totalorder %s35, 1
    %p105 = por %p103, %p104
    %p106 = scmp.ne.s32.totalorder %s95, %s96
    %p107 = scmp.eq.s32.totalorder %s35, 0
    %p108 = por %p106, %p107
    %p109 = scmp.ne.s32.totalorder %s95, %s96
    %p110 = scmp.eq.s32.totalorder %s36, 1
    %p111 = por %p109, %p110
    %p113 = scmp.ne.s32.totalorder %s96, %s112
    %p114 = scmp.eq.s32.totalorder %s36, 0
    %p115 = por %p113, %p114
    %s116 = ssub.s32 %s30, %s37
    %p117 = scmp.eq.s32.totalorder %s116, 0
    %s119 = sadd.s32 %s118, 1
    %s120 = scalar_select %p117, %s118, %s119
    %p123 = pneg %p117
    %p124 = scmp.eq.s32.totalorder %s30, 1
    %p125 = por %p123, %p124
    %p126 = scmp.ne.s32.totalorder %s118, %s121
    %p127 = scmp.eq.s32.totalorder %s30, 0
    %p128 = por %p126, %p127
    %p129 = scmp.ne.s32.totalorder %s118, %s121
    %p130 = scmp.eq.s32.totalorder %s35, 1
    %p131 = por %p129, %p130
    %p132 = scmp.ne.s32.totalorder %s121, %s122
    %p133 = scmp.eq.s32.totalorder %s35, 0
    %p134 = por %p132, %p133
    %p135 = scmp.ne.s32.totalorder %s121, %s122
    %p136 = scmp.eq.s32.totalorder %s36, 1
    %p137 = por %p135, %p136
    %p139 = scmp.ne.s32.totalorder %s122, %s138
    %p140 = scmp.eq.s32.totalorder %s36, 0
    %p141 = por %p139, %p140
    %s143 = sadd.s32 %s142, 1
    %p146 = scmp.eq.s32.totalorder %s30, 1
    %p147 = scmp.ne.s32.totalorder %s142, %s144
    %p148 = scmp.eq.s32.totalorder %s30, 0
    %p149 = por %p147, %p148
    %p150 = scmp.ne.s32.totalorder %s142, %s144
    %p151 = scmp.eq.s32.totalorder %s35, 1
    %p152 = por %p150, %p151
    %p153 = scmp.ne.s32.totalorder %s144, %s145
    %p154 = scmp.eq.s32.totalorder %s35, 0
    %p155 = por %p153, %p154
    %p156 = scmp.ne.s32.totalorder %s144, %s145
    %p157 = scmp.eq.s32.totalorder %s36, 1
    %p158 = por %p156, %p157
    %p160 = scmp.ne.s32.totalorder %s145, %s159
    %p161 = scmp.eq.s32.totalorder %s36, 0
    %p162 = por %p160, %p161
    %s164 = sadd.s32 %s163, 1
    %p167 = scmp.eq.s32.totalorder %s30, 1
    %p168 = scmp.ne.s32.totalorder %s163, %s165
    %p169 = scmp.eq.s32.totalorder %s30, 0
    %p170 = por %p168, %p169
    %p171 = scmp.ne.s32.totalorder %s163, %s165
    %p172 = scmp.eq.s32.totalorder %s35, 1
    %p173 = por %p171, %p172
    %p174 = scmp.ne.s32.totalorder %s165, %s166
    %p175 = scmp.eq.s32.totalorder %s35, 0
    %p176 = por %p174, %p175
    %p177 = scmp.ne.s32.totalorder %s165, %s166
    %p178 = scmp.eq.s32.totalorder %s36, 1
    %p179 = por %p177, %p178
    %p181 = scmp.ne.s32.totalorder %s166, %s180
    %p182 = scmp.eq.s32.totalorder %s36, 0
    %p183 = por %p181, %p182
    %s185 = sadd.s32 %s184, 1
    %p188 = scmp.eq.s32.totalorder %s30, 1
    %p189 = scmp.ne.s32.totalorder %s184, %s186
    %p190 = scmp.eq.s32.totalorder %s30, 0
    %p191 = por %p189, %p190
    %p192 = scmp.ne.s32.totalorder %s184, %s186
    %p193 = scmp.eq.s32.totalorder %s35, 1
    %p194 = por %p192, %p193
    %p195 = scmp.ne.s32.totalorder %s186, %s187
    %p196 = scmp.eq.s32.totalorder %s35, 0
    %p197 = por %p195, %p196
    %p198 = scmp.ne.s32.totalorder %s186, %s187
    %p199 = scmp.eq.s32.totalorder %s36, 1
    %p200 = por %p198, %p199
    %p202 = scmp.ne.s32.totalorder %s187, %s201
    %p203 = scmp.eq.s32.totalorder %s36, 0
    %p204 = por %p202, %p203
    %s206 = sadd.s32 %s205, 1
    %p209 = scmp.eq.s32.totalorder %s30, 1
    %p210 = scmp.ne.s32.totalorder %s205, %s207
    %p211 = scmp.eq.s32.totalorder %s30, 0
    %p212 = por %p210, %p211
    %p213 = scmp.ne.s32.totalorder %s205, %s207
    %p214 = scmp.eq.s32.totalorder %s35, 1
    %p215 = por %p213, %p214
    %p216 = scmp.ne.s32.totalorder %s207, %s208
    %p217 = scmp.eq.s32.totalorder %s35, 0
    %p218 = por %p216, %p217
    %p219 = scmp.ne.s32.totalorder %s207, %s208
    %p220 = scmp.eq.s32.totalorder %s36, 1
    %p221 = por %p219, %p220
    %p223 = scmp.ne.s32.totalorder %s208, %s222
    %p224 = scmp.eq.s32.totalorder %s36, 0
    %p225 = por %p223, %p224
    %s227 = sadd.s32 %s226, 1
    %p230 = scmp.eq.s32.totalorder %s30, 1
    %p231 = scmp.ne.s32.totalorder %s226, %s228
    %p232 = scmp.eq.s32.totalorder %s30, 0
    %p233 = por %p231, %p232
    %p234 = scmp.ne.s32.totalorder %s226, %s228
    %p235 = scmp.eq.s32.totalorder %s35, 1
    %p236 = por %p234, %p235
    %p237 = scmp.ne.s32.totalorder %s228, %s229
    %p238 = scmp.eq.s32.totalorder %s35, 0
    %p239 = por %p237, %p238
    %p240 = scmp.ne.s32.totalorder %s228, %s229
    %p241 = scmp.eq.s32.totalorder %s36, 1
    %p242 = por %p240, %p241
    %p244 = scmp.ne.s32.totalorder %s229, %s243
    %p245 = scmp.eq.s32.totalorder %s36, 0
    %p246 = por %p244, %p245
    %s248 = sadd.s32 %s247, 1
    %p251 = scmp.eq.s32.totalorder %s30, 1
    %p252 = scmp.ne.s32.totalorder %s247, %s249
    %p253 = scmp.eq.s32.totalorder %s30, 0
    %p254 = por %p252, %p253
    %p255 = scmp.ne.s32.totalorder %s247, %s249
    %p256 = scmp.eq.s32.totalorder %s35, 1
    %p257 = por %p255, %p256
    %p258 = scmp.ne.s32.totalorder %s249, %s250
    %p259 = scmp.eq.s32.totalorder %s35, 0
    %p260 = por %p258, %p259
    %p261 = scmp.ne.s32.totalorder %s249, %s250
    %p262 = scmp.eq.s32.totalorder %s36, 1
    %p263 = por %p261, %p262
    %p265 = scmp.ne.s32.totalorder %s250, %s264
    %p266 = scmp.eq.s32.totalorder %s36, 0
    %p267 = por %p265, %p266
    %s269 = sadd.s32 %s268, 1
    %p272 = scmp.eq.s32.totalorder %s30, 1
    %p273 = scmp.ne.s32.totalorder %s268, %s270
    %p274 = scmp.eq.s32.totalorder %s30, 0
    %p275 = por %p273, %p274
    %p276 = scmp.ne.s32.totalorder %s268, %s270
    %p277 = scmp.eq.s32.totalorder %s35, 1
    %p278 = por %p276, %p277
    %p279 = scmp.ne.s32.totalorder %s270, %s271
    %p280 = scmp.eq.s32.totalorder %s35, 0
    %p281 = por %p279, %p280
    %p282 = scmp.ne.s32.totalorder %s270, %s271
    %p283 = scmp.eq.s32.totalorder %s36, 1
    %p284 = por %p282, %p283
    %p286 = scmp.ne.s32.totalorder %s271, %s285
    %p287 = scmp.eq.s32.totalorder %s36, 0
    %p288 = por %p286, %p287
    %s290 = sadd.s32 %s289, 1
    %p293 = scmp.eq.s32.totalorder %s30, 1
    %p294 = scmp.ne.s32.totalorder %s289, %s291
    %p295 = scmp.eq.s32.totalorder %s30, 0
    %p296 = por %p294, %p295
    %p297 = scmp.ne.s32.totalorder %s289, %s291
    %p298 = scmp.eq.s32.totalorder %s35, 1
    %p299 = por %p297, %p298
    %p300 = scmp.ne.s32.totalorder %s291, %s292
    %p301 = scmp.eq.s32.totalorder %s35, 0
    %p302 = por %p300, %p301
    %p303 = scmp.ne.s32.totalorder %s291, %s292
    %p304 = scmp.eq.s32.totalorder %s36, 1
    %p305 = por %p303, %p304
    %p307 = scmp.ne.s32.totalorder %s292, %s306
    %p308 = scmp.eq.s32.totalorder %s36, 0
    %p309 = por %p307, %p308
    %s311 = sadd.s32 %s310, 1
    %p314 = scmp.eq.s32.totalorder %s30, 1
    %p315 = scmp.ne.s32.totalorder %s310, %s312
    %p316 = scmp.eq.s32.totalorder %s30, 0
    %p317 = por %p315, %p316
    %p318 = scmp.ne.s32.totalorder %s310, %s312
    %p319 = scmp.eq.s32.totalorder %s35, 1
    %p320 = por %p318, %p319
    %p321 = scmp.ne.s32.totalorder %s312, %s313
    %p322 = scmp.eq.s32.totalorder %s35, 0
    %p323 = por %p321, %p322
    %p324 = scmp.ne.s32.totalorder %s312, %s313
    %p325 = scmp.eq.s32.totalorder %s36, 1
    %p326 = por %p324, %p325
    %p328 = scmp.ne.s32.totalorder %s313, %s327
    %p329 = scmp.eq.s32.totalorder %s36, 0
    %p330 = por %p328, %p329
    %s332 = sadd.s32 %s331, 1
    %p335 = scmp.eq.s32.totalorder %s30, 1
    %p336 = scmp.ne.s32.totalorder %s331, %s333
    %p337 = scmp.eq.s32.totalorder %s30, 0
    %p338 = por %p336, %p337
    %p339 = scmp.ne.s32.totalorder %s331, %s333
    %p340 = scmp.eq.s32.totalorder %s35, 1
    %p341 = por %p339, %p340
    %p342 = scmp.ne.s32.totalorder %s333, %s334
    %p343 = scmp.eq.s32.totalorder %s35, 0
    %p344 = por %p342, %p343
    %p345 = scmp.ne.s32.totalorder %s333, %s334
    %p346 = scmp.eq.s32.totalorder %s36, 1
    %p347 = por %p345, %p346
    %p349 = scmp.ne.s32.totalorder %s334, %s348
    %p350 = scmp.eq.s32.totalorder %s36, 0
    %p351 = por %p349, %p350
    %s353 = sadd.s32 %s352, 1
    %p356 = scmp.eq.s32.totalorder %s30, 1
    %p357 = scmp.ne.s32.totalorder %s352, %s354
    %p358 = scmp.eq.s32.totalorder %s30, 0
    %p359 = por %p357, %p358
    %p360 = scmp.ne.s32.totalorder %s352, %s354
    %p361 = scmp.eq.s32.totalorder %s35, 1
    %p362 = por %p360, %p361
    %p363 = scmp.ne.s32.totalorder %s354, %s355
    %p364 = scmp.eq.s32.totalorder %s35, 0
    %p365 = por %p363, %p364
    %p366 = scmp.ne.s32.totalorder %s354, %s355
    %p367 = scmp.eq.s32.totalorder %s36, 1
    %p368 = por %p366, %p367
    %p370 = scmp.ne.s32.totalorder %s355, %s369
    %p371 = scmp.eq.s32.totalorder %s36, 0
    %p372 = por %p370, %p371
    %s374 = sadd.s32 %s373, 1
    %p377 = scmp.eq.s32.totalorder %s30, 1
    %p378 = scmp.ne.s32.totalorder %s373, %s375
    %p379 = scmp.eq.s32.totalorder %s30, 0
    %p380 = por %p378, %p379
    %p381 = scmp.ne.s32.totalorder %s373, %s375
    %p382 = scmp.eq.s32.totalorder %s35, 1
    %p383 = por %p381, %p382
    %p384 = scmp.ne.s32.totalorder %s375, %s376
    %p385 = scmp.eq.s32.totalorder %s35, 0
    %p386 = por %p384, %p385
    %p387 = scmp.ne.s32.totalorder %s375, %s376
    %p388 = scmp.eq.s32.totalorder %s36, 1
    %p389 = por %p387, %p388
    %p391 = scmp.ne.s32.totalorder %s376, %s390
    %p392 = scmp.eq.s32.totalorder %s36, 0
    %p393 = por %p391, %p392
    %s395 = sadd.s32 %s394, 1
    %p398 = scmp.eq.s32.totalorder %s30, 1
    %p399 = scmp.ne.s32.totalorder %s394, %s396
    %p400 = scmp.eq.s32.totalorder %s30, 0
    %p401 = por %p399, %p400
    %p402 = scmp.ne.s32.totalorder %s394, %s396
    %p403 = scmp.eq.s32.totalorder %s35, 1
    %p404 = por %p402, %p403
    %p405 = scmp.ne.s32.totalorder %s396, %s397
    %p406 = scmp.eq.s32.totalorder %s35, 0
    %p407 = por %p405, %p406
    %p408 = scmp.ne.s32.totalorder %s396, %s397
    %p409 = scmp.eq.s32.totalorder %s36, 1
    %p410 = por %p408, %p409
    %p412 = scmp.ne.s32.totalorder %s397, %s411
    %p413 = scmp.eq.s32.totalorder %s36, 0
    %p414 = por %p412, %p413
    %s416 = sadd.s32 %s415, 1
    %p419 = scmp.eq.s32.totalorder %s30, 1
    %p420 = scmp.ne.s32.totalorder %s415, %s417
    %p421 = scmp.eq.s32.totalorder %s30, 0
    %p422 = por %p420, %p421
    %p423 = scmp.ne.s32.totalorder %s415, %s417
    %p424 = scmp.eq.s32.totalorder %s35, 1
    %p425 = por %p423, %p424
    %p426 = scmp.ne.s32.totalorder %s417, %s418
    %p427 = scmp.eq.s32.totalorder %s35, 0
    %p428 = por %p426, %p427
    %p429 = scmp.ne.s32.totalorder %s417, %s418
    %p430 = scmp.eq.s32.totalorder %s36, 1
    %p431 = por %p429, %p430
    %p433 = scmp.ne.s32.totalorder %s418, %s432
    %p434 = scmp.eq.s32.totalorder %s36, 0
    %p435 = por %p433, %p434
    %s437 = sadd.s32 %s436, 1
    %p440 = scmp.eq.s32.totalorder %s30, 1
    %p441 = scmp.ne.s32.totalorder %s436, %s438
    %p442 = scmp.eq.s32.totalorder %s30, 0
    %p443 = por %p441, %p442
    %p444 = scmp.ne.s32.totalorder %s436, %s438
    %p445 = scmp.eq.s32.totalorder %s35, 1
    %p446 = por %p444, %p445
    %p447 = scmp.ne.s32.totalorder %s438, %s439
    %p448 = scmp.eq.s32.totalorder %s35, 0
    %p449 = por %p447, %p448
    %p450 = scmp.ne.s32.totalorder %s438, %s439
    %p451 = scmp.eq.s32.totalorder %s36, 1
    %p452 = por %p450, %p451
    %p454 = scmp.ne.s32.totalorder %s439, %s453
    %p455 = scmp.eq.s32.totalorder %s36, 0
    %p456 = por %p454, %p455
    %s458 = sadd.s32 %s457, 1
    %p461 = scmp.eq.s32.totalorder %s30, 1
    %p462 = scmp.ne.s32.totalorder %s457, %s459
    %p463 = scmp.eq.s32.totalorder %s30, 0
    %p464 = por %p462, %p463
    %p465 = scmp.ne.s32.totalorder %s457, %s459
    %p466 = scmp.eq.s32.totalorder %s35, 1
    %p467 = por %p465, %p466
    %p468 = scmp.ne.s32.totalorder %s459, %s460
    %p469 = scmp.eq.s32.totalorder %s35, 0
    %p470 = por %p468, %p469
    %p471 = scmp.ne.s32.totalorder %s459, %s460
    %p472 = scmp.eq.s32.totalorder %s36, 1
    %p473 = por %p471, %p472
    %p475 = scmp.ne.s32.totalorder %s460, %s474
    %p476 = scmp.eq.s32.totalorder %s36, 0
    %p477 = por %p475, %p476
    %s479 = sadd.s32 %s478, 1
    %p482 = scmp.eq.s32.totalorder %s30, 1
    %p483 = scmp.ne.s32.totalorder %s478, %s480
    %p484 = scmp.eq.s32.totalorder %s30, 0
    %p485 = por %p483, %p484
    %p486 = scmp.ne.s32.totalorder %s478, %s480
    %p487 = scmp.eq.s32.totalorder %s35, 1
    %p488 = por %p486, %p487
    %p489 = scmp.ne.s32.totalorder %s480, %s481
    %p490 = scmp.eq.s32.totalorder %s35, 0
    %p491 = por %p489, %p490
    %p492 = scmp.ne.s32.totalorder %s480, %s481
    %p493 = scmp.eq.s32.totalorder %s36, 1
    %p494 = por %p492, %p493
    %p496 = scmp.ne.s32.totalorder %s481, %s495
    %p497 = scmp.eq.s32.totalorder %s36, 0
    %p498 = por %p496, %p497
    %s500 = sadd.s32 %s499, 1
    %p503 = scmp.eq.s32.totalorder %s30, 1
    %p504 = scmp.ne.s32.totalorder %s499, %s501
    %p505 = scmp.eq.s32.totalorder %s30, 0
    %p506 = por %p504, %p505
    %p507 = scmp.ne.s32.totalorder %s499, %s501
    %p508 = scmp.eq.s32.totalorder %s35, 1
    %p509 = por %p507, %p508
    %p510 = scmp.ne.s32.totalorder %s501, %s502
    %p511 = scmp.eq.s32.totalorder %s35, 0
    %p512 = por %p510, %p511
    %p513 = scmp.ne.s32.totalorder %s501, %s502
    %p514 = scmp.eq.s32.totalorder %s36, 1
    %p515 = por %p513, %p514
    %p517 = scmp.ne.s32.totalorder %s502, %s516
    %p518 = scmp.eq.s32.totalorder %s36, 0
    %p519 = por %p517, %p518
    %s521 = sadd.s32 %s520, 1
    %p524 = scmp.eq.s32.totalorder %s30, 1
    %p525 = scmp.ne.s32.totalorder %s520, %s522
    %p526 = scmp.eq.s32.totalorder %s30, 0
    %p527 = por %p525, %p526
    %p528 = scmp.ne.s32.totalorder %s520, %s522
    %p529 = scmp.eq.s32.totalorder %s35, 1
    %p530 = por %p528, %p529
    %p531 = scmp.ne.s32.totalorder %s522, %s523
    %p532 = scmp.eq.s32.totalorder %s35, 0
    %p533 = por %p531, %p532
    %p534 = scmp.ne.s32.totalorder %s522, %s523
    %p535 = scmp.eq.s32.totalorder %s36, 1
    %p536 = por %p534, %p535
    %p538 = scmp.ne.s32.totalorder %s523, %s537
    %p539 = scmp.eq.s32.totalorder %s36, 0
    %p540 = por %p538, %p539
    %s542 = sadd.s32 %s541, 1
    %p545 = scmp.eq.s32.totalorder %s30, 1
    %p546 = scmp.ne.s32.totalorder %s541, %s543
    %p547 = scmp.eq.s32.totalorder %s30, 0
    %p548 = por %p546, %p547
    %p549 = scmp.ne.s32.totalorder %s541, %s543
    %p550 = scmp.eq.s32.totalorder %s35, 1
    %p551 = por %p549, %p550
    %p552 = scmp.ne.s32.totalorder %s543, %s544
    %p553 = scmp.eq.s32.totalorder %s35, 0
    %p554 = por %p552, %p553
    %p555 = scmp.ne.s32.totalorder %s543, %s544
    %p556 = scmp.eq.s32.totalorder %s36, 1
    %p557 = por %p555, %p556
    %p559 = scmp.ne.s32.totalorder %s544, %s558
    %p560 = scmp.eq.s32.totalorder %s36, 0
    %p561 = por %p559, %p560
    %s562 = ssub.s32 %s30, %s37
    %p563 = scmp.eq.s32.totalorder %s562, 0
    %s565 = sadd.s32 %s564, 1
    %s566 = scalar_select %p563, %s564, %s565
    %p569 = pneg %p563
    %p570 = scmp.eq.s32.totalorder %s30, 1
    %p571 = por %p569, %p570
    %p572 = scmp.ne.s32.totalorder %s564, %s567
    %p573 = scmp.eq.s32.totalorder %s30, 0
    %p574 = por %p572, %p573
    %p575 = scmp.ne.s32.totalorder %s564, %s567
    %p576 = scmp.eq.s32.totalorder %s35, 1
    %p577 = por %p575, %p576
    %p578 = scmp.ne.s32.totalorder %s567, %s568
    %p579 = scmp.eq.s32.totalorder %s35, 0
    %p580 = por %p578, %p579
    %p581 = scmp.ne.s32.totalorder %s567, %s568
    %p582 = scmp.eq.s32.totalorder %s36, 1
    %p583 = por %p581, %p582
    %p585 = scmp.ne.s32.totalorder %s568, %s584
    %p586 = scmp.eq.s32.totalorder %s36, 0
    %p587 = por %p585, %p586
    %p588 = scmp.le.s32.totalorder 1, %s30
    %p589 = scmp.lt.s32.totalorder %s30, 3
    %p590 = pnand %p588, %p589
    %p591 = pneg %p590
    // Predicated region
    $region9: #{bart_generator_train_forward.8} parent=5 // pred_check
      _
    $region10: #{bart_generator_train_forward.8} parent=5 // pred_check_branch
      %593 = sbr.rel (%p590) target = $region12
    $region11: #{bart_generator_train_forward.8} parent=5 // pred_region
      %s594 = ssub.s32 %s30, 1
      // Predicated region
      $region13: #{bart_generator_train_forward.8} parent=11 // pred_check
        %p595 = pneg %p155
      $region14: #{bart_generator_train_forward.8} parent=11 // pred_check_branch
        %597 = sbr.rel (%p595) target = $region16
      $region15: #{bart_generator_train_forward.8} parent=11 // pred_region
        _
      $region16: #{bart_generator_train_forward.8} parent=11 // pred_fallthru
        _
      // Predicated region
      $region17: #{bart_generator_train_forward.8} parent=11 // pred_check
        %p598 = pneg %p176
      $region18: #{bart_generator_train_forward.8} parent=11 // pred_check_branch
        %600 = sbr.rel (%p598) target = $region20
      $region19: #{bart_generator_train_forward.8} parent=11 // pred_region
        _
      $region20: #{bart_generator_train_forward.8} parent=11 // pred_fallthru
        _
      // Predicated region
      $region21: #{bart_generator_train_forward.8} parent=11 // pred_check
        %p601 = pneg %p197
      $region22: #{bart_generator_train_forward.8} parent=11 // pred_check_branch
        %603 = sbr.rel (%p601) target = $region24
      $region23: #{bart_generator_train_forward.8} parent=11 // pred_region
        _
      $region24: #{bart_generator_train_forward.8} parent=11 // pred_fallthru
        _
      // Predicated region
      $region25: #{bart_generator_train_forward.8} parent=11 // pred_check
        %p604 = pneg %p218
      $region26: #{bart_generator_train_forward.8} parent=11 // pred_check_branch
        %606 = sbr.rel (%p604) target = $region28
      $region27: #{bart_generator_train_forward.8} parent=11 // pred_region
        _
      $region28: #{bart_generator_train_forward.8} parent=11 // pred_fallthru
        _
      // Predicated region
      $region29: #{bart_generator_train_forward.8} parent=11 // pred_check
        %p607 = pneg %p239
      $region30: #{bart_generator_train_forward.8} parent=11 // pred_check_branch
        %609 = sbr.rel (%p607) target = $region32
      $region31: #{bart_generator_train_forward.8} parent=11 // pred_region
        _
      $region32: #{bart_generator_train_forward.8} parent=11 // pred_fallthru
        _
      // Predicated region
      $region33: #{bart_generator_train_forward.8} parent=11 // pred_check
        %p610 = pneg %p260
      $region34: #{bart_generator_train_forward.8} parent=11 // pred_check_branch
        %612 = sbr.rel (%p610) target = $region36
      $region35: #{bart_generator_train_forward.8} parent=11 // pred_region
        _
      $region36: #{bart_generator_train_forward.8} parent=11 // pred_fallthru
        _
      // Predicated region
      $region37: #{bart_generator_train_forward.8} parent=11 // pred_check
        %p613 = pneg %p281
      $region38: #{bart_generator_train_forward.8} parent=11 // pred_check_branch
        %615 = sbr.rel (%p613) target = $region40
      $region39: #{bart_generator_train_forward.8} parent=11 // pred_region
        _
      $region40: #{bart_generator_train_forward.8} parent=11 // pred_fallthru
        _
      // Predicated region
      $region41: #{bart_generator_train_forward.8} parent=11 // pred_check
        %p616 = pneg %p302
      $region42: #{bart_generator_train_forward.8} parent=11 // pred_check_branch
        %618 = sbr.rel (%p616) target = $region44
      $region43: #{bart_generator_train_forward.8} parent=11 // pred_region
        _
      $region44: #{bart_generator_train_forward.8} parent=11 // pred_fallthru
        _
      // Predicated region
      $region45: #{bart_generator_train_forward.8} parent=11 // pred_check
        %p619 = pneg %p323
      $region46: #{bart_generator_train_forward.8} parent=11 // pred_check_branch
        %621 = sbr.rel (%p619) target = $region48
      $region47: #{bart_generator_train_forward.8} parent=11 // pred_region
        _
      $region48: #{bart_generator_train_forward.8} parent=11 // pred_fallthru
        _
      // Predicated region
      $region49: #{bart_generator_train_forward.8} parent=11 // pred_check
        %p622 = pneg %p344
      $region50: #{bart_generator_train_forward.8} parent=11 // pred_check_branch
        %624 = sbr.rel (%p622) target = $region52
      $region51: #{bart_generator_train_forward.8} parent=11 // pred_region
        _
      $region52: #{bart_generator_train_forward.8} parent=11 // pred_fallthru
        _
      // Predicated region
      $region53: #{bart_generator_train_forward.8} parent=11 // pred_check
        %p625 = pneg %p365
      $region54: #{bart_generator_train_forward.8} parent=11 // pred_check_branch
        %627 = sbr.rel (%p625) target = $region56
      $region55: #{bart_generator_train_forward.8} parent=11 // pred_region
        _
      $region56: #{bart_generator_train_forward.8} parent=11 // pred_fallthru
        _
      // Predicated region
      $region57: #{bart_generator_train_forward.8} parent=11 // pred_check
        %p628 = pneg %p386
      $region58: #{bart_generator_train_forward.8} parent=11 // pred_check_branch
        %630 = sbr.rel (%p628) target = $region60
      $region59: #{bart_generator_train_forward.8} parent=11 // pred_region
        _
      $region60: #{bart_generator_train_forward.8} parent=11 // pred_fallthru
        _
      // Predicated region
      $region61: #{bart_generator_train_forward.8} parent=11 // pred_check
        %p631 = pneg %p407
      $region62: #{bart_generator_train_forward.8} parent=11 // pred_check_branch
        %633 = sbr.rel (%p631) target = $region64
      $region63: #{bart_generator_train_forward.8} parent=11 // pred_region
        _
      $region64: #{bart_generator_train_forward.8} parent=11 // pred_fallthru
        _
      // Predicated region
      $region65: #{bart_generator_train_forward.8} parent=11 // pred_check
        %p634 = pneg %p428
      $region66: #{bart_generator_train_forward.8} parent=11 // pred_check_branch
        %636 = sbr.rel (%p634) target = $region68
      $region67: #{bart_generator_train_forward.8} parent=11 // pred_region
        _
      $region68: #{bart_generator_train_forward.8} parent=11 // pred_fallthru
        _
      // Predicated region
      $region69: #{bart_generator_train_forward.8} parent=11 // pred_check
        %p637 = pneg %p449
      $region70: #{bart_generator_train_forward.8} parent=11 // pred_check_branch
        %639 = sbr.rel (%p637) target = $region72
      $region71: #{bart_generator_train_forward.8} parent=11 // pred_region
        _
      $region72: #{bart_generator_train_forward.8} parent=11 // pred_fallthru
        _
      // Predicated region
      $region73: #{bart_generator_train_forward.8} parent=11 // pred_check
        %p640 = pneg %p470
      $region74: #{bart_generator_train_forward.8} parent=11 // pred_check_branch
        %642 = sbr.rel (%p640) target = $region76
      $region75: #{bart_generator_train_forward.8} parent=11 // pred_region
        _
      $region76: #{bart_generator_train_forward.8} parent=11 // pred_fallthru
        _
      // Predicated region
      $region77: #{bart_generator_train_forward.8} parent=11 // pred_check
        %p643 = pneg %p491
      $region78: #{bart_generator_train_forward.8} parent=11 // pred_check_branch
        %645 = sbr.rel (%p643) target = $region80
      $region79: #{bart_generator_train_forward.8} parent=11 // pred_region
        _
      $region80: #{bart_generator_train_forward.8} parent=11 // pred_fallthru
        _
      // Predicated region
      $region81: #{bart_generator_train_forward.8} parent=11 // pred_check
        %p646 = pneg %p512
      $region82: #{bart_generator_train_forward.8} parent=11 // pred_check_branch
        %648 = sbr.rel (%p646) target = $region84
      $region83: #{bart_generator_train_forward.8} parent=11 // pred_region
        _
      $region84: #{bart_generator_train_forward.8} parent=11 // pred_fallthru
        _
      // Predicated region
      $region85: #{bart_generator_train_forward.8} parent=11 // pred_check
        %p649 = pneg %p533
      $region86: #{bart_generator_train_forward.8} parent=11 // pred_check_branch
        %651 = sbr.rel (%p649) target = $region88
      $region87: #{bart_generator_train_forward.8} parent=11 // pred_region
        _
      $region88: #{bart_generator_train_forward.8} parent=11 // pred_fallthru
        _
      // Predicated region
      $region89: #{bart_generator_train_forward.8} parent=11 // pred_check
        %p652 = pneg %p554
      $region90: #{bart_generator_train_forward.8} parent=11 // pred_check_branch
        %654 = sbr.rel (%p652) target = $region92
      $region91: #{bart_generator_train_forward.8} parent=11 // pred_region
        _
      $region92: #{bart_generator_train_forward.8} parent=11 // pred_fallthru
        _
    $region12: #{bart_generator_train_forward.8} parent=5 // pred_fallthru
      _
    %p655 = scmp.lt.s32.totalorder %s30, 2
    // Predicated region
    $region93: #{bart_generator_train_forward.8} parent=5 // pred_check
      %p656 = pneg %p655
    $region94: #{bart_generator_train_forward.8} parent=5 // pred_check_branch
      %658 = sbr.rel (%p656) target = $region96
    $region95: #{bart_generator_train_forward.8} parent=5 // pred_region
      // Predicated region
      $region97: #{bart_generator_train_forward.8} parent=95 // pred_check
        %p659 = pneg %p50
      $region98: #{bart_generator_train_forward.8} parent=95 // pred_check_branch
        %661 = sbr.rel (%p659) target = $region100
      $region99: #{bart_generator_train_forward.8} parent=95 // pred_region
        %p662 = scmp.lt.s32.totalorder %s30, 1
        %s663 = scalar_select %p662, %s30, 1
        %s664 = smul.addr %s663, 8
        %s665 = scalar_lea.vmem %s0, %s664
      $region100: #{bart_generator_train_forward.8} parent=95 // pred_fallthru
        _
      // Predicated region
      $region101: #{bart_generator_train_forward.8} parent=95 // pred_check
        %p666 = pneg %p76
      $region102: #{bart_generator_train_forward.8} parent=95 // pred_check_branch
        %668 = sbr.rel (%p666) target = $region104
      $region103: #{bart_generator_train_forward.8} parent=95 // pred_region
        %p669 = scmp.lt.s32.totalorder %s30, 1
        %s670 = scalar_select %p669, %s30, 1
        %s671 = smul.addr %s670, 8
        %s672 = scalar_lea.vmem %s1, %s671
      $region104: #{bart_generator_train_forward.8} parent=95 // pred_fallthru
        _
      // Predicated region
      $region105: #{bart_generator_train_forward.8} parent=95 // pred_check
        %p673 = pneg %p102
      $region106: #{bart_generator_train_forward.8} parent=95 // pred_check_branch
        %675 = sbr.rel (%p673) target = $region108
      $region107: #{bart_generator_train_forward.8} parent=95 // pred_region
        %p676 = scmp.lt.s32.totalorder %s30, 1
        %s677 = scalar_select %p676, %s30, 1
        %s678 = scalar_lea.vmem %s2, %s677
      $region108: #{bart_generator_train_forward.8} parent=95 // pred_fallthru
        _
      // Predicated region
      $region109: #{bart_generator_train_forward.8} parent=95 // pred_check
        %p679 = pneg %p128
      $region110: #{bart_generator_train_forward.8} parent=95 // pred_check_branch
        %681 = sbr.rel (%p679) target = $region112
      $region111: #{bart_generator_train_forward.8} parent=95 // pred_region
        %p682 = scmp.lt.s32.totalorder %s30, 1
        %s683 = scalar_select %p682, %s30, 1
        %s684 = scalar_lea.vmem %s3, %s683
      $region112: #{bart_generator_train_forward.8} parent=95 // pred_fallthru
        _
    $region96: #{bart_generator_train_forward.8} parent=5 // pred_fallthru
      _
    %p685 = scmp.le.s32.totalorder 1, %s30
    %p686 = scmp.lt.s32.totalorder %s30, 3
    %p687 = pnand %p685, %p686
    %p688 = pneg %p687
    // Predicated region
    $region113: #{bart_generator_train_forward.8} parent=5 // pred_check
      _
    $region114: #{bart_generator_train_forward.8} parent=5 // pred_check_branch
      %690 = sbr.rel (%p687) target = $region116
    $region115: #{bart_generator_train_forward.8} parent=5 // pred_region
      %s691 = ssub.s32 %s30, 1
      %p692 = scmp.lt.s32.totalorder %s35, 1
      %s693 = scalar_select %p692, %s35, 1
      %s694 = smul.addr %s693, 8
      %s695 = scalar_lea.vmem %s0, %s694
      %p696 = pneg %p56
      %p697 = pneg %p53
      %p698 = scmp.lt.s32.totalorder %s35, 1
      %s699 = scalar_select %p698, %s35, 1
      %s700 = smul.addr %s699, 8
      %s701 = scalar_lea.vmem %s1, %s700
      %p702 = pneg %p82
      %p703 = pneg %p79
      %p704 = scmp.lt.s32.totalorder %s35, 1
      %s705 = scalar_select %p704, %s35, 1
      %s706 = scalar_lea.vmem %s2, %s705
      %p707 = pneg %p108
      %p708 = pneg %p105
      %p709 = scmp.lt.s32.totalorder %s35, 1
      %s710 = scalar_select %p709, %s35, 1
      %s711 = scalar_lea.vmem %s3, %s710
      %p712 = pneg %p134
      %p713 = pneg %p131
      %p714 = pneg %p155
      %p715 = pneg %p152
      %p716 = pneg %p176
      %p717 = pneg %p173
      %p718 = pneg %p197
      %p719 = pneg %p194
      %p720 = pneg %p218
      %p721 = pneg %p215
      %p722 = pneg %p239
      %p723 = pneg %p236
      %p724 = pneg %p260
      %p725 = pneg %p257
      %p726 = pneg %p281
      %p727 = pneg %p278
      %p728 = pneg %p302
      %p729 = pneg %p299
      %p730 = pneg %p323
      %p731 = pneg %p320
      %p732 = pneg %p344
      %p733 = pneg %p341
      %p734 = pneg %p365
      %p735 = pneg %p362
      %p736 = pneg %p386
      %p737 = pneg %p383
      %p738 = pneg %p407
      %p739 = pneg %p404
      %p740 = pneg %p428
      %p741 = pneg %p425
      %p742 = pneg %p449
      %p743 = pneg %p446
      %p744 = pneg %p470
      %p745 = pneg %p467
      %p746 = pneg %p491
      %p747 = pneg %p488
      %p748 = pneg %p512
      %p749 = pneg %p509
      %p750 = pneg %p533
      %p751 = pneg %p530
      %p752 = pneg %p554
      %p753 = pneg %p551
      %p754 = pneg %p580
      %p755 = pneg %p577
      %p756 = scmp.lt.s32.totalorder %s35, 1
      %s757 = scalar_select %p756, %s35, 1
      %s758 = smul.addr %s757, 8
      %s759 = scalar_lea.vmem %s24, %s758
      %p760 = scmp.lt.s32.totalorder %s35, 1
      %s761 = scalar_select %p760, %s35, 1
      %s762 = smul.addr %s761, 8
      %s763 = scalar_lea.vmem %s0, %s762
      %p764 = scmp.lt.s32.totalorder %s35, 1
      %s765 = scalar_select %p764, %s35, 1
      %s766 = smul.addr %s765, 8
      %s767 = scalar_lea.vmem %s1, %s766
      %p768 = scmp.lt.s32.totalorder %s35, 1
      %s769 = scalar_select %p768, %s35, 1
      %s770 = scalar_lea.vmem %s2, %s769
      %p771 = scmp.lt.s32.totalorder %s35, 1
      %s772 = scalar_select %p771, %s35, 1
      %s773 = scalar_lea.vmem %s3, %s772
      %p774 = scmp.lt.s32.totalorder %s35, 1
      %s775 = scalar_select %p774, %s35, 1
      %s776 = smul.addr %s775, 8
      %s777 = scalar_lea.vmem %s24, %s776
      %v779 = vld [vmem:[%s763] sm:$0xff]
      %v780 = vlaneseq
      %v781 = vshrl.u32 %v780, 7
      %v782 = vlaneseq
      %v783 = vand.u32 %v782, 127
      %vm784 = vcmp.ge.s32.totalorder %v781, %v783
      %v785 = vsel %vm784, 0.0, -1e+09
      %v786 = vld [vmem:[%s770] sm:$0x1]
      %v788 = vlaneseq
      %v789 = vshrl.u32 %v788, 7
      %v790 = vsub.s32 0, %v789
      %v791 = vrot.slane %v786, %v790
      %v793 = vadd.f32 %v785, %v791
      %v794 = vld [vmem:[%s4] sm:$0xf]
      %v795 = vld [vmem:[%s4 + $0x4] sm:$0xf]
      %v796 = vld [vmem:[%s4 + $0x8] sm:$0xf]
      %v797 = vld [vmem:[%s4 + $0xc] sm:$0xf]
      %v798 = vld [vmem:[%s5] sm:$0x1]
      %v799 = vpack.c.bf16 %v779, %v779
      %v801 = vlaneseq
      %v802 = vshrl.u32 %v801, 7
      %v803 = vsub.s32 0, %v802
      %v804 = vrot.slane %v798, %v803
      %v810 = vunpack.c.l.b16 %v794
      %v811 = vunpack.c.l.b16 %v795
      %v812 = vunpack.c.l.b16 %v796
      %v813 = vunpack.c.l.b16 %v797
      %v814 = vpack.c.b16 %v811, %v810
      %v815 = vpack.c.b16 %v813, %v812
      %vm818 = vcmask 261120
      %v820 = vsel %vm818, %v799, 0
      %822 = vmatprep.subr.bf16.mxu0 0
      %823 = vmatpush1.bf16.msra.mxu0 %v814
      %824 = vmatprep.subr.bf16.mxu0 0
      %825 = vmatpush1.bf16.msra.mxu0 %v815
      %826 = vmatprep.subr.bf16.mxu0 0
      %827 = vmatpush1.bf16.msra.mxu0 0
      %828 = vmatprep.subr.bf16.mxu0 0
      %829 = vmatpush1.bf16.msra.mxu0 0
      %830 = vmatprep.subr.bf16.mxu0 0
      %831 = vmatpush1.bf16.msra.mxu0 0
      %832 = vmatprep.subr.bf16.mxu0 0
      %833 = vmatpush1.bf16.msra.mxu0 0
      %834 = vmatprep.subr.bf16.mxu0 0
      %835 = vmatpush1.bf16.msra.mxu0 0
      %836 = vmatprep.subr.bf16.mxu0 0
      %837 = vmatpush1.bf16.msra.mxu0 0
      %838 = vmatprep.subr.bf16.mxu0 0
      %839 = vmatpush1.bf16.msra.mxu0 0
      %840 = vmatprep.subr.bf16.mxu0 0
      %841 = vmatpush1.bf16.msra.mxu0 0
      %842 = vmatprep.subr.bf16.mxu0 0
      %843 = vmatpush1.bf16.msra.mxu0 0
      %844 = vmatprep.subr.bf16.mxu0 0
      %845 = vmatpush1.bf16.msra.mxu0 0
      %846 = vmatprep.subr.bf16.mxu0 0
      %847 = vmatpush1.bf16.msra.mxu0 0
      %848 = vmatprep.subr.bf16.mxu0 0
      %849 = vmatpush1.bf16.msra.mxu0 0
      %850 = vmatprep.subr.bf16.mxu0 0
      %851 = vmatpush1.bf16.msra.mxu0 0
      %852 = vmatprep.subr.bf16.mxu0 0
      %853 = vmatpush1.bf16.msra.mxu0 0
      %854 = vmatprep.mubr.bf16.mxu0 0
      %855 = vmatmul.mubr.bf16.gmra.mrb[0].mxu0 %v820
      %v856 = vpop.f32.mrb[0].mxu0
      %v857 = vadd.f32 %v804, %v856
      %v858 = vpop.f32.mrb[0].mxu0
      %v859 = vpop.f32.mrb[0].mxu0
      %v860 = vpop.f32.mrb[0].mxu0
      %861 = vdwg.mxu0
      %v862 = vld [vmem:[%s6] sm:$0xf]
      %v863 = vld [vmem:[%s6 + $0x4] sm:$0xf]
      %v864 = vld [vmem:[%s6 + $0x8] sm:$0xf]
      %v865 = vld [vmem:[%s6 + $0xc] sm:$0xf]
      %v866 = vld [vmem:[%s7] sm:$0x1]
      %v867 = vpack.c.bf16 %v857, %v857
      %869 = vrot.lane.b32.xlu0 %v867, 96
      %v870 = vpop.permute.xlu0 %869
      %vm871 = vcmask 130048
      %v873 = vsel %vm871, %v867, 0
      %v876 = vsel %vm871, %v870, 0
      %878 = vmatprep.subr.bf16.mxu0 0
      %879 = vmatpush1.bf16.xpose.msra.mxu0 %v876
      %880 = vmatprep.subr.bf16.mxu0 0
      %881 = vmatpush1.bf16.xpose.msra.mxu0 0
      %882 = vmatprep.subr.bf16.mxu0 0
      %883 = vmatpush1.bf16.xpose.msra.mxu0 0
      %884 = vmatprep.subr.bf16.mxu0 0
      %885 = vmatpush1.bf16.xpose.msra.mxu0 0
      %886 = vmatprep.subr.bf16.mxu0 0
      %887 = vmatpush1.bf16.xpose.msra.mxu0 0
      %888 = vmatprep.subr.bf16.mxu0 0
      %889 = vmatpush1.bf16.xpose.msra.mxu0 0
      %890 = vmatprep.subr.bf16.mxu0 0
      %891 = vmatpush1.bf16.xpose.msra.mxu0 0
      %892 = vmatprep.subr.bf16.mxu0 0
      %893 = vmatpush1.bf16.xpose.msra.mxu0 0
      %894 = vmatprep.subr.bf16.mxu0 0
      %895 = vmatpush1.bf16.xpose.msra.mxu0 0
      %896 = vmatprep.subr.bf16.mxu0 0
      %897 = vmatpush1.bf16.xpose.msra.mxu0 0
      %898 = vmatprep.subr.bf16.mxu0 0
      %899 = vmatpush1.bf16.xpose.msra.mxu0 0
      %900 = vmatprep.subr.bf16.mxu0 0
      %901 = vmatpush1.bf16.xpose.msra.mxu0 0
      %902 = vmatprep.subr.bf16.mxu0 0
      %903 = vmatpush1.bf16.xpose.msra.mxu0 0
      %904 = vmatprep.subr.bf16.mxu0 0
      %905 = vmatpush1.bf16.xpose.msra.mxu0 0
      %906 = vmatprep.subr.bf16.mxu0 0
      %907 = vmatpush1.bf16.xpose.msra.mxu0 0
      %908 = vmatprep.subr.bf16.mxu0 0
      %909 = vmatpush1.bf16.xpose.msra.mxu0 0
      %910 = vmatprep.mubr.bf16.mxu0 0
      %911 = vmatmul.mubr.bf16.gmra.mrb[0].mxu0 %v873
      %v912 = vpop.f32.mrb[0].mxu0
      %v913 = vadd.f32 0.0, %v912
      %v914 = vpop.f32.mrb[0].mxu0
      %v915 = vpop.f32.mrb[0].mxu0
      %v916 = vpop.f32.mrb[0].mxu0
      %917 = vdwg.mxu0
      %v918 = vmul.f32 %v913, 0.25
      %v919 = vadd.f32 %v918, %v793
      %vm920 = vcmask 64512
      %v921 = vsel %vm920, %v919, -inf
      %922 = vmax.xlane.f32.xlu0 %v921
      %v923 = vpop.xlane.xlu0 %922
      %v924 = vsub.f32 %v919, %v923
      %v925 = vmul.f32 %v924, 1.442695
      %v926 = vpow.pop %v925
      %v927 = vsel %vm920, %v926, 0.0
      %928 = vadd.xlane.f32.xlu0 %v927
      %v929 = vpop.xlane.xlu0 %928
      %v930 = vrcp.pop %v929
      %v931 = vmul.f32 %v926, %v930
      %v932 = vpack.c.bf16 %v931, %v931
      %933 = vrot.lane.b32.xlu0 %v867, 64
      %v934 = vpop.permute.xlu0 %933
      %v936 = vsel %vm920, %v932, 0
      %vm938 = vcmask 1043456
      %v940 = vsel %vm938, %v934, 0
      %942 = vmatprep.subr.bf16.mxu0 0
      %943 = vmatpush1.bf16.msra.mxu0 %v940
      %944 = vmatprep.subr.bf16.mxu0 0
      %945 = vmatpush1.bf16.msra.mxu0 0
      %946 = vmatprep.subr.bf16.mxu0 0
      %947 = vmatpush1.bf16.msra.mxu0 0
      %948 = vmatprep.subr.bf16.mxu0 0
      %949 = vmatpush1.bf16.msra.mxu0 0
      %950 = vmatprep.subr.bf16.mxu0 0
      %951 = vmatpush1.bf16.msra.mxu0 0
      %952 = vmatprep.subr.bf16.mxu0 0
      %953 = vmatpush1.bf16.msra.mxu0 0
      %954 = vmatprep.subr.bf16.mxu0 0
      %955 = vmatpush1.bf16.msra.mxu0 0
      %956 = vmatprep.subr.bf16.mxu0 0
      %957 = vmatpush1.bf16.msra.mxu0 0
      %958 = vmatprep.subr.bf16.mxu0 0
      %959 = vmatpush1.bf16.msra.mxu0 0
      %960 = vmatprep.subr.bf16.mxu0 0
      %961 = vmatpush1.bf16.msra.mxu0 0
      %962 = vmatprep.subr.bf16.mxu0 0
      %963 = vmatpush1.bf16.msra.mxu0 0
      %964 = vmatprep.subr.bf16.mxu0 0
      %965 = vmatpush1.bf16.msra.mxu0 0
      %966 = vmatprep.subr.bf16.mxu0 0
      %967 = vmatpush1.bf16.msra.mxu0 0
      %968 = vmatprep.subr.bf16.mxu0 0
      %969 = vmatpush1.bf16.msra.mxu0 0
      %970 = vmatprep.subr.bf16.mxu0 0
      %971 = vmatpush1.bf16.msra.mxu0 0
      %972 = vmatprep.subr.bf16.mxu0 0
      %973 = vmatpush1.bf16.msra.mxu0 0
      %974 = vmatprep.mubr.bf16.mxu0 0
      %975 = vmatmul.mubr.bf16.gmra.mrb[0].mxu0 %v936
      %v976 = vpop.f32.mrb[0].mxu0
      %v977 = vadd.f32 0.0, %v976
      %v978 = vpop.f32.mrb[0].mxu0
      %v979 = vpop.f32.mrb[0].mxu0
      %v980 = vpop.f32.mrb[0].mxu0
      %981 = vdwg.mxu0
      %982 = vrot.lane.b32.xlu0 %v867, 112
      %v983 = vpop.permute.xlu0 %982
      %984 = vrot.lane.b32.xlu0 %v867, 80
      %v985 = vpop.permute.xlu0 %984
      %v987 = vsel %vm871, %v983, 0
      %v990 = vsel %vm871, %v985, 0
      %992 = vmatprep.subr.bf16.mxu0 0
      %993 = vmatpush1.bf16.xpose.msra.mxu0 %v990
      %994 = vmatprep.subr.bf16.mxu0 0
      %995 = vmatpush1.bf16.xpose.msra.mxu0 0
      %996 = vmatprep.subr.bf16.mxu0 0
      %997 = vmatpush1.bf16.xpose.msra.mxu0 0
      %998 = vmatprep.subr.bf16.mxu0 0
      %999 = vmatpush1.bf16.xpose.msra.mxu0 0
      %1000 = vmatprep.subr.bf16.mxu0 0
      %1001 = vmatpush1.bf16.xpose.msra.mxu0 0
      %1002 = vmatprep.subr.bf16.mxu0 0
      %1003 = vmatpush1.bf16.xpose.msra.mxu0 0
      %1004 = vmatprep.subr.bf16.mxu0 0
      %1005 = vmatpush1.bf16.xpose.msra.mxu0 0
      %1006 = vmatprep.subr.bf16.mxu0 0
      %1007 = vmatpush1.bf16.xpose.msra.mxu0 0
      %1008 = vmatprep.subr.bf16.mxu0 0
      %1009 = vmatpush1.bf16.xpose.msra.mxu0 0
      %1010 = vmatprep.subr.bf16.mxu0 0
      %1011 = vmatpush1.bf16.xpose.msra.mxu0 0
      %1012 = vmatprep.subr.bf16.mxu0 0
      %1013 = vmatpush1.bf16.xpose.msra.mxu0 0
      %1014 = vmatprep.subr.bf16.mxu0 0
      %1015 = vmatpush1.bf16.xpose.msra.mxu0 0
      %1016 = vmatprep.subr.bf16.mxu0 0
      %1017 = vmatpush1.bf16.xpose.msra.mxu0 0
      %1018 = vmatprep.subr.bf16.mxu0 0
      %1019 = vmatpush1.bf16.xpose.msra.mxu0 0
      %1020 = vmatprep.subr.bf16.mxu0 0
      %1021 = vmatpush1.bf16.xpose.msra.mxu0 0
      %1022 = vmatprep.subr.bf16.mxu0 0
      %1023 = vmatpush1.bf16.xpose.msra.mxu0 0
      %1024 = vmatprep.mubr.bf16.mxu0 0
      %1025 = vmatmul.mubr.bf16.gmra.mrb[0].mxu0 %v987
      %v1026 = vpop.f32.mrb[0].mxu0
      %v1027 = vadd.f32 0.0, %v1026
      %v1028 = vpop.f32.mrb[0].mxu0
      %v1029 = vpop.f32.mrb[0].mxu0
      %v1030 = vpop.f32.mrb[0].mxu0
      %1031 = vdwg.mxu0
      %v1032 = vmul.f32 %v1027, 0.25
      %v1033 = vadd.f32 %v1032, %v793
      %v1034 = vsel %vm920, %v1033, -inf
      %1035 = vmax.xlane.f32.xlu0 %v1034
      %v1036 = vpop.xlane.xlu0 %1035
      %v1037 = vsub.f32 %v1033, %v1036
      %v1038 = vmul.f32 %v1037, 1.442695
      %v1039 = vpow.pop %v1038
      %v1040 = vsel %vm920, %v1039, 0.0
      %1041 = vadd.xlane.f32.xlu0 %v1040
      %v1042 = vpop.xlane.xlu0 %1041
      %v1043 = vrcp.pop %v1042
      %v1044 = vmul.f32 %v1039, %v1043
      %v1045 = vpack.c.bf16 %v1044, %v1044
      %1046 = vrot.lane.b32.xlu0 %v867, 48
      %v1047 = vpop.permute.xlu0 %1046
      %v1049 = vsel %vm920, %v1045, 0
      %v1052 = vsel %vm938, %v1047, 0
      %1054 = vmatprep.subr.bf16.mxu0 0
      %1055 = vmatpush1.bf16.msra.mxu0 %v1052
      %1056 = vmatprep.subr.bf16.mxu0 0
      %1057 = vmatpush1.bf16.msra.mxu0 0
      %1058 = vmatprep.subr.bf16.mxu0 0
      %1059 = vmatpush1.bf16.msra.mxu0 0
      %1060 = vmatprep.subr.bf16.mxu0 0
      %1061 = vmatpush1.bf16.msra.mxu0 0
      %1062 = vmatprep.subr.bf16.mxu0 0
      %1063 = vmatpush1.bf16.msra.mxu0 0
      %1064 = vmatprep.subr.bf16.mxu0 0
      %1065 = vmatpush1.bf16.msra.mxu0 0
      %1066 = vmatprep.subr.bf16.mxu0 0
      %1067 = vmatpush1.bf16.msra.mxu0 0
      %1068 = vmatprep.subr.bf16.mxu0 0
      %1069 = vmatpush1.bf16.msra.mxu0 0
      %1070 = vmatprep.subr.bf16.mxu0 0
      %1071 = vmatpush1.bf16.msra.mxu0 0
      %1072 = vmatprep.subr.bf16.mxu0 0
      %1073 = vmatpush1.bf16.msra.mxu0 0
      %1074 = vmatprep.subr.bf16.mxu0 0
      %1075 = vmatpush1.bf16.msra.mxu0 0
      %1076 = vmatprep.subr.bf16.mxu0 0
      %1077 = vmatpush1.bf16.msra.mxu0 0
      %1078 = vmatprep.subr.bf16.mxu0 0
      %1079 = vmatpush1.bf16.msra.mxu0 0
      %1080 = vmatprep.subr.bf16.mxu0 0
      %1081 = vmatpush1.bf16.msra.mxu0 0
      %1082 = vmatprep.subr.bf16.mxu0 0
      %1083 = vmatpush1.bf16.msra.mxu0 0
      %1084 = vmatprep.subr.bf16.mxu0 0
      %1085 = vmatpush1.bf16.msra.mxu0 0
      %1086 = vmatprep.mubr.bf16.mxu0 0
      %1087 = vmatmul.mubr.bf16.gmra.mrb[0].mxu0 %v1049
      %v1088 = vpop.f32.mrb[0].mxu0
      %v1089 = vadd.f32 0.0, %v1088
      %v1090 = vpop.f32.mrb[0].mxu0
      %v1091 = vpop.f32.mrb[0].mxu0
      %v1092 = vpop.f32.mrb[0].mxu0
      %1093 = vdwg.mxu0
      %1095 = vrot.lane.b32.xlu0 %v1089, 16
      %v1096 = vpop.permute.xlu0 %1095
      %v1098 = vsel %vm871, %v977, %v1096
      %v1099 = vpack.c.bf16 %v1098, %v1098
      %v1101 = vlaneseq
      %v1102 = vshrl.u32 %v1101, 7
      %v1103 = vsub.s32 0, %v1102
      %v1104 = vrot.slane %v866, %v1103
      %v1110 = vunpack.c.l.b16 %v862
      %v1111 = vunpack.c.l.b16 %v863
      %v1112 = vunpack.c.l.b16 %v864
      %v1113 = vunpack.c.l.b16 %v865
      %v1114 = vpack.c.b16 %v1111, %v1110
      %v1115 = vpack.c.b16 %v1113, %v1112
      %v1119 = vsel %vm818, %v1099, 0
      %1121 = vmatprep.subr.bf16.mxu0 0
      %1122 = vmatpush1.bf16.msra.mxu0 %v1114
      %1123 = vmatprep.subr.bf16.mxu0 0
      %1124 = vmatpush1.bf16.msra.mxu0 %v1115
      %1125 = vmatprep.subr.bf16.mxu0 0
      %1126 = vmatpush1.bf16.msra.mxu0 0
      %1127 = vmatprep.subr.bf16.mxu0 0
      %1128 = vmatpush1.bf16.msra.mxu0 0
      %1129 = vmatprep.subr.bf16.mxu0 0
      %1130 = vmatpush1.bf16.msra.mxu0 0
      %1131 = vmatprep.subr.bf16.mxu0 0
      %1132 = vmatpush1.bf16.msra.mxu0 0
      %1133 = vmatprep.subr.bf16.mxu0 0
      %1134 = vmatpush1.bf16.msra.mxu0 0
      %1135 = vmatprep.subr.bf16.mxu0 0
      %1136 = vmatpush1.bf16.msra.mxu0 0
      %1137 = vmatprep.subr.bf16.mxu0 0
      %1138 = vmatpush1.bf16.msra.mxu0 0
      %1139 = vmatprep.subr.bf16.mxu0 0
      %1140 = vmatpush1.bf16.msra.mxu0 0
      %1141 = vmatprep.subr.bf16.mxu0 0
      %1142 = vmatpush1.bf16.msra.mxu0 0
      %1143 = vmatprep.subr.bf16.mxu0 0
      %1144 = vmatpush1.bf16.msra.mxu0 0
      %1145 = vmatprep.subr.bf16.mxu0 0
      %1146 = vmatpush1.bf16.msra.mxu0 0
      %1147 = vmatprep.subr.bf16.mxu0 0
      %1148 = vmatpush1.bf16.msra.mxu0 0
      %1149 = vmatprep.subr.bf16.mxu0 0
      %1150 = vmatpush1.bf16.msra.mxu0 0
      %1151 = vmatprep.subr.bf16.mxu0 0
      %1152 = vmatpush1.bf16.msra.mxu0 0
      %1153 = vmatprep.mubr.bf16.mxu0 0
      %1154 = vmatmul.mubr.bf16.gmra.mrb[0].mxu0 %v1119
      %v1155 = vpop.f32.mrb[0].mxu0
      %v1156 = vadd.f32 %v1104, %v1155
      %v1157 = vpop.f32.mrb[0].mxu0
      %v1158 = vpop.f32.mrb[0].mxu0
      %v1159 = vpop.f32.mrb[0].mxu0
      %1160 = vdwg.mxu0
      %v1161 = vadd.f32 %v779, %v1156
      %v1162 = vld [vmem:[%s8] sm:$0x1]
      %v1163 = vld [vmem:[%s9] sm:$0x1]
      %v1164 = vsel %vm818, %v1161, 0.0
      %1165 = vadd.xlane.f32.xlu0 %v1164
      %v1166 = vpop.xlane.xlu0 %1165
      %v1167 = vrcp.pop 32.0
      %v1168 = vmul.f32 %v1166, %v1167
      %v1169 = vsub.f32 %v1161, %v1168
      %v1170 = vmul.f32 %v1169, %v1169
      %v1171 = vsel %vm818, %v1170, 0.0
      %1172 = vadd.xlane.f32.xlu0 %v1171
      %v1173 = vpop.xlane.xlu0 %1172
      %v1174 = vmul.f32 %v1173, %v1167
      %v1175 = vadd.f32 %v1174, 1e-05
      %v1176 = vrsqrt.pop %v1175
      %v1177 = vmul.f32 %v1169, %v1176
      %v1179 = vlaneseq
      %v1180 = vshrl.u32 %v1179, 7
      %v1181 = vsub.s32 0, %v1180
      %v1182 = vrot.slane %v1162, %v1181
      %v1184 = vmul.f32 %v1177, %v1182
      %v1186 = vlaneseq
      %v1187 = vshrl.u32 %v1186, 7
      %v1188 = vsub.s32 0, %v1187
      %v1189 = vrot.slane %v1163, %v1188
      %v1191 = vadd.f32 %v1184, %v1189
      %v1192 = vld [vmem:[%s10] sm:$0xf]
      %v1193 = vld [vmem:[%s10 + $0x4] sm:$0xf]
      %v1194 = vld [vmem:[%s10 + $0x8] sm:$0xf]
      %v1195 = vld [vmem:[%s10 + $0xc] sm:$0xf]
      %v1196 = vld [vmem:[%s11] sm:$0x1]
      %v1197 = vpack.c.bf16 %v1191, %v1191
      %v1199 = vlaneseq
      %v1200 = vshrl.u32 %v1199, 7
      %v1201 = vsub.s32 0, %v1200
      %v1202 = vrot.slane %v1196, %v1201
      %v1208 = vunpack.c.l.b16 %v1192
      %v1209 = vunpack.c.l.b16 %v1193
      %v1210 = vunpack.c.l.b16 %v1194
      %v1211 = vunpack.c.l.b16 %v1195
      %v1212 = vpack.c.b16 %v1209, %v1208
      %v1213 = vpack.c.b16 %v1211, %v1210
      %v1217 = vsel %vm818, %v1197, 0
      %1219 = vmatprep.subr.bf16.mxu0 0
      %1220 = vmatpush1.bf16.msra.mxu0 %v1212
      %1221 = vmatprep.subr.bf16.mxu0 0
      %1222 = vmatpush1.bf16.msra.mxu0 %v1213
      %1223 = vmatprep.subr.bf16.mxu0 0
      %1224 = vmatpush1.bf16.msra.mxu0 0
      %1225 = vmatprep.subr.bf16.mxu0 0
      %1226 = vmatpush1.bf16.msra.mxu0 0
      %1227 = vmatprep.subr.bf16.mxu0 0
      %1228 = vmatpush1.bf16.msra.mxu0 0
      %1229 = vmatprep.subr.bf16.mxu0 0
      %1230 = vmatpush1.bf16.msra.mxu0 0
      %1231 = vmatprep.subr.bf16.mxu0 0
      %1232 = vmatpush1.bf16.msra.mxu0 0
      %1233 = vmatprep.subr.bf16.mxu0 0
      %1234 = vmatpush1.bf16.msra.mxu0 0
      %1235 = vmatprep.subr.bf16.mxu0 0
      %1236 = vmatpush1.bf16.msra.mxu0 0
      %1237 = vmatprep.subr.bf16.mxu0 0
      %1238 = vmatpush1.bf16.msra.mxu0 0
      %1239 = vmatprep.subr.bf16.mxu0 0
      %1240 = vmatpush1.bf16.msra.mxu0 0
      %1241 = vmatprep.subr.bf16.mxu0 0
      %1242 = vmatpush1.bf16.msra.mxu0 0
      %1243 = vmatprep.subr.bf16.mxu0 0
      %1244 = vmatpush1.bf16.msra.mxu0 0
      %1245 = vmatprep.subr.bf16.mxu0 0
      %1246 = vmatpush1.bf16.msra.mxu0 0
      %1247 = vmatprep.subr.bf16.mxu0 0
      %1248 = vmatpush1.bf16.msra.mxu0 0
      %1249 = vmatprep.subr.bf16.mxu0 0
      %1250 = vmatpush1.bf16.msra.mxu0 0
      %1251 = vmatprep.mubr.bf16.mxu0 0
      %1252 = vmatmul.mubr.bf16.gmra.mrb[0].mxu0 %v1217
      %v1253 = vpop.f32.mrb[0].mxu0
      %v1254 = vadd.f32 %v1202, %v1253
      %v1255 = vpop.f32.mrb[0].mxu0
      %v1256 = vpop.f32.mrb[0].mxu0
      %v1257 = vpop.f32.mrb[0].mxu0
      %1258 = vdwg.mxu0
      %v1259 = vld [vmem:[%s767] sm:$0xff]
      %v1260 = vld [vmem:[%s12] sm:$0xf]
      %v1261 = vld [vmem:[%s12 + $0x4] sm:$0xf]
      %v1262 = vld [vmem:[%s12 + $0x8] sm:$0xf]
      %v1263 = vld [vmem:[%s12 + $0xc] sm:$0xf]
      %v1264 = vld [vmem:[%s13] sm:$0x1]
      %v1265 = vpack.c.bf16 %v1259, %v1259
      %v1267 = vlaneseq
      %v1268 = vshrl.u32 %v1267, 7
      %v1269 = vsub.s32 0, %v1268
      %v1270 = vrot.slane %v1264, %v1269
      %v1276 = vunpack.c.l.b16 %v1260
      %v1277 = vunpack.c.l.b16 %v1261
      %v1278 = vunpack.c.l.b16 %v1262
      %v1279 = vunpack.c.l.b16 %v1263
      %v1280 = vpack.c.b16 %v1277, %v1276
      %v1281 = vpack.c.b16 %v1279, %v1278
      %v1285 = vsel %vm818, %v1265, 0
      %1287 = vmatprep.subr.bf16.mxu0 0
      %1288 = vmatpush1.bf16.msra.mxu0 %v1280
      %1289 = vmatprep.subr.bf16.mxu0 0
      %1290 = vmatpush1.bf16.msra.mxu0 %v1281
      %1291 = vmatprep.subr.bf16.mxu0 0
      %1292 = vmatpush1.bf16.msra.mxu0 0
      %1293 = vmatprep.subr.bf16.mxu0 0
      %1294 = vmatpush1.bf16.msra.mxu0 0
      %1295 = vmatprep.subr.bf16.mxu0 0
      %1296 = vmatpush1.bf16.msra.mxu0 0
      %1297 = vmatprep.subr.bf16.mxu0 0
      %1298 = vmatpush1.bf16.msra.mxu0 0
      %1299 = vmatprep.subr.bf16.mxu0 0
      %1300 = vmatpush1.bf16.msra.mxu0 0
      %1301 = vmatprep.subr.bf16.mxu0 0
      %1302 = vmatpush1.bf16.msra.mxu0 0
      %1303 = vmatprep.subr.bf16.mxu0 0
      %1304 = vmatpush1.bf16.msra.mxu0 0
      %1305 = vmatprep.subr.bf16.mxu0 0
      %1306 = vmatpush1.bf16.msra.mxu0 0
      %1307 = vmatprep.subr.bf16.mxu0 0
      %1308 = vmatpush1.bf16.msra.mxu0 0
      %1309 = vmatprep.subr.bf16.mxu0 0
      %1310 = vmatpush1.bf16.msra.mxu0 0
      %1311 = vmatprep.subr.bf16.mxu0 0
      %1312 = vmatpush1.bf16.msra.mxu0 0
      %1313 = vmatprep.subr.bf16.mxu0 0
      %1314 = vmatpush1.bf16.msra.mxu0 0
      %1315 = vmatprep.subr.bf16.mxu0 0
      %1316 = vmatpush1.bf16.msra.mxu0 0
      %1317 = vmatprep.subr.bf16.mxu0 0
      %1318 = vmatpush1.bf16.msra.mxu0 0
      %1319 = vmatprep.mubr.bf16.mxu0 0
      %1320 = vmatmul.mubr.bf16.gmra.mrb[0].mxu0 %v1285
      %v1321 = vpop.f32.mrb[0].mxu0
      %v1322 = vadd.f32 %v1270, %v1321
      %v1323 = vpop.f32.mrb[0].mxu0
      %v1324 = vpop.f32.mrb[0].mxu0
      %v1325 = vpop.f32.mrb[0].mxu0
      %1326 = vdwg.mxu0
      %v1327 = vld [vmem:[%s773] sm:$0x1]
      %v1328 = vld [vmem:[%s14] sm:$0xf]
      %v1329 = vld [vmem:[%s14 + $0x4] sm:$0xf]
      %v1330 = vld [vmem:[%s14 + $0x8] sm:$0xf]
      %v1331 = vld [vmem:[%s14 + $0xc] sm:$0xf]
      %v1332 = vld [vmem:[%s15] sm:$0x1]
      %v1333 = vpack.c.bf16 %v1254, %v1254
      %v1334 = vpack.c.bf16 %v1322, %v1322
      %v1336 = vsel %vm871, %v1333, 0
      %v1339 = vsel %vm871, %v1334, 0
      %1341 = vmatprep.subr.bf16.mxu0 0
      %1342 = vmatpush1.bf16.xpose.msra.mxu0 %v1339
      %1343 = vmatprep.subr.bf16.mxu0 0
      %1344 = vmatpush1.bf16.xpose.msra.mxu0 0
      %1345 = vmatprep.subr.bf16.mxu0 0
      %1346 = vmatpush1.bf16.xpose.msra.mxu0 0
      %1347 = vmatprep.subr.bf16.mxu0 0
      %1348 = vmatpush1.bf16.xpose.msra.mxu0 0
      %1349 = vmatprep.subr.bf16.mxu0 0
      %1350 = vmatpush1.bf16.xpose.msra.mxu0 0
      %1351 = vmatprep.subr.bf16.mxu0 0
      %1352 = vmatpush1.bf16.xpose.msra.mxu0 0
      %1353 = vmatprep.subr.bf16.mxu0 0
      %1354 = vmatpush1.bf16.xpose.msra.mxu0 0
      %1355 = vmatprep.subr.bf16.mxu0 0
      %1356 = vmatpush1.bf16.xpose.msra.mxu0 0
      %1357 = vmatprep.subr.bf16.mxu0 0
      %1358 = vmatpush1.bf16.xpose.msra.mxu0 0
      %1359 = vmatprep.subr.bf16.mxu0 0
      %1360 = vmatpush1.bf16.xpose.msra.mxu0 0
      %1361 = vmatprep.subr.bf16.mxu0 0
      %1362 = vmatpush1.bf16.xpose.msra.mxu0 0
      %1363 = vmatprep.subr.bf16.mxu0 0
      %1364 = vmatpush1.bf16.xpose.msra.mxu0 0
      %1365 = vmatprep.subr.bf16.mxu0 0
      %1366 = vmatpush1.bf16.xpose.msra.mxu0 0
      %1367 = vmatprep.subr.bf16.mxu0 0
      %1368 = vmatpush1.bf16.xpose.msra.mxu0 0
      %1369 = vmatprep.subr.bf16.mxu0 0
      %1370 = vmatpush1.bf16.xpose.msra.mxu0 0
      %1371 = vmatprep.subr.bf16.mxu0 0
      %1372 = vmatpush1.bf16.xpose.msra.mxu0 0
      %1373 = vmatprep.mubr.bf16.mxu0 0
      %1374 = vmatmul.mubr.bf16.gmra.mrb[0].mxu0 %v1336
      %v1375 = vpop.f32.mrb[0].mxu0
      %v1376 = vadd.f32 0.0, %v1375
      %v1377 = vpop.f32.mrb[0].mxu0
      %v1378 = vpop.f32.mrb[0].mxu0
      %v1379 = vpop.f32.mrb[0].mxu0
      %1380 = vdwg.mxu0
      %v1381 = vmul.f32 %v1376, 0.25
      %v1383 = vlaneseq
      %v1384 = vshrl.u32 %v1383, 7
      %v1385 = vsub.s32 0, %v1384
      %v1386 = vrot.slane %v1327, %v1385
      %v1388 = vadd.f32 %v1381, %v1386
      %v1389 = vsel %vm920, %v1388, -inf
      %1390 = vmax.xlane.f32.xlu0 %v1389
      %v1391 = vpop.xlane.xlu0 %1390
      %v1392 = vsub.f32 %v1388, %v1391
      %v1393 = vmul.f32 %v1392, 1.442695
      %v1394 = vpow.pop %v1393
      %v1395 = vsel %vm920, %v1394, 0.0
      %1396 = vadd.xlane.f32.xlu0 %v1395
      %v1397 = vpop.xlane.xlu0 %1396
      %v1398 = vrcp.pop %v1397
      %v1399 = vmul.f32 %v1394, %v1398
      %v1400 = vpack.c.bf16 %v1399, %v1399
      %1402 = vrot.lane.b32.xlu0 %v1334, 96
      %v1403 = vpop.permute.xlu0 %1402
      %v1405 = vsel %vm920, %v1400, 0
      %v1408 = vsel %vm938, %v1403, 0
      %1410 = vmatprep.subr.bf16.mxu0 0
      %1411 = vmatpush1.bf16.msra.mxu0 %v1408
      %1412 = vmatprep.subr.bf16.mxu0 0
      %1413 = vmatpush1.bf16.msra.mxu0 0
      %1414 = vmatprep.subr.bf16.mxu0 0
      %1415 = vmatpush1.bf16.msra.mxu0 0
      %1416 = vmatprep.subr.bf16.mxu0 0
      %1417 = vmatpush1.bf16.msra.mxu0 0
      %1418 = vmatprep.subr.bf16.mxu0 0
      %1419 = vmatpush1.bf16.msra.mxu0 0
      %1420 = vmatprep.subr.bf16.mxu0 0
      %1421 = vmatpush1.bf16.msra.mxu0 0
      %1422 = vmatprep.subr.bf16.mxu0 0
      %1423 = vmatpush1.bf16.msra.mxu0 0
      %1424 = vmatprep.subr.bf16.mxu0 0
      %1425 = vmatpush1.bf16.msra.mxu0 0
      %1426 = vmatprep.subr.bf16.mxu0 0
      %1427 = vmatpush1.bf16.msra.mxu0 0
      %1428 = vmatprep.subr.bf16.mxu0 0
      %1429 = vmatpush1.bf16.msra.mxu0 0
      %1430 = vmatprep.subr.bf16.mxu0 0
      %1431 = vmatpush1.bf16.msra.mxu0 0
      %1432 = vmatprep.subr.bf16.mxu0 0
      %1433 = vmatpush1.bf16.msra.mxu0 0
      %1434 = vmatprep.subr.bf16.mxu0 0
      %1435 = vmatpush1.bf16.msra.mxu0 0
      %1436 = vmatprep.subr.bf16.mxu0 0
      %1437 = vmatpush1.bf16.msra.mxu0 0
      %1438 = vmatprep.subr.bf16.mxu0 0
      %1439 = vmatpush1.bf16.msra.mxu0 0
      %1440 = vmatprep.subr.bf16.mxu0 0
      %1441 = vmatpush1.bf16.msra.mxu0 0
      %1442 = vmatprep.mubr.bf16.mxu0 0
      %1443 = vmatmul.mubr.bf16.gmra.mrb[0].mxu0 %v1405
      %v1444 = vpop.f32.mrb[0].mxu0
      %v1445 = vadd.f32 0.0, %v1444
      %v1446 = vpop.f32.mrb[0].mxu0
      %v1447 = vpop.f32.mrb[0].mxu0
      %v1448 = vpop.f32.mrb[0].mxu0
      %1449 = vdwg.mxu0
      %1451 = vrot.lane.b32.xlu0 %v1333, 112
      %v1452 = vpop.permute.xlu0 %1451
      %1453 = vrot.lane.b32.xlu0 %v1334, 112
      %v1454 = vpop.permute.xlu0 %1453
      %v1456 = vsel %vm871, %v1452, 0
      %v1459 = vsel %vm871, %v1454, 0
      %1461 = vmatprep.subr.bf16.mxu0 0
      %1462 = vmatpush1.bf16.xpose.msra.mxu0 %v1459
      %1463 = vmatprep.subr.bf16.mxu0 0
      %1464 = vmatpush1.bf16.xpose.msra.mxu0 0
      %1465 = vmatprep.subr.bf16.mxu0 0
      %1466 = vmatpush1.bf16.xpose.msra.mxu0 0
      %1467 = vmatprep.subr.bf16.mxu0 0
      %1468 = vmatpush1.bf16.xpose.msra.mxu0 0
      %1469 = vmatprep.subr.bf16.mxu0 0
      %1470 = vmatpush1.bf16.xpose.msra.mxu0 0
      %1471 = vmatprep.subr.bf16.mxu0 0
      %1472 = vmatpush1.bf16.xpose.msra.mxu0 0
      %1473 = vmatprep.subr.bf16.mxu0 0
      %1474 = vmatpush1.bf16.xpose.msra.mxu0 0
      %1475 = vmatprep.subr.bf16.mxu0 0
      %1476 = vmatpush1.bf16.xpose.msra.mxu0 0
      %1477 = vmatprep.subr.bf16.mxu0 0
      %1478 = vmatpush1.bf16.xpose.msra.mxu0 0
      %1479 = vmatprep.subr.bf16.mxu0 0
      %1480 = vmatpush1.bf16.xpose.msra.mxu0 0
      %1481 = vmatprep.subr.bf16.mxu0 0
      %1482 = vmatpush1.bf16.xpose.msra.mxu0 0
      %1483 = vmatprep.subr.bf16.mxu0 0
      %1484 = vmatpush1.bf16.xpose.msra.mxu0 0
      %1485 = vmatprep.subr.bf16.mxu0 0
      %1486 = vmatpush1.bf16.xpose.msra.mxu0 0
      %1487 = vmatprep.subr.bf16.mxu0 0
      %1488 = vmatpush1.bf16.xpose.msra.mxu0 0
      %1489 = vmatprep.subr.bf16.mxu0 0
      %1490 = vmatpush1.bf16.xpose.msra.mxu0 0
      %1491 = vmatprep.subr.bf16.mxu0 0
      %1492 = vmatpush1.bf16.xpose.msra.mxu0 0
      %1493 = vmatprep.mubr.bf16.mxu0 0
      %1494 = vmatmul.mubr.bf16.gmra.mrb[0].mxu0 %v1456
      %v1495 = vpop.f32.mrb[0].mxu0
      %v1496 = vadd.f32 0.0, %v1495
      %v1497 = vpop.f32.mrb[0].mxu0
      %v1498 = vpop.f32.mrb[0].mxu0
      %v1499 = vpop.f32.mrb[0].mxu0
      %1500 = vdwg.mxu0
      %v1501 = vmul.f32 %v1496, 0.25
      %v1502 = vadd.f32 %v1501, %v1386
      %v1503 = vsel %vm920, %v1502, -inf
      %1504 = vmax.xlane.f32.xlu0 %v1503
      %v1505 = vpop.xlane.xlu0 %1504
      %v1506 = vsub.f32 %v1502, %v1505
      %v1507 = vmul.f32 %v1506, 1.442695
      %v1508 = vpow.pop %v1507
      %v1509 = vsel %vm920, %v1508, 0.0
      %1510 = vadd.xlane.f32.xlu0 %v1509
      %v1511 = vpop.xlane.xlu0 %1510
      %v1512 = vrcp.pop %v1511
      %v1513 = vmul.f32 %v1508, %v1512
      %v1514 = vpack.c.bf16 %v1513, %v1513
      %1515 = vrot.lane.b32.xlu0 %v1334, 80
      %v1516 = vpop.permute.xlu0 %1515
      %v1518 = vsel %vm920, %v1514, 0
      %v1521 = vsel %vm938, %v1516, 0
      %1523 = vmatprep.subr.bf16.mxu0 0
      %1524 = vmatpush1.bf16.msra.mxu0 %v1521
      %1525 = vmatprep.subr.bf16.mxu0 0
      %1526 = vmatpush1.bf16.msra.mxu0 0
      %1527 = vmatprep.subr.bf16.mxu0 0
      %1528 = vmatpush1.bf16.msra.mxu0 0
      %1529 = vmatprep.subr.bf16.mxu0 0
      %1530 = vmatpush1.bf16.msra.mxu0 0
      %1531 = vmatprep.subr.bf16.mxu0 0
      %1532 = vmatpush1.bf16.msra.mxu0 0
      %1533 = vmatprep.subr.bf16.mxu0 0
      %1534 = vmatpush1.bf16.msra.mxu0 0
      %1535 = vmatprep.subr.bf16.mxu0 0
      %1536 = vmatpush1.bf16.msra.mxu0 0
      %1537 = vmatprep.subr.bf16.mxu0 0
      %1538 = vmatpush1.bf16.msra.mxu0 0
      %1539 = vmatprep.subr.bf16.mxu0 0
      %1540 = vmatpush1.bf16.msra.mxu0 0
      %1541 = vmatprep.subr.bf16.mxu0 0
      %1542 = vmatpush1.bf16.msra.mxu0 0
      %1543 = vmatprep.subr.bf16.mxu0 0
      %1544 = vmatpush1.bf16.msra.mxu0 0
      %1545 = vmatprep.subr.bf16.mxu0 0
      %1546 = vmatpush1.bf16.msra.mxu0 0
      %1547 = vmatprep.subr.bf16.mxu0 0
      %1548 = vmatpush1.bf16.msra.mxu0 0
      %1549 = vmatprep.subr.bf16.mxu0 0
      %1550 = vmatpush1.bf16.msra.mxu0 0
      %1551 = vmatprep.subr.bf16.mxu0 0
      %1552 = vmatpush1.bf16.msra.mxu0 0
      %1553 = vmatprep.subr.bf16.mxu0 0
      %1554 = vmatpush1.bf16.msra.mxu0 0
      %1555 = vmatprep.mubr.bf16.mxu0 0
      %1556 = vmatmul.mubr.bf16.gmra.mrb[0].mxu0 %v1518
      %v1557 = vpop.f32.mrb[0].mxu0
      %v1558 = vadd.f32 0.0, %v1557
      %v1559 = vpop.f32.mrb[0].mxu0
      %v1560 = vpop.f32.mrb[0].mxu0
      %v1561 = vpop.f32.mrb[0].mxu0
      %1562 = vdwg.mxu0
      %1564 = vrot.lane.b32.xlu0 %v1558, 16
      %v1565 = vpop.permute.xlu0 %1564
      %v1567 = vsel %vm871, %v1445, %v1565
      %v1568 = vpack.c.bf16 %v1567, %v1567
      %v1570 = vlaneseq
      %v1571 = vshrl.u32 %v1570, 7
      %v1572 = vsub.s32 0, %v1571
      %v1573 = vrot.slane %v1332, %v1572
      %v1579 = vunpack.c.l.b16 %v1328
      %v1580 = vunpack.c.l.b16 %v1329
      %v1581 = vunpack.c.l.b16 %v1330
      %v1582 = vunpack.c.l.b16 %v1331
      %v1583 = vpack.c.b16 %v1580, %v1579
      %v1584 = vpack.c.b16 %v1582, %v1581
      %v1588 = vsel %vm818, %v1568, 0
      %1590 = vmatprep.subr.bf16.mxu0 0
      %1591 = vmatpush1.bf16.msra.mxu0 %v1583
      %1592 = vmatprep.subr.bf16.mxu0 0
      %1593 = vmatpush1.bf16.msra.mxu0 %v1584
      %1594 = vmatprep.subr.bf16.mxu0 0
      %1595 = vmatpush1.bf16.msra.mxu0 0
      %1596 = vmatprep.subr.bf16.mxu0 0
      %1597 = vmatpush1.bf16.msra.mxu0 0
      %1598 = vmatprep.subr.bf16.mxu0 0
      %1599 = vmatpush1.bf16.msra.mxu0 0
      %1600 = vmatprep.subr.bf16.mxu0 0
      %1601 = vmatpush1.bf16.msra.mxu0 0
      %1602 = vmatprep.subr.bf16.mxu0 0
      %1603 = vmatpush1.bf16.msra.mxu0 0
      %1604 = vmatprep.subr.bf16.mxu0 0
      %1605 = vmatpush1.bf16.msra.mxu0 0
      %1606 = vmatprep.subr.bf16.mxu0 0
      %1607 = vmatpush1.bf16.msra.mxu0 0
      %1608 = vmatprep.subr.bf16.mxu0 0
      %1609 = vmatpush1.bf16.msra.mxu0 0
      %1610 = vmatprep.subr.bf16.mxu0 0
      %1611 = vmatpush1.bf16.msra.mxu0 0
      %1612 = vmatprep.subr.bf16.mxu0 0
      %1613 = vmatpush1.bf16.msra.mxu0 0
      %1614 = vmatprep.subr.bf16.mxu0 0
      %1615 = vmatpush1.bf16.msra.mxu0 0
      %1616 = vmatprep.subr.bf16.mxu0 0
      %1617 = vmatpush1.bf16.msra.mxu0 0
      %1618 = vmatprep.subr.bf16.mxu0 0
      %1619 = vmatpush1.bf16.msra.mxu0 0
      %1620 = vmatprep.subr.bf16.mxu0 0
      %1621 = vmatpush1.bf16.msra.mxu0 0
      %1622 = vmatprep.mubr.bf16.mxu0 0
      %1623 = vmatmul.mubr.bf16.gmra.mrb[0].mxu0 %v1588
      %v1624 = vpop.f32.mrb[0].mxu0
      %v1625 = vadd.f32 %v1573, %v1624
      %v1626 = vpop.f32.mrb[0].mxu0
      %v1627 = vpop.f32.mrb[0].mxu0
      %v1628 = vpop.f32.mrb[0].mxu0
      %1629 = vdwg.mxu0
      %v1630 = vadd.f32 %v1191, %v1625
      %v1631 = vld [vmem:[%s16] sm:$0x1]
      %v1632 = vld [vmem:[%s17] sm:$0x1]
      %v1633 = vsel %vm818, %v1630, 0.0
      %1634 = vadd.xlane.f32.xlu0 %v1633
      %v1635 = vpop.xlane.xlu0 %1634
      %v1636 = vmul.f32 %v1635, %v1167
      %v1637 = vsub.f32 %v1630, %v1636
      %v1638 = vmul.f32 %v1637, %v1637
      %v1639 = vsel %vm818, %v1638, 0.0
      %1640 = vadd.xlane.f32.xlu0 %v1639
      %v1641 = vpop.xlane.xlu0 %1640
      %v1642 = vmul.f32 %v1641, %v1167
      %v1643 = vadd.f32 %v1642, 1e-05
      %v1644 = vrsqrt.pop %v1643
      %v1645 = vmul.f32 %v1637, %v1644
      %v1647 = vlaneseq
      %v1648 = vshrl.u32 %v1647, 7
      %v1649 = vsub.s32 0, %v1648
      %v1650 = vrot.slane %v1631, %v1649
      %v1652 = vmul.f32 %v1645, %v1650
      %v1654 = vlaneseq
      %v1655 = vshrl.u32 %v1654, 7
      %v1656 = vsub.s32 0, %v1655
      %v1657 = vrot.slane %v1632, %v1656
      %v1659 = vadd.f32 %v1652, %v1657
      %v1660 = vld [vmem:[%s18] sm:$0xf]
      %v1661 = vld [vmem:[%s18 + $0x4] sm:$0xf]
      %v1662 = vld [vmem:[%s18 + $0x8] sm:$0xf]
      %v1663 = vld [vmem:[%s18 + $0xc] sm:$0xf]
      %v1664 = vld [vmem:[%s19] sm:$0x1]
      %v1665 = vpack.c.bf16 %v1659, %v1659
      %v1667 = vlaneseq
      %v1668 = vshrl.u32 %v1667, 7
      %v1669 = vsub.s32 0, %v1668
      %v1670 = vrot.slane %v1664, %v1669
      %v1676 = vunpack.c.l.b16 %v1660
      %v1677 = vunpack.c.l.b16 %v1661
      %v1678 = vunpack.c.l.b16 %v1662
      %v1679 = vunpack.c.l.b16 %v1663
      %v1680 = vpack.c.b16 %v1677, %v1676
      %v1681 = vpack.c.b16 %v1679, %v1678
      %v1685 = vsel %vm818, %v1665, 0
      %1687 = vmatprep.subr.bf16.mxu0 0
      %1688 = vmatpush1.bf16.msra.mxu0 %v1680
      %1689 = vmatprep.subr.bf16.mxu0 0
      %1690 = vmatpush1.bf16.msra.mxu0 %v1681
      %1691 = vmatprep.subr.bf16.mxu0 0
      %1692 = vmatpush1.bf16.msra.mxu0 0
      %1693 = vmatprep.subr.bf16.mxu0 0
      %1694 = vmatpush1.bf16.msra.mxu0 0
      %1695 = vmatprep.subr.bf16.mxu0 0
      %1696 = vmatpush1.bf16.msra.mxu0 0
      %1697 = vmatprep.subr.bf16.mxu0 0
      %1698 = vmatpush1.bf16.msra.mxu0 0
      %1699 = vmatprep.subr.bf16.mxu0 0
      %1700 = vmatpush1.bf16.msra.mxu0 0
      %1701 = vmatprep.subr.bf16.mxu0 0
      %1702 = vmatpush1.bf16.msra.mxu0 0
      %1703 = vmatprep.subr.bf16.mxu0 0
      %1704 = vmatpush1.bf16.msra.mxu0 0
      %1705 = vmatprep.subr.bf16.mxu0 0
      %1706 = vmatpush1.bf16.msra.mxu0 0
      %1707 = vmatprep.subr.bf16.mxu0 0
      %1708 = vmatpush1.bf16.msra.mxu0 0
      %1709 = vmatprep.subr.bf16.mxu0 0
      %1710 = vmatpush1.bf16.msra.mxu0 0
      %1711 = vmatprep.subr.bf16.mxu0 0
      %1712 = vmatpush1.bf16.msra.mxu0 0
      %1713 = vmatprep.subr.bf16.mxu0 0
      %1714 = vmatpush1.bf16.msra.mxu0 0
      %1715 = vmatprep.subr.bf16.mxu0 0
      %1716 = vmatpush1.bf16.msra.mxu0 0
      %1717 = vmatprep.subr.bf16.mxu0 0
      %1718 = vmatpush1.bf16.msra.mxu0 0
      %1719 = vmatprep.mubr.bf16.mxu0 0
      %1720 = vmatmul.mubr.bf16.gmra.mrb[0].mxu0 %v1685
      %v1721 = vpop.f32.mrb[0].mxu0
      %v1722 = vadd.f32 %v1670, %v1721
      %v1723 = vpop.f32.mrb[0].mxu0
      %v1724 = vpop.f32.mrb[0].mxu0
      %v1725 = vpop.f32.mrb[0].mxu0
      %1726 = vdwg.mxu0
      %v1727 = vmul.f32 %v1722, 0.5
      %v1728 = vmul.f32 %v1722, 0.044715
      %v1729 = vmul.f32 %v1728, %v1722
      %v1730 = vmul.f32 %v1729, %v1722
      %v1731 = vadd.f32 %v1722, %v1730
      %v1732 = vmul.f32 %v1731, 0.7978846
      %v1733 = vtanh.pop %v1732
      %v1734 = vadd.f32 %v1733, 1.0
      %v1735 = vmul.f32 %v1727, %v1734
      %v1736 = vld [vmem:[%s20] sm:$0xf]
      %v1737 = vld [vmem:[%s20 + $0x4] sm:$0xf]
      %v1738 = vld [vmem:[%s20 + $0x8] sm:$0xf]
      %v1739 = vld [vmem:[%s20 + $0xc] sm:$0xf]
      %v1740 = vld [vmem:[%s20 + $0x10] sm:$0xf]
      %v1741 = vld [vmem:[%s20 + $0x14] sm:$0xf]
      %v1742 = vld [vmem:[%s20 + $0x18] sm:$0xf]
      %v1743 = vld [vmem:[%s20 + $0x1c] sm:$0xf]
      %v1744 = vld [vmem:[%s21] sm:$0x1]
      %v1745 = vpack.c.bf16 %v1735, %v1735
      %v1747 = vlaneseq
      %v1748 = vshrl.u32 %v1747, 7
      %v1749 = vsub.s32 0, %v1748
      %v1750 = vrot.slane %v1744, %v1749
      %v1760 = vunpack.c.l.b16 %v1736
      %v1761 = vunpack.c.l.b16 %v1737
      %v1762 = vunpack.c.l.b16 %v1738
      %v1763 = vunpack.c.l.b16 %v1739
      %v1764 = vunpack.c.l.b16 %v1740
      %v1765 = vunpack.c.l.b16 %v1741
      %v1766 = vunpack.c.l.b16 %v1742
      %v1767 = vunpack.c.l.b16 %v1743
      %v1768 = vpack.c.b16 %v1761, %v1760
      %v1769 = vpack.c.b16 %v1763, %v1762
      %v1770 = vpack.c.b16 %v1765, %v1764
      %v1771 = vpack.c.b16 %v1767, %v1766
      %vm1776 = vcmask 523264
      %v1778 = vsel %vm1776, %v1745, 0
      %1780 = vmatprep.subr.bf16.mxu0 0
      %1781 = vmatpush1.bf16.msra.mxu0 %v1768
      %1782 = vmatprep.subr.bf16.mxu0 0
      %1783 = vmatpush1.bf16.msra.mxu0 %v1769
      %1784 = vmatprep.subr.bf16.mxu0 0
      %1785 = vmatpush1.bf16.msra.mxu0 %v1770
      %1786 = vmatprep.subr.bf16.mxu0 0
      %1787 = vmatpush1.bf16.msra.mxu0 %v1771
      %1788 = vmatprep.subr.bf16.mxu0 0
      %1789 = vmatpush1.bf16.msra.mxu0 0
      %1790 = vmatprep.subr.bf16.mxu0 0
      %1791 = vmatpush1.bf16.msra.mxu0 0
      %1792 = vmatprep.subr.bf16.mxu0 0
      %1793 = vmatpush1.bf16.msra.mxu0 0
      %1794 = vmatprep.subr.bf16.mxu0 0
      %1795 = vmatpush1.bf16.msra.mxu0 0
      %1796 = vmatprep.subr.bf16.mxu0 0
      %1797 = vmatpush1.bf16.msra.mxu0 0
      %1798 = vmatprep.subr.bf16.mxu0 0
      %1799 = vmatpush1.bf16.msra.mxu0 0
      %1800 = vmatprep.subr.bf16.mxu0 0
      %1801 = vmatpush1.bf16.msra.mxu0 0
      %1802 = vmatprep.subr.bf16.mxu0 0
      %1803 = vmatpush1.bf16.msra.mxu0 0
      %1804 = vmatprep.subr.bf16.mxu0 0
      %1805 = vmatpush1.bf16.msra.mxu0 0
      %1806 = vmatprep.subr.bf16.mxu0 0
      %1807 = vmatpush1.bf16.msra.mxu0 0
      %1808 = vmatprep.subr.bf16.mxu0 0
      %1809 = vmatpush1.bf16.msra.mxu0 0
      %1810 = vmatprep.subr.bf16.mxu0 0
      %1811 = vmatpush1.bf16.msra.mxu0 0
      %1812 = vmatprep.mubr.bf16.mxu0 0
      %1813 = vmatmul.mubr.bf16.gmra.mrb[0].mxu0 %v1778
      %v1814 = vpop.f32.mrb[0].mxu0
      %v1815 = vadd.f32 %v1750, %v1814
      %v1816 = vpop.f32.mrb[0].mxu0
      %v1817 = vpop.f32.mrb[0].mxu0
      %v1818 = vpop.f32.mrb[0].mxu0
      %1819 = vdwg.mxu0
      %v1820 = vadd.f32 %v1659, %v1815
      %v1821 = vld [vmem:[%s22] sm:$0x1]
      %v1822 = vld [vmem:[%s23] sm:$0x1]
      %v1823 = vsel %vm818, %v1820, 0.0
      %1824 = vadd.xlane.f32.xlu0 %v1823
      %v1825 = vpop.xlane.xlu0 %1824
      %v1826 = vmul.f32 %v1825, %v1167
      %v1827 = vsub.f32 %v1820, %v1826
      %v1828 = vmul.f32 %v1827, %v1827
      %v1829 = vsel %vm818, %v1828, 0.0
      %1830 = vadd.xlane.f32.xlu0 %v1829
      %v1831 = vpop.xlane.xlu0 %1830
      %v1832 = vmul.f32 %v1831, %v1167
      %v1833 = vadd.f32 %v1832, 1e-05
      %v1834 = vrsqrt.pop %v1833
      %v1835 = vmul.f32 %v1827, %v1834
      %v1837 = vlaneseq
      %v1838 = vshrl.u32 %v1837, 7
      %v1839 = vsub.s32 0, %v1838
      %v1840 = vrot.slane %v1821, %v1839
      %v1842 = vmul.f32 %v1835, %v1840
      %v1844 = vlaneseq
      %v1845 = vshrl.u32 %v1844, 7
      %v1846 = vsub.s32 0, %v1845
      %v1847 = vrot.slane %v1822, %v1846
      %v1849 = vadd.f32 %v1842, %v1847
      %1850 = vst.msk [vmem:[%s777] sm:$0xff] %vm818, %v1849
      %p1851 = scmp.lt.s32.totalorder %s35, 1
      %s1852 = scalar_select %p1851, %s35, 1
      %s1853 = smul.addr %s1852, 8
      %s1854 = scalar_lea.vmem %s24, %s1853
      // Predicated region
      $region117: #{bart_generator_train_forward.8} parent=115 // pred_check
        %p1855 = pneg %p577
      $region118: #{bart_generator_train_forward.8} parent=115 // pred_check_branch
        %1857 = sbr.rel (%p1855) target = $region120
      $region119: #{bart_generator_train_forward.8} parent=115 // pred_region
        _
      $region120: #{bart_generator_train_forward.8} parent=115 // pred_fallthru
        _
    $region116: #{bart_generator_train_forward.8} parent=5 // pred_fallthru
      _
    %p1858 = scmp.le.s32.totalorder 2, %s30
    // Predicated region
    $region121: #{bart_generator_train_forward.8} parent=5 // pred_check
      %p1859 = pneg %p1858
    $region122: #{bart_generator_train_forward.8} parent=5 // pred_check_branch
      %1861 = sbr.rel (%p1859) target = $region124
    $region123: #{bart_generator_train_forward.8} parent=5 // pred_region
      %s1862 = ssub.s32 %s30, 2
      // Predicated region
      $region125: #{bart_generator_train_forward.8} parent=123 // pred_check
        %p1863 = pneg %p583
      $region126: #{bart_generator_train_forward.8} parent=123 // pred_check_branch
        %1865 = sbr.rel (%p1863) target = $region128
      $region127: #{bart_generator_train_forward.8} parent=123 // pred_region
        %p1866 = scmp.lt.s32.totalorder %s36, 1
        %s1867 = scalar_select %p1866, %s36, 1
        %s1868 = smul.addr %s1867, 8
        %s1869 = scalar_lea.vmem %s24, %s1868
      $region128: #{bart_generator_train_forward.8} parent=123 // pred_fallthru
        _
    $region124: #{bart_generator_train_forward.8} parent=5 // pred_fallthru
      _
  $region6: #{bart_generator_train_forward.8} parent=0 // loop_footer
    %s34 = sadd.s32 1, %s30
  $region7: #{bart_generator_train_forward.8} parent=0 // loop_footer_branch
    %29 = sbr.rel target = $region3
  $region8: #{bart_generator_train_forward.8} parent=0 // loop_exit
    _

</llo_original>
